<compile_context>
chip_gen: v7x
topology: tpu7x:2x2x1
jax: 0.10.0
libtpu: 0.0.40
codegen_flags: <defaults>
</compile_context>

<pallas_src>
import functools

import jax
import jax.numpy as jnp
from jax import lax
from jax.experimental import pallas as pl
from jax.experimental.pallas import tpu as pltpu

EPS = 1e-5


def upsample_matrix(n_in, n_out):
    """1-D interpolation matrix A (n_out, n_in): bilinear, align_corners=True."""
    i = jnp.arange(n_out, dtype=jnp.float32)
    if n_out == 1:
        src = jnp.zeros((n_out,), jnp.float32)
    else:
        src = i * (n_in - 1) / (n_out - 1)
    lo = jnp.clip(jnp.floor(src).astype(jnp.int32), 0, n_in - 1)
    hi = jnp.clip(lo + 1, 0, n_in - 1)
    w = src - lo.astype(jnp.float32)
    A = jnp.zeros((n_out, n_in), jnp.float32)
    rows = jnp.arange(n_out)
    A = A.at[rows, lo].add(1.0 - w)
    A = A.at[rows, hi].add(w)
    return A


def _batch_norm(v, mavg_s, g_rows, b_rows):
    """Training-mode BN on a (R, P) slab whose rows are grouped per channel.

    mavg_s: (R, R) within-channel row-averaging matrix, pre-scaled by 1/(N*P).
    g_rows / b_rows: (R, 1) per-row gamma / beta.
    """
    f32 = jnp.float32
    mu = jnp.sum(jnp.dot(mavg_s, v, preferred_element_type=f32),
                 axis=1, keepdims=True)                       # (R, 1) channel mean
    d = v - mu
    var = jnp.sum(jnp.dot(mavg_s, d * d, preferred_element_type=f32),
                  axis=1, keepdims=True)                      # (R, 1) biased channel var
    return d * (g_rows * lax.rsqrt(var + EPS)) + b_rows


def upconv_kernel(x_ref, kt_ref, mix_ref, masks_ref, mavg_in_ref, mavg_out_ref,
                  g1_ref, b1_ref, g2_ref, b2_ref, out_ref, *, W2, P):
    f32 = jnp.float32

    # ---- bilinear upsample (align_corners=True): one Kronecker MXU matmul ----
    # Output rows = (ci, n), lanes = i*W2 + j  (already the final layout).
    u = jnp.dot(x_ref[...], kt_ref[...], preferred_element_type=f32)   # (C_in*N, P)

    # ---- BatchNorm2d(C_in), training-mode batch stats ----
    y = _batch_norm(u, mavg_in_ref[...], g1_ref[...], b1_ref[...])

    # ---- 2x2 'same' conv (PyTorch even-kernel padding: 0 before, 1 after) ----
    # Shifted taps via XLU lane rotation + host-precomputed validity masks.
    m01 = masks_ref[0:1, :]                 # valid iff j < W2 - 1
    m10 = masks_ref[1:2, :]                 # valid iff i < H2 - 1
    m11 = masks_ref[2:3, :]                 # both
    t01 = pltpu.roll(y, shift=P - 1, axis=1) * m01          # y[.., i, j+1]
    t10 = pltpu.roll(y, shift=P - W2, axis=1) * m10         # y[.., i+1, j]
    t11 = pltpu.roll(y, shift=P - (W2 + 1), axis=1) * m11   # y[.., i+1, j+1]

    # Channel mix on the MXU: block-diagonal kron(W_tap, I_N) mixers.
    conv = jnp.dot(mix_ref[0], y, preferred_element_type=f32)
    conv = conv + jnp.dot(mix_ref[1], t01, preferred_element_type=f32)
    conv = conv + jnp.dot(mix_ref[2], t10, preferred_element_type=f32)
    conv = conv + jnp.dot(mix_ref[3], t11, preferred_element_type=f32)
    # Conv bias intentionally omitted: the training-mode BatchNorm below
    # subtracts the per-channel mean, which cancels a per-channel bias exactly.

    # ---- BatchNorm2d(C_out) + lane-dense full-width store ----
    out_ref[...] = _batch_norm(conv, mavg_out_ref[...], g2_ref[...], b2_ref[...])


def upconv_block(x, conv_w, conv_b, g1, b1, g2, b2):
    """x: (N, C_in, H, W) float32 NCHW. Returns (N, C_out, 2H, 2W)."""
    del conv_b  # exactly cancelled by the training-mode BatchNorm2d(C_out)
    N, C_in, H, W = x.shape
    C_out = conv_w.shape[0]
    H2, W2 = 2 * H, 2 * W
    P = H2 * W2
    R_in, R_out = C_in * N, C_out * N

    # Separable 1-D interpolation matrices and their Kronecker product:
    # kron(Ah, Aw)[i*W2 + j, h*W + w] = Ah[i, h] * Aw[j, w].
    Ah = upsample_matrix(H, H2)                                   # (H2, H)
    Aw = upsample_matrix(W, W2)                                   # (W2, W)
    kt = jnp.kron(Ah, Aw).T                                       # (H*W, P)

    # rows = (ci, n), lanes = h*W + w.
    x2 = jnp.transpose(x, (1, 0, 2, 3)).reshape(R_in, H * W)

    # Per-tap block-diagonal channel mixers: kron(W[:, :, kh, kw], I_N).
    eye_n = jnp.eye(N, dtype=jnp.float32)
    mix = jnp.stack([jnp.kron(conv_w[:, :, kh, kw], eye_n)
                     for kh, kw in ((0, 0), (0, 1), (1, 0), (1, 1))])  # (4, R_out, R_in)

    # Boundary-validity masks for the shifted taps (static in H2, W2).
    ii = jnp.repeat(jnp.arange(H2), W2)
    jj = jnp.tile(jnp.arange(W2), H2)
    m01 = (jj < W2 - 1).astype(jnp.float32)
    m10 = (ii < H2 - 1).astype(jnp.float32)
    masks = jnp.stack([m01, m10, m01 * m10])                      # (3, P)

    # Within-channel row-averaging matrices, pre-scaled by 1 / (N * P).
    mavg_in = jnp.kron(jnp.eye(C_in, dtype=jnp.float32),
                       jnp.ones((N, N), jnp.float32)) / (N * P)   # (R_in, R_in)
    mavg_out = jnp.kron(jnp.eye(C_out, dtype=jnp.float32),
                        jnp.ones((N, N), jnp.float32)) / (N * P)  # (R_out, R_out)

    g1r = jnp.repeat(g1, N).reshape(R_in, 1)
    b1r = jnp.repeat(b1, N).reshape(R_in, 1)
    g2r = jnp.repeat(g2, N).reshape(R_out, 1)
    b2r = jnp.repeat(b2, N).reshape(R_out, 1)

    kern = functools.partial(upconv_kernel, W2=W2, P=P)
    vmem = pl.BlockSpec(memory_space=pltpu.MemorySpace.VMEM)

    out2 = pl.pallas_call(
        kern,
        out_shape=jax.ShapeDtypeStruct((R_out, P), jnp.float32),
        in_specs=[vmem] * 10,
        out_specs=vmem,
        compiler_params=pltpu.CompilerParams(vmem_limit_bytes=32 * 1024 * 1024),
    )(x2, kt, mix, masks, mavg_in, mavg_out, g1r, b1r, g2r, b2r)

    # rows (co, n) -> (N, C_out, H2, W2)
    return out2.reshape(C_out, N, H2, W2).transpose(1, 0, 2, 3)


def reference(x, conv_w, conv_b, g1, b1, g2, b2):
    """Pure-JAX reference for the PyTorch forward semantics."""
    N, C_in, H, W = x.shape
    H2, W2 = 2 * H, 2 * W
    Ah = upsample_matrix(H, H2)
    Aw = upsample_matrix(W, W2)
    u = jnp.einsum('nchw,ih,jw->ncij', x, Ah, Aw, precision='highest')

    def bn(t, g, b):
        mu = t.mean(axis=(0, 2, 3), keepdims=True)
        var = ((t - mu) ** 2).mean(axis=(0, 2, 3), keepdims=True)
        return g.reshape(1, -1, 1, 1) * (t - mu) * lax.rsqrt(var + EPS) \
            + b.reshape(1, -1, 1, 1)

    y = bn(u, g1, b1)
    conv = lax.conv_general_dilated(
        y, conv_w, window_strides=(1, 1), padding=((0, 1), (0, 1)),
        dimension_numbers=('NCHW', 'OIHW', 'NCHW'),
        precision=lax.Precision.HIGHEST) + conv_b.reshape(1, -1, 1, 1)
    return bn(conv, g2, b2)


if __name__ == "__main__":
    N, C_in, C_out, H, W = 2, 4, 8, 16, 16

    key = jax.random.PRNGKey(0)
    ks = jax.random.split(key, 8)
    x = jax.random.normal(ks[0], (N, C_in, H, W), jnp.float32)
    conv_w = 0.3 * jax.random.normal(ks[1], (C_out, C_in, 2, 2), jnp.float32)
    conv_b = 0.1 * jax.random.normal(ks[2], (C_out,), jnp.float32)
    g1 = 1.0 + 0.1 * jax.random.normal(ks[3], (C_in,), jnp.float32)
    b1 = 0.1 * jax.random.normal(ks[4], (C_in,), jnp.float32)
    g2 = 1.0 + 0.1 * jax.random.normal(ks[5], (C_out,), jnp.float32)
    b2 = 0.1 * jax.random.normal(ks[6], (C_out,), jnp.float32)

    out = upconv_block(x, conv_w, conv_b, g1, b1, g2, b2)
    out = jax.block_until_ready(out)
    assert out.shape == (N, C_out, 2 * H, 2 * W)

    ref = reference(x, conv_w, conv_b, g1, b1, g2, b2)
    err = float(jnp.max(jnp.abs(out - ref)))
    assert err < 2e-3, f"max abs error too large: {err}"

    print("KERNEL_OK")
</pallas_src>

<mosaic_0001>
module attributes {stable_mosaic.version = 11 : i64} {
  func.func @upconv_kernel(%arg0: memref<8x256xf32, #tpu.memory_space<vmem>>, %arg1: memref<256x1024xf32, #tpu.memory_space<vmem>>, %arg2: memref<4x16x8xf32, #tpu.memory_space<vmem>>, %arg3: memref<3x1024xf32, #tpu.memory_space<vmem>>, %arg4: memref<8x8xf32, #tpu.memory_space<vmem>>, %arg5: memref<16x16xf32, #tpu.memory_space<vmem>>, %arg6: memref<8x1xf32, #tpu.memory_space<vmem>>, %arg7: memref<8x1xf32, #tpu.memory_space<vmem>>, %arg8: memref<16x1xf32, #tpu.memory_space<vmem>>, %arg9: memref<16x1xf32, #tpu.memory_space<vmem>>, %arg10: memref<16x1024xf32, #tpu.memory_space<vmem>>) attributes {dimension_semantics = [], scalar_prefetch = 0 : i64, scratch_operands = 0 : i64, tpu.core_type = #tpu.core_type<tc>} {
    %c0 = arith.constant 0 : index
    %c0_0 = arith.constant 0 : index
    %0 = vector.load %arg0[%c0, %c0_0] : memref<8x256xf32, #tpu.memory_space<vmem>>, vector<8x256xf32>
    %c0_1 = arith.constant 0 : index
    %c0_2 = arith.constant 0 : index
    %1 = vector.load %arg1[%c0_1, %c0_2] : memref<256x1024xf32, #tpu.memory_space<vmem>>, vector<256x1024xf32>
    %cst = arith.constant dense<0.000000e+00> : vector<8x1024xf32>
    %2 = tpu.matmul %0, %1, %cst {dimension_numbers = #tpu.dot_dimension_numbers<[1], [0], [0], [1], [0, 0, 1, 1], [], []>} : vector<8x256xf32>, vector<256x1024xf32>, vector<8x1024xf32> -> vector<8x1024xf32>
    %c0_3 = arith.constant 0 : index
    %c0_4 = arith.constant 0 : index
    %3 = vector.load %arg4[%c0_3, %c0_4] : memref<8x8xf32, #tpu.memory_space<vmem>>, vector<8x8xf32>
    %c0_5 = arith.constant 0 : index
    %c0_6 = arith.constant 0 : index
    %4 = vector.load %arg6[%c0_5, %c0_6] : memref<8x1xf32, #tpu.memory_space<vmem>>, vector<8x1xf32>
    %c0_7 = arith.constant 0 : index
    %c0_8 = arith.constant 0 : index
    %5 = vector.load %arg7[%c0_7, %c0_8] : memref<8x1xf32, #tpu.memory_space<vmem>>, vector<8x1xf32>
    %cst_9 = arith.constant dense<0.000000e+00> : vector<8x1024xf32>
    %6 = tpu.matmul %3, %2, %cst_9 {dimension_numbers = #tpu.dot_dimension_numbers<[1], [0], [0], [1], [0, 0, 1, 1], [], []>} : vector<8x8xf32>, vector<8x1024xf32>, vector<8x1024xf32> -> vector<8x1024xf32>
    %cst_10 = arith.constant dense<0.000000e+00> : vector<8xf32>
    %7 = vector.multi_reduction <add>, %6, %cst_10 [1] : vector<8x1024xf32> to vector<8xf32>
    %8 = vector.shape_cast %7 : vector<8xf32> to vector<8x1xf32>
    %9 = vector.broadcast %8 : vector<8x1xf32> to vector<8x1024xf32>
    %10 = arith.subf %2, %9 : vector<8x1024xf32>
    %11 = arith.mulf %10, %10 : vector<8x1024xf32>
    %cst_11 = arith.constant dense<0.000000e+00> : vector<8x1024xf32>
    %12 = tpu.matmul %3, %11, %cst_11 {dimension_numbers = #tpu.dot_dimension_numbers<[1], [0], [0], [1], [0, 0, 1, 1], [], []>} : vector<8x8xf32>, vector<8x1024xf32>, vector<8x1024xf32> -> vector<8x1024xf32>
    %cst_12 = arith.constant dense<0.000000e+00> : vector<8xf32>
    %13 = vector.multi_reduction <add>, %12, %cst_12 [1] : vector<8x1024xf32> to vector<8xf32>
    %14 = vector.shape_cast %13 : vector<8xf32> to vector<8x1xf32>
    %cst_13 = arith.constant 9.99999974E-6 : f32
    %15 = vector.broadcast %cst_13 : f32 to vector<8x1xf32>
    %16 = arith.addf %14, %15 : vector<8x1xf32>
    %17 = math.rsqrt %16 : vector<8x1xf32>
    %18 = arith.mulf %4, %17 : vector<8x1xf32>
    %19 = vector.broadcast %18 : vector<8x1xf32> to vector<8x1024xf32>
    %20 = arith.mulf %10, %19 : vector<8x1024xf32>
    %21 = vector.broadcast %5 : vector<8x1xf32> to vector<8x1024xf32>
    %22 = arith.addf %20, %21 : vector<8x1024xf32>
    %c0_14 = arith.constant 0 : index
    %c0_15 = arith.constant 0 : index
    %23 = vector.load %arg3[%c0_14, %c0_15] : memref<3x1024xf32, #tpu.memory_space<vmem>>, vector<1x1024xf32>
    %c1 = arith.constant 1 : index
    %c0_16 = arith.constant 0 : index
    %24 = vector.load %arg3[%c1, %c0_16] : memref<3x1024xf32, #tpu.memory_space<vmem>>, vector<1x1024xf32>
    %c2 = arith.constant 2 : index
    %c0_17 = arith.constant 0 : index
    %25 = vector.load %arg3[%c2, %c0_17] : memref<3x1024xf32, #tpu.memory_space<vmem>>, vector<1x1024xf32>
    %c1023_i32 = arith.constant 1023 : i32
    %26 = tpu.dynamic_rotate %22 by %c1023_i32 dim 1 : vector<8x1024xf32>, i32 -> vector<8x1024xf32>
    %27 = vector.broadcast %23 : vector<1x1024xf32> to vector<8x1024xf32>
    %28 = arith.mulf %26, %27 : vector<8x1024xf32>
    %c992_i32 = arith.constant 992 : i32
    %29 = tpu.dynamic_rotate %22 by %c992_i32 dim 1 : vector<8x1024xf32>, i32 -> vector<8x1024xf32>
    %30 = vector.broadcast %24 : vector<1x1024xf32> to vector<8x1024xf32>
    %31 = arith.mulf %29, %30 : vector<8x1024xf32>
    %c991_i32 = arith.constant 991 : i32
    %32 = tpu.dynamic_rotate %22 by %c991_i32 dim 1 : vector<8x1024xf32>, i32 -> vector<8x1024xf32>
    %33 = vector.broadcast %25 : vector<1x1024xf32> to vector<8x1024xf32>
    %34 = arith.mulf %32, %33 : vector<8x1024xf32>
    %c0_18 = arith.constant 0 : index
    %c0_19 = arith.constant 0 : index
    %c0_20 = arith.constant 0 : index
    %35 = vector.load %arg2[%c0_18, %c0_19, %c0_20] : memref<4x16x8xf32, #tpu.memory_space<vmem>>, vector<1x16x8xf32>
    %36 = vector.shape_cast %35 : vector<1x16x8xf32> to vector<16x8xf32>
    %cst_21 = arith.constant dense<0.000000e+00> : vector<16x1024xf32>
    %37 = tpu.matmul %36, %22, %cst_21 {dimension_numbers = #tpu.dot_dimension_numbers<[1], [0], [0], [1], [0, 0, 1, 1], [], []>} : vector<16x8xf32>, vector<8x1024xf32>, vector<16x1024xf32> -> vector<16x1024xf32>
    %c1_22 = arith.constant 1 : index
    %c0_23 = arith.constant 0 : index
    %c0_24 = arith.constant 0 : index
    %38 = vector.load %arg2[%c1_22, %c0_23, %c0_24] : memref<4x16x8xf32, #tpu.memory_space<vmem>>, vector<1x16x8xf32>
    %39 = vector.shape_cast %38 : vector<1x16x8xf32> to vector<16x8xf32>
    %cst_25 = arith.constant dense<0.000000e+00> : vector<16x1024xf32>
    %40 = tpu.matmul %39, %28, %cst_25 {dimension_numbers = #tpu.dot_dimension_numbers<[1], [0], [0], [1], [0, 0, 1, 1], [], []>} : vector<16x8xf32>, vector<8x1024xf32>, vector<16x1024xf32> -> vector<16x1024xf32>
    %41 = arith.addf %37, %40 : vector<16x1024xf32>
    %c2_26 = arith.constant 2 : index
    %c0_27 = arith.constant 0 : index
    %c0_28 = arith.constant 0 : index
    %42 = vector.load %arg2[%c2_26, %c0_27, %c0_28] : memref<4x16x8xf32, #tpu.memory_space<vmem>>, vector<1x16x8xf32>
    %43 = vector.shape_cast %42 : vector<1x16x8xf32> to vector<16x8xf32>
    %cst_29 = arith.constant dense<0.000000e+00> : vector<16x1024xf32>
    %44 = tpu.matmul %43, %31, %cst_29 {dimension_numbers = #tpu.dot_dimension_numbers<[1], [0], [0], [1], [0, 0, 1, 1], [], []>} : vector<16x8xf32>, vector<8x1024xf32>, vector<16x1024xf32> -> vector<16x1024xf32>
    %45 = arith.addf %41, %44 : vector<16x1024xf32>
    %c3 = arith.constant 3 : index
    %c0_30 = arith.constant 0 : index
    %c0_31 = arith.constant 0 : index
    %46 = vector.load %arg2[%c3, %c0_30, %c0_31] : memref<4x16x8xf32, #tpu.memory_space<vmem>>, vector<1x16x8xf32>
    %47 = vector.shape_cast %46 : vector<1x16x8xf32> to vector<16x8xf32>
    %cst_32 = arith.constant dense<0.000000e+00> : vector<16x1024xf32>
    %48 = tpu.matmul %47, %34, %cst_32 {dimension_numbers = #tpu.dot_dimension_numbers<[1], [0], [0], [1], [0, 0, 1, 1], [], []>} : vector<16x8xf32>, vector<8x1024xf32>, vector<16x1024xf32> -> vector<16x1024xf32>
    %49 = arith.addf %45, %48 : vector<16x1024xf32>
    %c0_33 = arith.constant 0 : index
    %c0_34 = arith.constant 0 : index
    %50 = vector.load %arg5[%c0_33, %c0_34] : memref<16x16xf32, #tpu.memory_space<vmem>>, vector<16x16xf32>
    %c0_35 = arith.constant 0 : index
    %c0_36 = arith.constant 0 : index
    %51 = vector.load %arg8[%c0_35, %c0_36] : memref<16x1xf32, #tpu.memory_space<vmem>>, vector<16x1xf32>
    %c0_37 = arith.constant 0 : index
    %c0_38 = arith.constant 0 : index
    %52 = vector.load %arg9[%c0_37, %c0_38] : memref<16x1xf32, #tpu.memory_space<vmem>>, vector<16x1xf32>
    %cst_39 = arith.constant dense<0.000000e+00> : vector<16x1024xf32>
    %53 = tpu.matmul %50, %49, %cst_39 {dimension_numbers = #tpu.dot_dimension_numbers<[1], [0], [0], [1], [0, 0, 1, 1], [], []>} : vector<16x16xf32>, vector<16x1024xf32>, vector<16x1024xf32> -> vector<16x1024xf32>
    %cst_40 = arith.constant dense<0.000000e+00> : vector<16xf32>
    %54 = vector.multi_reduction <add>, %53, %cst_40 [1] : vector<16x1024xf32> to vector<16xf32>
    %55 = vector.shape_cast %54 : vector<16xf32> to vector<16x1xf32>
    %56 = vector.broadcast %55 : vector<16x1xf32> to vector<16x1024xf32>
    %57 = arith.subf %49, %56 : vector<16x1024xf32>
    %58 = arith.mulf %57, %57 : vector<16x1024xf32>
    %cst_41 = arith.constant dense<0.000000e+00> : vector<16x1024xf32>
    %59 = tpu.matmul %50, %58, %cst_41 {dimension_numbers = #tpu.dot_dimension_numbers<[1], [0], [0], [1], [0, 0, 1, 1], [], []>} : vector<16x16xf32>, vector<16x1024xf32>, vector<16x1024xf32> -> vector<16x1024xf32>
    %cst_42 = arith.constant dense<0.000000e+00> : vector<16xf32>
    %60 = vector.multi_reduction <add>, %59, %cst_42 [1] : vector<16x1024xf32> to vector<16xf32>
    %61 = vector.shape_cast %60 : vector<16xf32> to vector<16x1xf32>
    %cst_43 = arith.constant 9.99999974E-6 : f32
    %62 = vector.broadcast %cst_43 : f32 to vector<16x1xf32>
    %63 = arith.addf %61, %62 : vector<16x1xf32>
    %64 = math.rsqrt %63 : vector<16x1xf32>
    %65 = arith.mulf %51, %64 : vector<16x1xf32>
    %66 = vector.broadcast %65 : vector<16x1xf32> to vector<16x1024xf32>
    %67 = arith.mulf %57, %66 : vector<16x1024xf32>
    %68 = vector.broadcast %52 : vector<16x1xf32> to vector<16x1024xf32>
    %69 = arith.addf %67, %68 : vector<16x1024xf32>
    %c0_44 = arith.constant 0 : index
    %c0_45 = arith.constant 0 : index
    %70 = vector.load %arg10[%c0_44, %c0_45] : memref<16x1024xf32, #tpu.memory_space<vmem>>, vector<16x1024xf32>
    tpu.vector_store %arg10[%c0_44, %c0_45], %69 {strides = array<i32>} : memref<16x1024xf32, #tpu.memory_space<vmem>>, vector<16x1024xf32>,
    return
  }
}

</mosaic_0001>

<llo_original>
// kernel: tpu_custom_call.1
$region0: #{tpu_custom_call.1}
  #allocation0 [shape = 'u32[]', space=smem, size = 0x4, offset = 0x4, fixed_abs, tag = 'smem constant byte address 0x4 - core index']
  #allocation1 [shape = 'u32[144,128]{1,0:T(1,128)}', space=vmem, size = 0x12000, scoped, tag = 'internal scratch']
  %s0 = inlined_call_operand.vmem [shape: f32[8,256], index: 0, kind: input, shape index: {}]
  %s1 = inlined_call_operand.hbm [shape: f32[256,1024], index: 1, kind: input, shape index: {}]
  %s2 = inlined_call_operand.vmem [shape: f32[4,16,8], index: 2, kind: input, shape index: {}]
  %s3 = inlined_call_operand.vmem [shape: f32[3,1024], index: 3, kind: input, shape index: {}]
  %s4 = inlined_call_operand.vmem [shape: f32[8,8], index: 4, kind: input, shape index: {}]
  %s5 = inlined_call_operand.vmem [shape: f32[16,16], index: 5, kind: input, shape index: {}]
  %s6 = inlined_call_operand.vmem [shape: f32[8,1], index: 6, kind: input, shape index: {}]
  %s7 = inlined_call_operand.vmem [shape: f32[8,1], index: 7, kind: input, shape index: {}]
  %s8 = inlined_call_operand.vmem [shape: f32[16,1], index: 8, kind: input, shape index: {}]
  %s9 = inlined_call_operand.vmem [shape: f32[16,1], index: 9, kind: input, shape index: {}]
  %s10 = inlined_call_operand.hbm [shape: f32[16,1024], index: 10, kind: output, shape index: {}]
  %s11 = sld [smem:[#allocation0]]
  $region54: #{tpu_custom_call.1} parent=0
    _
  %s13 = ssub.s32 1, %s11
  %s14 = scalar_select 0, %s13, %s11
  $region1: #{tpu_custom_call.1} parent=0
    #allocation2 [shape = 'u8[1048576]{0}', space=vmem, size = 0x100000, scoped, tag = 'input window, operand 1, single buffered']
    #allocation3 [shape = 's32[1]{0}', space=sflag, size = 0x4, scoped, tag = 'scoped memory for tpu_custom_call.1']
    #allocation4 [shape = 's32[1]{0}', space=sflag, size = 0x4, scoped, tag = 'scoped memory for tpu_custom_call.1']
    #allocation5 [shape = 'u8[65536]{0}', space=vmem, size = 0x10000, scoped, tag = 'output window, operand 0, single buffered']
    %15 = vsyncpa [#allocation3], 0
    %16 = vsyncpa [#allocation4], 0
    // Predicated region
    $region2: #{tpu_custom_call.1} parent=1 // pred_check
      _
    $region3: #{tpu_custom_call.1} parent=1 // pred_check_branch
      %18 = sbr.rel (0) target = $region5
    $region4: #{tpu_custom_call.1} parent=1 // pred_region
      _
    $region5: #{tpu_custom_call.1} parent=1 // pred_fallthru
      _
    // Predicated region
    $region6: #{tpu_custom_call.1} parent=1 // pred_check
      _
    $region7: #{tpu_custom_call.1} parent=1 // pred_check_branch
      %20 = sbr.rel (0) target = $region9
    $region8: #{tpu_custom_call.1} parent=1 // pred_region
      %s22 = ssub.s32 32768, 32768
      %23 = vsyncadd [#allocation3], %s22
      %s24 = sshll.u32 [#allocation2], 4
      %s25 = int_to_ptr.vmem [resolvable:$true] %s24
      %30 = dma.hbm_to_vmem [thread:$0]  %s1, 32768, %s25, [#allocation3], 1024, 1024, 64
    $region9: #{tpu_custom_call.1} parent=1 // pred_fallthru
      _
    // Predicated region
    $region10: #{tpu_custom_call.1} parent=1 // pred_check
      _
    $region11: #{tpu_custom_call.1} parent=1 // pred_check_branch
      %32 = sbr.rel (0) target = $region13
    $region12: #{tpu_custom_call.1} parent=1 // pred_region
      _
    $region13: #{tpu_custom_call.1} parent=1 // pred_fallthru
      _
    // Predicated region
    $region14: #{tpu_custom_call.1} parent=1 // pred_check
      _
    $region15: #{tpu_custom_call.1} parent=1 // pred_check_branch
      %34 = sbr.rel (0) target = $region17
    $region16: #{tpu_custom_call.1} parent=1 // pred_region
      _
    $region17: #{tpu_custom_call.1} parent=1 // pred_fallthru
      _
    // Predicated region
    $region18: #{tpu_custom_call.1} parent=1 // pred_check
      _
    $region19: #{tpu_custom_call.1} parent=1 // pred_check_branch
      %36 = sbr.rel (0) target = $region21
    $region20: #{tpu_custom_call.1} parent=1 // pred_region
      _
    $region21: #{tpu_custom_call.1} parent=1 // pred_fallthru
      _
    // Predicated region
    $region22: #{tpu_custom_call.1} parent=1 // pred_check
      _
    $region23: #{tpu_custom_call.1} parent=1 // pred_check_branch
      %38 = sbr.rel (0) target = $region25
    $region24: #{tpu_custom_call.1} parent=1 // pred_region
      _
    $region25: #{tpu_custom_call.1} parent=1 // pred_fallthru
      _
    // Predicated region
    $region26: #{tpu_custom_call.1} parent=1 // pred_check
      _
    $region27: #{tpu_custom_call.1} parent=1 // pred_check_branch
      %40 = sbr.rel (0) target = $region29
    $region28: #{tpu_custom_call.1} parent=1 // pred_region
      _
    $region29: #{tpu_custom_call.1} parent=1 // pred_fallthru
      _
    // Predicated region
    $region30: #{tpu_custom_call.1} parent=1 // pred_check
      _
    $region31: #{tpu_custom_call.1} parent=1 // pred_check_branch
      %42 = sbr.rel (0) target = $region33
    $region32: #{tpu_custom_call.1} parent=1 // pred_region
      _
    $region33: #{tpu_custom_call.1} parent=1 // pred_fallthru
      _
    // Predicated region
    $region34: #{tpu_custom_call.1} parent=1 // pred_check
      _
    $region35: #{tpu_custom_call.1} parent=1 // pred_check_branch
      %44 = sbr.rel (0) target = $region37
    $region36: #{tpu_custom_call.1} parent=1 // pred_region
      _
    $region37: #{tpu_custom_call.1} parent=1 // pred_fallthru
      _
    // Predicated region
    $region38: #{tpu_custom_call.1} parent=1 // pred_check
      _
    $region39: #{tpu_custom_call.1} parent=1 // pred_check_branch
      %46 = sbr.rel (0) target = $region41
    $region40: #{tpu_custom_call.1} parent=1 // pred_region
      _
    $region41: #{tpu_custom_call.1} parent=1 // pred_fallthru
      _
    // Predicated region
    $region42: #{tpu_custom_call.1} parent=1 // pred_check
      _
    $region43: #{tpu_custom_call.1} parent=1 // pred_check_branch
      %48 = sbr.rel (0) target = $region45
    $region44: #{tpu_custom_call.1} parent=1 // pred_region
      %49 = dma.done [#allocation3], 32768
    $region45: #{tpu_custom_call.1} parent=1 // pred_fallthru
      _
    %v50 = vld [vmem:[%s0] sm:$0xff]
    %v51 = vld [vmem:[%s0 + $0x8] sm:$0xff]
    %v52 = vld [vmem:[#allocation2] sm:$0xff]
    %v53 = vld [vmem:[#allocation2 + $0x8] sm:$0xff]
    %v54 = vld [vmem:[#allocation2 + $0x10] sm:$0xff]
    %v55 = vld [vmem:[#allocation2 + $0x18] sm:$0xff]
    %v56 = vld [vmem:[#allocation2 + $0x20] sm:$0xff]
    %v57 = vld [vmem:[#allocation2 + $0x28] sm:$0xff]
    %v58 = vld [vmem:[#allocation2 + $0x30] sm:$0xff]
    %v59 = vld [vmem:[#allocation2 + $0x38] sm:$0xff]
    %v60 = vld [vmem:[#allocation2 + $0x40] sm:$0xff]
    %v61 = vld [vmem:[#allocation2 + $0x48] sm:$0xff]
    %v62 = vld [vmem:[#allocation2 + $0x50] sm:$0xff]
    %v63 = vld [vmem:[#allocation2 + $0x58] sm:$0xff]
    %v64 = vld [vmem:[#allocation2 + $0x60] sm:$0xff]
    %v65 = vld [vmem:[#allocation2 + $0x68] sm:$0xff]
    %v66 = vld [vmem:[#allocation2 + $0x70] sm:$0xff]
    %v67 = vld [vmem:[#allocation2 + $0x78] sm:$0xff]
    %v68 = vld [vmem:[#allocation2 + $0x80] sm:$0xff]
    %v69 = vld [vmem:[#allocation2 + $0x88] sm:$0xff]
    %v70 = vld [vmem:[#allocation2 + $0x90] sm:$0xff]
    %v71 = vld [vmem:[#allocation2 + $0x98] sm:$0xff]
    %v72 = vld [vmem:[#allocation2 + $0xa0] sm:$0xff]
    %v73 = vld [vmem:[#allocation2 + $0xa8] sm:$0xff]
    %v74 = vld [vmem:[#allocation2 + $0xb0] sm:$0xff]
    %v75 = vld [vmem:[#allocation2 + $0xb8] sm:$0xff]
    %v76 = vld [vmem:[#allocation2 + $0xc0] sm:$0xff]
    %v77 = vld [vmem:[#allocation2 + $0xc8] sm:$0xff]
    %v78 = vld [vmem:[#allocation2 + $0xd0] sm:$0xff]
    %v79 = vld [vmem:[#allocation2 + $0xd8] sm:$0xff]
    %v80 = vld [vmem:[#allocation2 + $0xe0] sm:$0xff]
    %v81 = vld [vmem:[#allocation2 + $0xe8] sm:$0xff]
    %v82 = vld [vmem:[#allocation2 + $0xf0] sm:$0xff]
    %v83 = vld [vmem:[#allocation2 + $0xf8] sm:$0xff]
    %v84 = vld [vmem:[#allocation2 + $0x100] sm:$0xff]
    %v85 = vld [vmem:[#allocation2 + $0x108] sm:$0xff]
    %v86 = vld [vmem:[#allocation2 + $0x110] sm:$0xff]
    %v87 = vld [vmem:[#allocation2 + $0x118] sm:$0xff]
    %v88 = vld [vmem:[#allocation2 + $0x120] sm:$0xff]
    %v89 = vld [vmem:[#allocation2 + $0x128] sm:$0xff]
    %v90 = vld [vmem:[#allocation2 + $0x130] sm:$0xff]
    %v91 = vld [vmem:[#allocation2 + $0x138] sm:$0xff]
    %v92 = vld [vmem:[#allocation2 + $0x140] sm:$0xff]
    %v93 = vld [vmem:[#allocation2 + $0x148] sm:$0xff]
    %v94 = vld [vmem:[#allocation2 + $0x150] sm:$0xff]
    %v95 = vld [vmem:[#allocation2 + $0x158] sm:$0xff]
    %v96 = vld [vmem:[#allocation2 + $0x160] sm:$0xff]
    %v97 = vld [vmem:[#allocation2 + $0x168] sm:$0xff]
    %v98 = vld [vmem:[#allocation2 + $0x170] sm:$0xff]
    %v99 = vld [vmem:[#allocation2 + $0x178] sm:$0xff]
    %v100 = vld [vmem:[#allocation2 + $0x180] sm:$0xff]
    %v101 = vld [vmem:[#allocation2 + $0x188] sm:$0xff]
    %v102 = vld [vmem:[#allocation2 + $0x190] sm:$0xff]
    %v103 = vld [vmem:[#allocation2 + $0x198] sm:$0xff]
    %v104 = vld [vmem:[#allocation2 + $0x1a0] sm:$0xff]
    %v105 = vld [vmem:[#allocation2 + $0x1a8] sm:$0xff]
    %v106 = vld [vmem:[#allocation2 + $0x1b0] sm:$0xff]
    %v107 = vld [vmem:[#allocation2 + $0x1b8] sm:$0xff]
    %v108 = vld [vmem:[#allocation2 + $0x1c0] sm:$0xff]
    %v109 = vld [vmem:[#allocation2 + $0x1c8] sm:$0xff]
    %v110 = vld [vmem:[#allocation2 + $0x1d0] sm:$0xff]
    %v111 = vld [vmem:[#allocation2 + $0x1d8] sm:$0xff]
    %v112 = vld [vmem:[#allocation2 + $0x1e0] sm:$0xff]
    %v113 = vld [vmem:[#allocation2 + $0x1e8] sm:$0xff]
    %v114 = vld [vmem:[#allocation2 + $0x1f0] sm:$0xff]
    %v115 = vld [vmem:[#allocation2 + $0x1f8] sm:$0xff]
    %v116 = vld [vmem:[#allocation2 + $0x200] sm:$0xff]
    %v117 = vld [vmem:[#allocation2 + $0x208] sm:$0xff]
    %v118 = vld [vmem:[#allocation2 + $0x210] sm:$0xff]
    %v119 = vld [vmem:[#allocation2 + $0x218] sm:$0xff]
    %v120 = vld [vmem:[#allocation2 + $0x220] sm:$0xff]
    %v121 = vld [vmem:[#allocation2 + $0x228] sm:$0xff]
    %v122 = vld [vmem:[#allocation2 + $0x230] sm:$0xff]
    %v123 = vld [vmem:[#allocation2 + $0x238] sm:$0xff]
    %v124 = vld [vmem:[#allocation2 + $0x240] sm:$0xff]
    %v125 = vld [vmem:[#allocation2 + $0x248] sm:$0xff]
    %v126 = vld [vmem:[#allocation2 + $0x250] sm:$0xff]
    %v127 = vld [vmem:[#allocation2 + $0x258] sm:$0xff]
    %v128 = vld [vmem:[#allocation2 + $0x260] sm:$0xff]
    %v129 = vld [vmem:[#allocation2 + $0x268] sm:$0xff]
    %v130 = vld [vmem:[#allocation2 + $0x270] sm:$0xff]
    %v131 = vld [vmem:[#allocation2 + $0x278] sm:$0xff]
    %v132 = vld [vmem:[#allocation2 + $0x280] sm:$0xff]
    %v133 = vld [vmem:[#allocation2 + $0x288] sm:$0xff]
    %v134 = vld [vmem:[#allocation2 + $0x290] sm:$0xff]
    %v135 = vld [vmem:[#allocation2 + $0x298] sm:$0xff]
    %v136 = vld [vmem:[#allocation2 + $0x2a0] sm:$0xff]
    %v137 = vld [vmem:[#allocation2 + $0x2a8] sm:$0xff]
    %v138 = vld [vmem:[#allocation2 + $0x2b0] sm:$0xff]
    %v139 = vld [vmem:[#allocation2 + $0x2b8] sm:$0xff]
    %v140 = vld [vmem:[#allocation2 + $0x2c0] sm:$0xff]
    %v141 = vld [vmem:[#allocation2 + $0x2c8] sm:$0xff]
    %v142 = vld [vmem:[#allocation2 + $0x2d0] sm:$0xff]
    %v143 = vld [vmem:[#allocation2 + $0x2d8] sm:$0xff]
    %v144 = vld [vmem:[#allocation2 + $0x2e0] sm:$0xff]
    %v145 = vld [vmem:[#allocation2 + $0x2e8] sm:$0xff]
    %v146 = vld [vmem:[#allocation2 + $0x2f0] sm:$0xff]
    %v147 = vld [vmem:[#allocation2 + $0x2f8] sm:$0xff]
    %v148 = vld [vmem:[#allocation2 + $0x300] sm:$0xff]
    %v149 = vld [vmem:[#allocation2 + $0x308] sm:$0xff]
    %v150 = vld [vmem:[#allocation2 + $0x310] sm:$0xff]
    %v151 = vld [vmem:[#allocation2 + $0x318] sm:$0xff]
    %v152 = vld [vmem:[#allocation2 + $0x320] sm:$0xff]
    %v153 = vld [vmem:[#allocation2 + $0x328] sm:$0xff]
    %v154 = vld [vmem:[#allocation2 + $0x330] sm:$0xff]
    %v155 = vld [vmem:[#allocation2 + $0x338] sm:$0xff]
    %v156 = vld [vmem:[#allocation2 + $0x340] sm:$0xff]
    %v157 = vld [vmem:[#allocation2 + $0x348] sm:$0xff]
    %v158 = vld [vmem:[#allocation2 + $0x350] sm:$0xff]
    %v159 = vld [vmem:[#allocation2 + $0x358] sm:$0xff]
    %v160 = vld [vmem:[#allocation2 + $0x360] sm:$0xff]
    %v161 = vld [vmem:[#allocation2 + $0x368] sm:$0xff]
    %v162 = vld [vmem:[#allocation2 + $0x370] sm:$0xff]
    %v163 = vld [vmem:[#allocation2 + $0x378] sm:$0xff]
    %v164 = vld [vmem:[#allocation2 + $0x380] sm:$0xff]
    %v165 = vld [vmem:[#allocation2 + $0x388] sm:$0xff]
    %v166 = vld [vmem:[#allocation2 + $0x390] sm:$0xff]
    %v167 = vld [vmem:[#allocation2 + $0x398] sm:$0xff]
    %v168 = vld [vmem:[#allocation2 + $0x3a0] sm:$0xff]
    %v169 = vld [vmem:[#allocation2 + $0x3a8] sm:$0xff]
    %v170 = vld [vmem:[#allocation2 + $0x3b0] sm:$0xff]
    %v171 = vld [vmem:[#allocation2 + $0x3b8] sm:$0xff]
    %v172 = vld [vmem:[#allocation2 + $0x3c0] sm:$0xff]
    %v173 = vld [vmem:[#allocation2 + $0x3c8] sm:$0xff]
    %v174 = vld [vmem:[#allocation2 + $0x3d0] sm:$0xff]
    %v175 = vld [vmem:[#allocation2 + $0x3d8] sm:$0xff]
    %v176 = vld [vmem:[#allocation2 + $0x3e0] sm:$0xff]
    %v177 = vld [vmem:[#allocation2 + $0x3e8] sm:$0xff]
    %v178 = vld [vmem:[#allocation2 + $0x3f0] sm:$0xff]
    %v179 = vld [vmem:[#allocation2 + $0x3f8] sm:$0xff]
    %v180 = vld [vmem:[#allocation2 + $0x400] sm:$0xff]
    %v181 = vld [vmem:[#allocation2 + $0x408] sm:$0xff]
    %v182 = vld [vmem:[#allocation2 + $0x410] sm:$0xff]
    %v183 = vld [vmem:[#allocation2 + $0x418] sm:$0xff]
    %v184 = vld [vmem:[#allocation2 + $0x420] sm:$0xff]
    %v185 = vld [vmem:[#allocation2 + $0x428] sm:$0xff]
    %v186 = vld [vmem:[#allocation2 + $0x430] sm:$0xff]
    %v187 = vld [vmem:[#allocation2 + $0x438] sm:$0xff]
    %v188 = vld [vmem:[#allocation2 + $0x440] sm:$0xff]
    %v189 = vld [vmem:[#allocation2 + $0x448] sm:$0xff]
    %v190 = vld [vmem:[#allocation2 + $0x450] sm:$0xff]
    %v191 = vld [vmem:[#allocation2 + $0x458] sm:$0xff]
    %v192 = vld [vmem:[#allocation2 + $0x460] sm:$0xff]
    %v193 = vld [vmem:[#allocation2 + $0x468] sm:$0xff]
    %v194 = vld [vmem:[#allocation2 + $0x470] sm:$0xff]
    %v195 = vld [vmem:[#allocation2 + $0x478] sm:$0xff]
    %v196 = vld [vmem:[#allocation2 + $0x480] sm:$0xff]
    %v197 = vld [vmem:[#allocation2 + $0x488] sm:$0xff]
    %v198 = vld [vmem:[#allocation2 + $0x490] sm:$0xff]
    %v199 = vld [vmem:[#allocation2 + $0x498] sm:$0xff]
    %v200 = vld [vmem:[#allocation2 + $0x4a0] sm:$0xff]
    %v201 = vld [vmem:[#allocation2 + $0x4a8] sm:$0xff]
    %v202 = vld [vmem:[#allocation2 + $0x4b0] sm:$0xff]
    %v203 = vld [vmem:[#allocation2 + $0x4b8] sm:$0xff]
    %v204 = vld [vmem:[#allocation2 + $0x4c0] sm:$0xff]
    %v205 = vld [vmem:[#allocation2 + $0x4c8] sm:$0xff]
    %v206 = vld [vmem:[#allocation2 + $0x4d0] sm:$0xff]
    %v207 = vld [vmem:[#allocation2 + $0x4d8] sm:$0xff]
    %v208 = vld [vmem:[#allocation2 + $0x4e0] sm:$0xff]
    %v209 = vld [vmem:[#allocation2 + $0x4e8] sm:$0xff]
    %v210 = vld [vmem:[#allocation2 + $0x4f0] sm:$0xff]
    %v211 = vld [vmem:[#allocation2 + $0x4f8] sm:$0xff]
    %v212 = vld [vmem:[#allocation2 + $0x500] sm:$0xff]
    %v213 = vld [vmem:[#allocation2 + $0x508] sm:$0xff]
    %v214 = vld [vmem:[#allocation2 + $0x510] sm:$0xff]
    %v215 = vld [vmem:[#allocation2 + $0x518] sm:$0xff]
    %v216 = vld [vmem:[#allocation2 + $0x520] sm:$0xff]
    %v217 = vld [vmem:[#allocation2 + $0x528] sm:$0xff]
    %v218 = vld [vmem:[#allocation2 + $0x530] sm:$0xff]
    %v219 = vld [vmem:[#allocation2 + $0x538] sm:$0xff]
    %v220 = vld [vmem:[#allocation2 + $0x540] sm:$0xff]
    %v221 = vld [vmem:[#allocation2 + $0x548] sm:$0xff]
    %v222 = vld [vmem:[#allocation2 + $0x550] sm:$0xff]
    %v223 = vld [vmem:[#allocation2 + $0x558] sm:$0xff]
    %v224 = vld [vmem:[#allocation2 + $0x560] sm:$0xff]
    %v225 = vld [vmem:[#allocation2 + $0x568] sm:$0xff]
    %v226 = vld [vmem:[#allocation2 + $0x570] sm:$0xff]
    %v227 = vld [vmem:[#allocation2 + $0x578] sm:$0xff]
    %v228 = vld [vmem:[#allocation2 + $0x580] sm:$0xff]
    %v229 = vld [vmem:[#allocation2 + $0x588] sm:$0xff]
    %v230 = vld [vmem:[#allocation2 + $0x590] sm:$0xff]
    %v231 = vld [vmem:[#allocation2 + $0x598] sm:$0xff]
    %v232 = vld [vmem:[#allocation2 + $0x5a0] sm:$0xff]
    %v233 = vld [vmem:[#allocation2 + $0x5a8] sm:$0xff]
    %v234 = vld [vmem:[#allocation2 + $0x5b0] sm:$0xff]
    %v235 = vld [vmem:[#allocation2 + $0x5b8] sm:$0xff]
    %v236 = vld [vmem:[#allocation2 + $0x5c0] sm:$0xff]
    %v237 = vld [vmem:[#allocation2 + $0x5c8] sm:$0xff]
    %v238 = vld [vmem:[#allocation2 + $0x5d0] sm:$0xff]
    %v239 = vld [vmem:[#allocation2 + $0x5d8] sm:$0xff]
    %v240 = vld [vmem:[#allocation2 + $0x5e0] sm:$0xff]
    %v241 = vld [vmem:[#allocation2 + $0x5e8] sm:$0xff]
    %v242 = vld [vmem:[#allocation2 + $0x5f0] sm:$0xff]
    %v243 = vld [vmem:[#allocation2 + $0x5f8] sm:$0xff]
    %v244 = vld [vmem:[#allocation2 + $0x600] sm:$0xff]
    %v245 = vld [vmem:[#allocation2 + $0x608] sm:$0xff]
    %v246 = vld [vmem:[#allocation2 + $0x610] sm:$0xff]
    %v247 = vld [vmem:[#allocation2 + $0x618] sm:$0xff]
    %v248 = vld [vmem:[#allocation2 + $0x620] sm:$0xff]
    %v249 = vld [vmem:[#allocation2 + $0x628] sm:$0xff]
    %v250 = vld [vmem:[#allocation2 + $0x630] sm:$0xff]
    %v251 = vld [vmem:[#allocation2 + $0x638] sm:$0xff]
    %v252 = vld [vmem:[#allocation2 + $0x640] sm:$0xff]
    %v253 = vld [vmem:[#allocation2 + $0x648] sm:$0xff]
    %v254 = vld [vmem:[#allocation2 + $0x650] sm:$0xff]
    %v255 = vld [vmem:[#allocation2 + $0x658] sm:$0xff]
    %v256 = vld [vmem:[#allocation2 + $0x660] sm:$0xff]
    %v257 = vld [vmem:[#allocation2 + $0x668] sm:$0xff]
    %v258 = vld [vmem:[#allocation2 + $0x670] sm:$0xff]
    %v259 = vld [vmem:[#allocation2 + $0x678] sm:$0xff]
    %v260 = vld [vmem:[#allocation2 + $0x680] sm:$0xff]
    %v261 = vld [vmem:[#allocation2 + $0x688] sm:$0xff]
    %v262 = vld [vmem:[#allocation2 + $0x690] sm:$0xff]
    %v263 = vld [vmem:[#allocation2 + $0x698] sm:$0xff]
    %v264 = vld [vmem:[#allocation2 + $0x6a0] sm:$0xff]
    %v265 = vld [vmem:[#allocation2 + $0x6a8] sm:$0xff]
    %v266 = vld [vmem:[#allocation2 + $0x6b0] sm:$0xff]
    %v267 = vld [vmem:[#allocation2 + $0x6b8] sm:$0xff]
    %v268 = vld [vmem:[#allocation2 + $0x6c0] sm:$0xff]
    %v269 = vld [vmem:[#allocation2 + $0x6c8] sm:$0xff]
    %v270 = vld [vmem:[#allocation2 + $0x6d0] sm:$0xff]
    %v271 = vld [vmem:[#allocation2 + $0x6d8] sm:$0xff]
    %v272 = vld [vmem:[#allocation2 + $0x6e0] sm:$0xff]
    %v273 = vld [vmem:[#allocation2 + $0x6e8] sm:$0xff]
    %v274 = vld [vmem:[#allocation2 + $0x6f0] sm:$0xff]
    %v275 = vld [vmem:[#allocation2 + $0x6f8] sm:$0xff]
    %v276 = vld [vmem:[#allocation2 + $0x700] sm:$0xff]
    %v277 = vld [vmem:[#allocation2 + $0x708] sm:$0xff]
    %v278 = vld [vmem:[#allocation2 + $0x710] sm:$0xff]
    %v279 = vld [vmem:[#allocation2 + $0x718] sm:$0xff]
    %v280 = vld [vmem:[#allocation2 + $0x720] sm:$0xff]
    %v281 = vld [vmem:[#allocation2 + $0x728] sm:$0xff]
    %v282 = vld [vmem:[#allocation2 + $0x730] sm:$0xff]
    %v283 = vld [vmem:[#allocation2 + $0x738] sm:$0xff]
    %v284 = vld [vmem:[#allocation2 + $0x740] sm:$0xff]
    %v285 = vld [vmem:[#allocation2 + $0x748] sm:$0xff]
    %v286 = vld [vmem:[#allocation2 + $0x750] sm:$0xff]
    %v287 = vld [vmem:[#allocation2 + $0x758] sm:$0xff]
    %v288 = vld [vmem:[#allocation2 + $0x760] sm:$0xff]
    %v289 = vld [vmem:[#allocation2 + $0x768] sm:$0xff]
    %v290 = vld [vmem:[#allocation2 + $0x770] sm:$0xff]
    %v291 = vld [vmem:[#allocation2 + $0x778] sm:$0xff]
    %v292 = vld [vmem:[#allocation2 + $0x780] sm:$0xff]
    %v293 = vld [vmem:[#allocation2 + $0x788] sm:$0xff]
    %v294 = vld [vmem:[#allocation2 + $0x790] sm:$0xff]
    %v295 = vld [vmem:[#allocation2 + $0x798] sm:$0xff]
    %v296 = vld [vmem:[#allocation2 + $0x7a0] sm:$0xff]
    %v297 = vld [vmem:[#allocation2 + $0x7a8] sm:$0xff]
    %v298 = vld [vmem:[#allocation2 + $0x7b0] sm:$0xff]
    %v299 = vld [vmem:[#allocation2 + $0x7b8] sm:$0xff]
    %v300 = vld [vmem:[#allocation2 + $0x7c0] sm:$0xff]
    %v301 = vld [vmem:[#allocation2 + $0x7c8] sm:$0xff]
    %v302 = vld [vmem:[#allocation2 + $0x7d0] sm:$0xff]
    %v303 = vld [vmem:[#allocation2 + $0x7d8] sm:$0xff]
    %v304 = vld [vmem:[#allocation2 + $0x7e0] sm:$0xff]
    %v305 = vld [vmem:[#allocation2 + $0x7e8] sm:$0xff]
    %v306 = vld [vmem:[#allocation2 + $0x7f0] sm:$0xff]
    %v307 = vld [vmem:[#allocation2 + $0x7f8] sm:$0xff]
    %308 = vmatprep.subr.mxu0 %v53
    %309 = vmatpush1.msra.mxu0 %v52
    %310 = vmatprep.subr.mxu0 %v61
    %311 = vmatpush1.msra.mxu0 %v60
    %312 = vmatprep.subr.mxu0 %v69
    %313 = vmatpush1.msra.mxu0 %v68
    %314 = vmatprep.subr.mxu0 %v77
    %315 = vmatpush1.msra.mxu0 %v76
    %316 = vmatprep.subr.mxu0 %v85
    %317 = vmatpush1.msra.mxu0 %v84
    %318 = vmatprep.subr.mxu0 %v93
    %319 = vmatpush1.msra.mxu0 %v92
    %320 = vmatprep.subr.mxu0 %v101
    %321 = vmatpush1.msra.mxu0 %v100
    %322 = vmatprep.subr.mxu0 %v109
    %323 = vmatpush1.msra.mxu0 %v108
    %324 = vmatprep.subr.mxu0 %v117
    %325 = vmatpush1.msra.mxu0 %v116
    %326 = vmatprep.subr.mxu0 %v125
    %327 = vmatpush1.msra.mxu0 %v124
    %328 = vmatprep.subr.mxu0 %v133
    %329 = vmatpush1.msra.mxu0 %v132
    %330 = vmatprep.subr.mxu0 %v141
    %331 = vmatpush1.msra.mxu0 %v140
    %332 = vmatprep.subr.mxu0 %v149
    %333 = vmatpush1.msra.mxu0 %v148
    %334 = vmatprep.subr.mxu0 %v157
    %335 = vmatpush1.msra.mxu0 %v156
    %336 = vmatprep.subr.mxu0 %v165
    %337 = vmatpush1.msra.mxu0 %v164
    %338 = vmatprep.subr.mxu0 %v173
    %339 = vmatpush1.msra.mxu0 %v172
    %340 = vmatprep.subr.mxu0 %v181
    %341 = vmatpush1.msra.mxu0 %v180
    %342 = vmatprep.subr.mxu0 %v189
    %343 = vmatpush1.msra.mxu0 %v188
    %344 = vmatprep.subr.mxu0 %v197
    %345 = vmatpush1.msra.mxu0 %v196
    %346 = vmatprep.subr.mxu0 %v205
    %347 = vmatpush1.msra.mxu0 %v204
    %348 = vmatprep.subr.mxu0 %v213
    %349 = vmatpush1.msra.mxu0 %v212
    %350 = vmatprep.subr.mxu0 %v221
    %351 = vmatpush1.msra.mxu0 %v220
    %352 = vmatprep.subr.mxu0 %v229
    %353 = vmatpush1.msra.mxu0 %v228
    %354 = vmatprep.subr.mxu0 %v237
    %355 = vmatpush1.msra.mxu0 %v236
    %356 = vmatprep.subr.mxu0 %v245
    %357 = vmatpush1.msra.mxu0 %v244
    %358 = vmatprep.subr.mxu0 %v253
    %359 = vmatpush1.msra.mxu0 %v252
    %360 = vmatprep.subr.mxu0 %v261
    %361 = vmatpush1.msra.mxu0 %v260
    %362 = vmatprep.subr.mxu0 %v269
    %363 = vmatpush1.msra.mxu0 %v268
    %364 = vmatprep.subr.mxu0 %v277
    %365 = vmatpush1.msra.mxu0 %v276
    %366 = vmatprep.subr.mxu0 %v285
    %367 = vmatpush1.msra.mxu0 %v284
    %368 = vmatprep.subr.mxu0 %v293
    %369 = vmatpush1.msra.mxu0 %v292
    %370 = vmatprep.subr.mxu0 %v301
    %371 = vmatpush1.msra.mxu0 %v300
    %372 = vmatprep.mubr.f32.mxu0 %v51
    %373 = vmatmul.mubr.f32.gmra.mrb[0].mxu0 %v50
    %v374 = vpop.f32.mrb[0].mxu0
    %v375 = vadd.f32 0.0, %v374
    %v376 = vpop.f32.mrb[0].mxu0
    %v377 = vadd.f32 0.0, %v376
    %378 = vdwg.mxu0
    %379 = vmatprep.subr.mxu0 %v55
    %380 = vmatpush1.msra.mxu0 %v54
    %381 = vmatprep.subr.mxu0 %v63
    %382 = vmatpush1.msra.mxu0 %v62
    %383 = vmatprep.subr.mxu0 %v71
    %384 = vmatpush1.msra.mxu0 %v70
    %385 = vmatprep.subr.mxu0 %v79
    %386 = vmatpush1.msra.mxu0 %v78
    %387 = vmatprep.subr.mxu0 %v87
    %388 = vmatpush1.msra.mxu0 %v86
    %389 = vmatprep.subr.mxu0 %v95
    %390 = vmatpush1.msra.mxu0 %v94
    %391 = vmatprep.subr.mxu0 %v103
    %392 = vmatpush1.msra.mxu0 %v102
    %393 = vmatprep.subr.mxu0 %v111
    %394 = vmatpush1.msra.mxu0 %v110
    %395 = vmatprep.subr.mxu0 %v119
    %396 = vmatpush1.msra.mxu0 %v118
    %397 = vmatprep.subr.mxu0 %v127
    %398 = vmatpush1.msra.mxu0 %v126
    %399 = vmatprep.subr.mxu0 %v135
    %400 = vmatpush1.msra.mxu0 %v134
    %401 = vmatprep.subr.mxu0 %v143
    %402 = vmatpush1.msra.mxu0 %v142
    %403 = vmatprep.subr.mxu0 %v151
    %404 = vmatpush1.msra.mxu0 %v150
    %405 = vmatprep.subr.mxu0 %v159
    %406 = vmatpush1.msra.mxu0 %v158
    %407 = vmatprep.subr.mxu0 %v167
    %408 = vmatpush1.msra.mxu0 %v166
    %409 = vmatprep.subr.mxu0 %v175
    %410 = vmatpush1.msra.mxu0 %v174
    %411 = vmatprep.subr.mxu0 %v183
    %412 = vmatpush1.msra.mxu0 %v182
    %413 = vmatprep.subr.mxu0 %v191
    %414 = vmatpush1.msra.mxu0 %v190
    %415 = vmatprep.subr.mxu0 %v199
    %416 = vmatpush1.msra.mxu0 %v198
    %417 = vmatprep.subr.mxu0 %v207
    %418 = vmatpush1.msra.mxu0 %v206
    %419 = vmatprep.subr.mxu0 %v215
    %420 = vmatpush1.msra.mxu0 %v214
    %421 = vmatprep.subr.mxu0 %v223
    %422 = vmatpush1.msra.mxu0 %v222
    %423 = vmatprep.subr.mxu0 %v231
    %424 = vmatpush1.msra.mxu0 %v230
    %425 = vmatprep.subr.mxu0 %v239
    %426 = vmatpush1.msra.mxu0 %v238
    %427 = vmatprep.subr.mxu0 %v247
    %428 = vmatpush1.msra.mxu0 %v246
    %429 = vmatprep.subr.mxu0 %v255
    %430 = vmatpush1.msra.mxu0 %v254
    %431 = vmatprep.subr.mxu0 %v263
    %432 = vmatpush1.msra.mxu0 %v262
    %433 = vmatprep.subr.mxu0 %v271
    %434 = vmatpush1.msra.mxu0 %v270
    %435 = vmatprep.subr.mxu0 %v279
    %436 = vmatpush1.msra.mxu0 %v278
    %437 = vmatprep.subr.mxu0 %v287
    %438 = vmatpush1.msra.mxu0 %v286
    %439 = vmatprep.subr.mxu0 %v295
    %440 = vmatpush1.msra.mxu0 %v294
    %441 = vmatprep.subr.mxu0 %v303
    %442 = vmatpush1.msra.mxu0 %v302
    %443 = vmatprep.mubr.f32.mxu0 %v51
    %444 = vmatmul.mubr.f32.gmra.mrb[0].mxu0 %v50
    %v445 = vpop.f32.mrb[0].mxu0
    %v446 = vadd.f32 0.0, %v445
    %v447 = vpop.f32.mrb[0].mxu0
    %v448 = vadd.f32 0.0, %v447
    %449 = vdwg.mxu0
    %450 = vmatprep.subr.mxu0 %v57
    %451 = vmatpush1.msra.mxu0 %v56
    %452 = vmatprep.subr.mxu0 %v65
    %453 = vmatpush1.msra.mxu0 %v64
    %454 = vmatprep.subr.mxu0 %v73
    %455 = vmatpush1.msra.mxu0 %v72
    %456 = vmatprep.subr.mxu0 %v81
    %457 = vmatpush1.msra.mxu0 %v80
    %458 = vmatprep.subr.mxu0 %v89
    %459 = vmatpush1.msra.mxu0 %v88
    %460 = vmatprep.subr.mxu0 %v97
    %461 = vmatpush1.msra.mxu0 %v96
    %462 = vmatprep.subr.mxu0 %v105
    %463 = vmatpush1.msra.mxu0 %v104
    %464 = vmatprep.subr.mxu0 %v113
    %465 = vmatpush1.msra.mxu0 %v112
    %466 = vmatprep.subr.mxu0 %v121
    %467 = vmatpush1.msra.mxu0 %v120
    %468 = vmatprep.subr.mxu0 %v129
    %469 = vmatpush1.msra.mxu0 %v128
    %470 = vmatprep.subr.mxu0 %v137
    %471 = vmatpush1.msra.mxu0 %v136
    %472 = vmatprep.subr.mxu0 %v145
    %473 = vmatpush1.msra.mxu0 %v144
    %474 = vmatprep.subr.mxu0 %v153
    %475 = vmatpush1.msra.mxu0 %v152
    %476 = vmatprep.subr.mxu0 %v161
    %477 = vmatpush1.msra.mxu0 %v160
    %478 = vmatprep.subr.mxu0 %v169
    %479 = vmatpush1.msra.mxu0 %v168
    %480 = vmatprep.subr.mxu0 %v177
    %481 = vmatpush1.msra.mxu0 %v176
    %482 = vmatprep.subr.mxu0 %v185
    %483 = vmatpush1.msra.mxu0 %v184
    %484 = vmatprep.subr.mxu0 %v193
    %485 = vmatpush1.msra.mxu0 %v192
    %486 = vmatprep.subr.mxu0 %v201
    %487 = vmatpush1.msra.mxu0 %v200
    %488 = vmatprep.subr.mxu0 %v209
    %489 = vmatpush1.msra.mxu0 %v208
    %490 = vmatprep.subr.mxu0 %v217
    %491 = vmatpush1.msra.mxu0 %v216
    %492 = vmatprep.subr.mxu0 %v225
    %493 = vmatpush1.msra.mxu0 %v224
    %494 = vmatprep.subr.mxu0 %v233
    %495 = vmatpush1.msra.mxu0 %v232
    %496 = vmatprep.subr.mxu0 %v241
    %497 = vmatpush1.msra.mxu0 %v240
    %498 = vmatprep.subr.mxu0 %v249
    %499 = vmatpush1.msra.mxu0 %v248
    %500 = vmatprep.subr.mxu0 %v257
    %501 = vmatpush1.msra.mxu0 %v256
    %502 = vmatprep.subr.mxu0 %v265
    %503 = vmatpush1.msra.mxu0 %v264
    %504 = vmatprep.subr.mxu0 %v273
    %505 = vmatpush1.msra.mxu0 %v272
    %506 = vmatprep.subr.mxu0 %v281
    %507 = vmatpush1.msra.mxu0 %v280
    %508 = vmatprep.subr.mxu0 %v289
    %509 = vmatpush1.msra.mxu0 %v288
    %510 = vmatprep.subr.mxu0 %v297
    %511 = vmatpush1.msra.mxu0 %v296
    %512 = vmatprep.subr.mxu0 %v305
    %513 = vmatpush1.msra.mxu0 %v304
    %514 = vmatprep.mubr.f32.mxu0 %v51
    %515 = vmatmul.mubr.f32.gmra.mrb[0].mxu0 %v50
    %v516 = vpop.f32.mrb[0].mxu0
    %v517 = vadd.f32 0.0, %v516
    %v518 = vpop.f32.mrb[0].mxu0
    %v519 = vadd.f32 0.0, %v518
    %520 = vdwg.mxu0
    %521 = vmatprep.subr.mxu0 %v59
    %522 = vmatpush1.msra.mxu0 %v58
    %523 = vmatprep.subr.mxu0 %v67
    %524 = vmatpush1.msra.mxu0 %v66
    %525 = vmatprep.subr.mxu0 %v75
    %526 = vmatpush1.msra.mxu0 %v74
    %527 = vmatprep.subr.mxu0 %v83
    %528 = vmatpush1.msra.mxu0 %v82
    %529 = vmatprep.subr.mxu0 %v91
    %530 = vmatpush1.msra.mxu0 %v90
    %531 = vmatprep.subr.mxu0 %v99
    %532 = vmatpush1.msra.mxu0 %v98
    %533 = vmatprep.subr.mxu0 %v107
    %534 = vmatpush1.msra.mxu0 %v106
    %535 = vmatprep.subr.mxu0 %v115
    %536 = vmatpush1.msra.mxu0 %v114
    %537 = vmatprep.subr.mxu0 %v123
    %538 = vmatpush1.msra.mxu0 %v122
    %539 = vmatprep.subr.mxu0 %v131
    %540 = vmatpush1.msra.mxu0 %v130
    %541 = vmatprep.subr.mxu0 %v139
    %542 = vmatpush1.msra.mxu0 %v138
    %543 = vmatprep.subr.mxu0 %v147
    %544 = vmatpush1.msra.mxu0 %v146
    %545 = vmatprep.subr.mxu0 %v155
    %546 = vmatpush1.msra.mxu0 %v154
    %547 = vmatprep.subr.mxu0 %v163
    %548 = vmatpush1.msra.mxu0 %v162
    %549 = vmatprep.subr.mxu0 %v171
    %550 = vmatpush1.msra.mxu0 %v170
    %551 = vmatprep.subr.mxu0 %v179
    %552 = vmatpush1.msra.mxu0 %v178
    %553 = vmatprep.subr.mxu0 %v187
    %554 = vmatpush1.msra.mxu0 %v186
    %555 = vmatprep.subr.mxu0 %v195
    %556 = vmatpush1.msra.mxu0 %v194
    %557 = vmatprep.subr.mxu0 %v203
    %558 = vmatpush1.msra.mxu0 %v202
    %559 = vmatprep.subr.mxu0 %v211
    %560 = vmatpush1.msra.mxu0 %v210
    %561 = vmatprep.subr.mxu0 %v219
    %562 = vmatpush1.msra.mxu0 %v218
    %563 = vmatprep.subr.mxu0 %v227
    %564 = vmatpush1.msra.mxu0 %v226
    %565 = vmatprep.subr.mxu0 %v235
    %566 = vmatpush1.msra.mxu0 %v234
    %567 = vmatprep.subr.mxu0 %v243
    %568 = vmatpush1.msra.mxu0 %v242
    %569 = vmatprep.subr.mxu0 %v251
    %570 = vmatpush1.msra.mxu0 %v250
    %571 = vmatprep.subr.mxu0 %v259
    %572 = vmatpush1.msra.mxu0 %v258
    %573 = vmatprep.subr.mxu0 %v267
    %574 = vmatpush1.msra.mxu0 %v266
    %575 = vmatprep.subr.mxu0 %v275
    %576 = vmatpush1.msra.mxu0 %v274
    %577 = vmatprep.subr.mxu0 %v283
    %578 = vmatpush1.msra.mxu0 %v282
    %579 = vmatprep.subr.mxu0 %v291
    %580 = vmatpush1.msra.mxu0 %v290
    %581 = vmatprep.subr.mxu0 %v299
    %582 = vmatpush1.msra.mxu0 %v298
    %583 = vmatprep.subr.mxu0 %v307
    %584 = vmatpush1.msra.mxu0 %v306
    %585 = vmatprep.mubr.f32.mxu0 %v51
    %586 = vmatmul.mubr.f32.gmra.mrb[0].mxu0 %v50
    %v587 = vpop.f32.mrb[0].mxu0
    %v588 = vadd.f32 0.0, %v587
    %v589 = vpop.f32.mrb[0].mxu0
    %v590 = vadd.f32 0.0, %v589
    %591 = vdwg.mxu0
    %v592 = vld [vmem:[%s4] sm:$0xff]
    %v593 = vld [vmem:[%s6] sm:$0xff]
    %v594 = vld [vmem:[%s7] sm:$0xff]
    %vm595 = vcmask 64512
    %v597 = vsel %vm595, %v592, 0
    %599 = vmatprep.subr.mxu0 %v377
    %600 = vmatpush1.msra.mxu0 %v375
    %601 = vmatprep.subr.mxu0 0.0
    %602 = vmatpush1.msra.mxu0 0.0
    %603 = vmatprep.subr.mxu0 0.0
    %604 = vmatpush1.msra.mxu0 0.0
    %605 = vmatprep.subr.mxu0 0.0
    %606 = vmatpush1.msra.mxu0 0.0
    %607 = vmatprep.subr.mxu0 0.0
    %608 = vmatpush1.msra.mxu0 0.0
    %609 = vmatprep.subr.mxu0 0.0
    %610 = vmatpush1.msra.mxu0 0.0
    %611 = vmatprep.subr.mxu0 0.0
    %612 = vmatpush1.msra.mxu0 0.0
    %613 = vmatprep.subr.mxu0 0.0
    %614 = vmatpush1.msra.mxu0 0.0
    %615 = vmatprep.subr.mxu0 0.0
    %616 = vmatpush1.msra.mxu0 0.0
    %617 = vmatprep.subr.mxu0 0.0
    %618 = vmatpush1.msra.mxu0 0.0
    %619 = vmatprep.subr.mxu0 0.0
    %620 = vmatpush1.msra.mxu0 0.0
    %621 = vmatprep.subr.mxu0 0.0
    %622 = vmatpush1.msra.mxu0 0.0
    %623 = vmatprep.subr.mxu0 0.0
    %624 = vmatpush1.msra.mxu0 0.0
    %625 = vmatprep.subr.mxu0 0.0
    %626 = vmatpush1.msra.mxu0 0.0
    %627 = vmatprep.subr.mxu0 0.0
    %628 = vmatpush1.msra.mxu0 0.0
    %629 = vmatprep.subr.mxu0 0.0
    %630 = vmatpush1.msra.mxu0 0.0
    %631 = vmatprep.subr.mxu0 0.0
    %632 = vmatpush1.msra.mxu0 0.0
    %633 = vmatprep.subr.mxu0 0.0
    %634 = vmatpush1.msra.mxu0 0.0
    %635 = vmatprep.subr.mxu0 0.0
    %636 = vmatpush1.msra.mxu0 0.0
    %637 = vmatprep.subr.mxu0 0.0
    %638 = vmatpush1.msra.mxu0 0.0
    %639 = vmatprep.subr.mxu0 0.0
    %640 = vmatpush1.msra.mxu0 0.0
    %641 = vmatprep.subr.mxu0 0.0
    %642 = vmatpush1.msra.mxu0 0.0
    %643 = vmatprep.subr.mxu0 0.0
    %644 = vmatpush1.msra.mxu0 0.0
    %645 = vmatprep.subr.mxu0 0.0
    %646 = vmatpush1.msra.mxu0 0.0
    %647 = vmatprep.subr.mxu0 0.0
    %648 = vmatpush1.msra.mxu0 0.0
    %649 = vmatprep.subr.mxu0 0.0
    %650 = vmatpush1.msra.mxu0 0.0
    %651 = vmatprep.subr.mxu0 0.0
    %652 = vmatpush1.msra.mxu0 0.0
    %653 = vmatprep.subr.mxu0 0.0
    %654 = vmatpush1.msra.mxu0 0.0
    %655 = vmatprep.subr.mxu0 0.0
    %656 = vmatpush1.msra.mxu0 0.0
    %657 = vmatprep.subr.mxu0 0.0
    %658 = vmatpush1.msra.mxu0 0.0
    %659 = vmatprep.subr.mxu0 0.0
    %660 = vmatpush1.msra.mxu0 0.0
    %661 = vmatprep.subr.mxu0 0.0
    %662 = vmatpush1.msra.mxu0 0.0
    %663 = vmatprep.mubr.f32.mxu0 0.0
    %664 = vmatmul.mubr.f32.gmra.mrb[0].mxu0 %v597
    %v665 = vpop.f32.mrb[0].mxu0
    %v666 = vadd.f32 0.0, %v665
    %v667 = vpop.f32.mrb[0].mxu0
    %v668 = vadd.f32 0.0, %v667
    %669 = vdwg.mxu0
    %670 = vmatprep.subr.mxu0 %v448
    %671 = vmatpush1.msra.mxu0 %v446
    %672 = vmatprep.subr.mxu0 0.0
    %673 = vmatpush1.msra.mxu0 0.0
    %674 = vmatprep.subr.mxu0 0.0
    %675 = vmatpush1.msra.mxu0 0.0
    %676 = vmatprep.subr.mxu0 0.0
    %677 = vmatpush1.msra.mxu0 0.0
    %678 = vmatprep.subr.mxu0 0.0
    %679 = vmatpush1.msra.mxu0 0.0
    %680 = vmatprep.subr.mxu0 0.0
    %681 = vmatpush1.msra.mxu0 0.0
    %682 = vmatprep.subr.mxu0 0.0
    %683 = vmatpush1.msra.mxu0 0.0
    %684 = vmatprep.subr.mxu0 0.0
    %685 = vmatpush1.msra.mxu0 0.0
    %686 = vmatprep.subr.mxu0 0.0
    %687 = vmatpush1.msra.mxu0 0.0
    %688 = vmatprep.subr.mxu0 0.0
    %689 = vmatpush1.msra.mxu0 0.0
    %690 = vmatprep.subr.mxu0 0.0
    %691 = vmatpush1.msra.mxu0 0.0
    %692 = vmatprep.subr.mxu0 0.0
    %693 = vmatpush1.msra.mxu0 0.0
    %694 = vmatprep.subr.mxu0 0.0
    %695 = vmatpush1.msra.mxu0 0.0
    %696 = vmatprep.subr.mxu0 0.0
    %697 = vmatpush1.msra.mxu0 0.0
    %698 = vmatprep.subr.mxu0 0.0
    %699 = vmatpush1.msra.mxu0 0.0
    %700 = vmatprep.subr.mxu0 0.0
    %701 = vmatpush1.msra.mxu0 0.0
    %702 = vmatprep.subr.mxu0 0.0
    %703 = vmatpush1.msra.mxu0 0.0
    %704 = vmatprep.subr.mxu0 0.0
    %705 = vmatpush1.msra.mxu0 0.0
    %706 = vmatprep.subr.mxu0 0.0
    %707 = vmatpush1.msra.mxu0 0.0
    %708 = vmatprep.subr.mxu0 0.0
    %709 = vmatpush1.msra.mxu0 0.0
    %710 = vmatprep.subr.mxu0 0.0
    %711 = vmatpush1.msra.mxu0 0.0
    %712 = vmatprep.subr.mxu0 0.0
    %713 = vmatpush1.msra.mxu0 0.0
    %714 = vmatprep.subr.mxu0 0.0
    %715 = vmatpush1.msra.mxu0 0.0
    %716 = vmatprep.subr.mxu0 0.0
    %717 = vmatpush1.msra.mxu0 0.0
    %718 = vmatprep.subr.mxu0 0.0
    %719 = vmatpush1.msra.mxu0 0.0
    %720 = vmatprep.subr.mxu0 0.0
    %721 = vmatpush1.msra.mxu0 0.0
    %722 = vmatprep.subr.mxu0 0.0
    %723 = vmatpush1.msra.mxu0 0.0
    %724 = vmatprep.subr.mxu0 0.0
    %725 = vmatpush1.msra.mxu0 0.0
    %726 = vmatprep.subr.mxu0 0.0
    %727 = vmatpush1.msra.mxu0 0.0
    %728 = vmatprep.subr.mxu0 0.0
    %729 = vmatpush1.msra.mxu0 0.0
    %730 = vmatprep.subr.mxu0 0.0
    %731 = vmatpush1.msra.mxu0 0.0
    %732 = vmatprep.subr.mxu0 0.0
    %733 = vmatpush1.msra.mxu0 0.0
    %734 = vmatprep.mubr.f32.mxu0 0.0
    %735 = vmatmul.mubr.f32.gmra.mrb[0].mxu0 %v597
    %v736 = vpop.f32.mrb[0].mxu0
    %v737 = vadd.f32 0.0, %v736
    %v738 = vpop.f32.mrb[0].mxu0
    %v739 = vadd.f32 0.0, %v738
    %740 = vdwg.mxu0
    %741 = vmatprep.subr.mxu0 %v519
    %742 = vmatpush1.msra.mxu0 %v517
    %743 = vmatprep.subr.mxu0 0.0
    %744 = vmatpush1.msra.mxu0 0.0
    %745 = vmatprep.subr.mxu0 0.0
    %746 = vmatpush1.msra.mxu0 0.0
    %747 = vmatprep.subr.mxu0 0.0
    %748 = vmatpush1.msra.mxu0 0.0
    %749 = vmatprep.subr.mxu0 0.0
    %750 = vmatpush1.msra.mxu0 0.0
    %751 = vmatprep.subr.mxu0 0.0
    %752 = vmatpush1.msra.mxu0 0.0
    %753 = vmatprep.subr.mxu0 0.0
    %754 = vmatpush1.msra.mxu0 0.0
    %755 = vmatprep.subr.mxu0 0.0
    %756 = vmatpush1.msra.mxu0 0.0
    %757 = vmatprep.subr.mxu0 0.0
    %758 = vmatpush1.msra.mxu0 0.0
    %759 = vmatprep.subr.mxu0 0.0
    %760 = vmatpush1.msra.mxu0 0.0
    %761 = vmatprep.subr.mxu0 0.0
    %762 = vmatpush1.msra.mxu0 0.0
    %763 = vmatprep.subr.mxu0 0.0
    %764 = vmatpush1.msra.mxu0 0.0
    %765 = vmatprep.subr.mxu0 0.0
    %766 = vmatpush1.msra.mxu0 0.0
    %767 = vmatprep.subr.mxu0 0.0
    %768 = vmatpush1.msra.mxu0 0.0
    %769 = vmatprep.subr.mxu0 0.0
    %770 = vmatpush1.msra.mxu0 0.0
    %771 = vmatprep.subr.mxu0 0.0
    %772 = vmatpush1.msra.mxu0 0.0
    %773 = vmatprep.subr.mxu0 0.0
    %774 = vmatpush1.msra.mxu0 0.0
    %775 = vmatprep.subr.mxu0 0.0
    %776 = vmatpush1.msra.mxu0 0.0
    %777 = vmatprep.subr.mxu0 0.0
    %778 = vmatpush1.msra.mxu0 0.0
    %779 = vmatprep.subr.mxu0 0.0
    %780 = vmatpush1.msra.mxu0 0.0
    %781 = vmatprep.subr.mxu0 0.0
    %782 = vmatpush1.msra.mxu0 0.0
    %783 = vmatprep.subr.mxu0 0.0
    %784 = vmatpush1.msra.mxu0 0.0
    %785 = vmatprep.subr.mxu0 0.0
    %786 = vmatpush1.msra.mxu0 0.0
    %787 = vmatprep.subr.mxu0 0.0
    %788 = vmatpush1.msra.mxu0 0.0
    %789 = vmatprep.subr.mxu0 0.0
    %790 = vmatpush1.msra.mxu0 0.0
    %791 = vmatprep.subr.mxu0 0.0
    %792 = vmatpush1.msra.mxu0 0.0
    %793 = vmatprep.subr.mxu0 0.0
    %794 = vmatpush1.msra.mxu0 0.0
    %795 = vmatprep.subr.mxu0 0.0
    %796 = vmatpush1.msra.mxu0 0.0
    %797 = vmatprep.subr.mxu0 0.0
    %798 = vmatpush1.msra.mxu0 0.0
    %799 = vmatprep.subr.mxu0 0.0
    %800 = vmatpush1.msra.mxu0 0.0
    %801 = vmatprep.subr.mxu0 0.0
    %802 = vmatpush1.msra.mxu0 0.0
    %803 = vmatprep.subr.mxu0 0.0
    %804 = vmatpush1.msra.mxu0 0.0
    %805 = vmatprep.mubr.f32.mxu0 0.0
    %806 = vmatmul.mubr.f32.gmra.mrb[0].mxu0 %v597
    %v807 = vpop.f32.mrb[0].mxu0
    %v808 = vadd.f32 0.0, %v807
    %v809 = vpop.f32.mrb[0].mxu0
    %v810 = vadd.f32 0.0, %v809
    %811 = vdwg.mxu0
    %812 = vmatprep.subr.mxu0 %v590
    %813 = vmatpush1.msra.mxu0 %v588
    %814 = vmatprep.subr.mxu0 0.0
    %815 = vmatpush1.msra.mxu0 0.0
    %816 = vmatprep.subr.mxu0 0.0
    %817 = vmatpush1.msra.mxu0 0.0
    %818 = vmatprep.subr.mxu0 0.0
    %819 = vmatpush1.msra.mxu0 0.0
    %820 = vmatprep.subr.mxu0 0.0
    %821 = vmatpush1.msra.mxu0 0.0
    %822 = vmatprep.subr.mxu0 0.0
    %823 = vmatpush1.msra.mxu0 0.0
    %824 = vmatprep.subr.mxu0 0.0
    %825 = vmatpush1.msra.mxu0 0.0
    %826 = vmatprep.subr.mxu0 0.0
    %827 = vmatpush1.msra.mxu0 0.0
    %828 = vmatprep.subr.mxu0 0.0
    %829 = vmatpush1.msra.mxu0 0.0
    %830 = vmatprep.subr.mxu0 0.0
    %831 = vmatpush1.msra.mxu0 0.0
    %832 = vmatprep.subr.mxu0 0.0
    %833 = vmatpush1.msra.mxu0 0.0
    %834 = vmatprep.subr.mxu0 0.0
    %835 = vmatpush1.msra.mxu0 0.0
    %836 = vmatprep.subr.mxu0 0.0
    %837 = vmatpush1.msra.mxu0 0.0
    %838 = vmatprep.subr.mxu0 0.0
    %839 = vmatpush1.msra.mxu0 0.0
    %840 = vmatprep.subr.mxu0 0.0
    %841 = vmatpush1.msra.mxu0 0.0
    %842 = vmatprep.subr.mxu0 0.0
    %843 = vmatpush1.msra.mxu0 0.0
    %844 = vmatprep.subr.mxu0 0.0
    %845 = vmatpush1.msra.mxu0 0.0
    %846 = vmatprep.subr.mxu0 0.0
    %847 = vmatpush1.msra.mxu0 0.0
    %848 = vmatprep.subr.mxu0 0.0
    %849 = vmatpush1.msra.mxu0 0.0
    %850 = vmatprep.subr.mxu0 0.0
    %851 = vmatpush1.msra.mxu0 0.0
    %852 = vmatprep.subr.mxu0 0.0
    %853 = vmatpush1.msra.mxu0 0.0
    %854 = vmatprep.subr.mxu0 0.0
    %855 = vmatpush1.msra.mxu0 0.0
    %856 = vmatprep.subr.mxu0 0.0
    %857 = vmatpush1.msra.mxu0 0.0
    %858 = vmatprep.subr.mxu0 0.0
    %859 = vmatpush1.msra.mxu0 0.0
    %860 = vmatprep.subr.mxu0 0.0
    %861 = vmatpush1.msra.mxu0 0.0
    %862 = vmatprep.subr.mxu0 0.0
    %863 = vmatpush1.msra.mxu0 0.0
    %864 = vmatprep.subr.mxu0 0.0
    %865 = vmatpush1.msra.mxu0 0.0
    %866 = vmatprep.subr.mxu0 0.0
    %867 = vmatpush1.msra.mxu0 0.0
    %868 = vmatprep.subr.mxu0 0.0
    %869 = vmatpush1.msra.mxu0 0.0
    %870 = vmatprep.subr.mxu0 0.0
    %871 = vmatpush1.msra.mxu0 0.0
    %872 = vmatprep.subr.mxu0 0.0
    %873 = vmatpush1.msra.mxu0 0.0
    %874 = vmatprep.subr.mxu0 0.0
    %875 = vmatpush1.msra.mxu0 0.0
    %876 = vmatprep.mubr.f32.mxu0 0.0
    %877 = vmatmul.mubr.f32.gmra.mrb[0].mxu0 %v597
    %v878 = vpop.f32.mrb[0].mxu0
    %v879 = vadd.f32 0.0, %v878
    %v880 = vpop.f32.mrb[0].mxu0
    %v881 = vadd.f32 0.0, %v880
    %882 = vdwg.mxu0
    %v883 = vadd.f32 %v666, %v668
    %v884 = vadd.f32 %v883, %v737
    %v885 = vadd.f32 %v884, %v739
    %v886 = vadd.f32 %v885, %v808
    %v887 = vadd.f32 %v886, %v810
    %v888 = vadd.f32 %v887, %v879
    %v889 = vadd.f32 %v888, %v881
    %890 = vadd.xlane.f32.xlu0 %v889
    %v891 = vpop.xlane.xlu0 %890
    %v892 = vsub.f32 %v375, %v891
    %v893 = vsub.f32 %v377, %v891
    %v894 = vsub.f32 %v446, %v891
    %v895 = vsub.f32 %v448, %v891
    %v896 = vsub.f32 %v517, %v891
    %v897 = vsub.f32 %v519, %v891
    %v898 = vsub.f32 %v588, %v891
    %v899 = vsub.f32 %v590, %v891
    %v900 = vmul.f32 %v892, %v892
    %v901 = vmul.f32 %v893, %v893
    %v902 = vmul.f32 %v894, %v894
    %v903 = vmul.f32 %v895, %v895
    %v904 = vmul.f32 %v896, %v896
    %v905 = vmul.f32 %v897, %v897
    %v906 = vmul.f32 %v898, %v898
    %v907 = vmul.f32 %v899, %v899
    %908 = vmatprep.subr.mxu0 %v901
    %909 = vmatpush1.msra.mxu0 %v900
    %910 = vmatprep.subr.mxu0 0.0
    %911 = vmatpush1.msra.mxu0 0.0
    %912 = vmatprep.subr.mxu0 0.0
    %913 = vmatpush1.msra.mxu0 0.0
    %914 = vmatprep.subr.mxu0 0.0
    %915 = vmatpush1.msra.mxu0 0.0
    %916 = vmatprep.subr.mxu0 0.0
    %917 = vmatpush1.msra.mxu0 0.0
    %918 = vmatprep.subr.mxu0 0.0
    %919 = vmatpush1.msra.mxu0 0.0
    %920 = vmatprep.subr.mxu0 0.0
    %921 = vmatpush1.msra.mxu0 0.0
    %922 = vmatprep.subr.mxu0 0.0
    %923 = vmatpush1.msra.mxu0 0.0
    %924 = vmatprep.subr.mxu0 0.0
    %925 = vmatpush1.msra.mxu0 0.0
    %926 = vmatprep.subr.mxu0 0.0
    %927 = vmatpush1.msra.mxu0 0.0
    %928 = vmatprep.subr.mxu0 0.0
    %929 = vmatpush1.msra.mxu0 0.0
    %930 = vmatprep.subr.mxu0 0.0
    %931 = vmatpush1.msra.mxu0 0.0
    %932 = vmatprep.subr.mxu0 0.0
    %933 = vmatpush1.msra.mxu0 0.0
    %934 = vmatprep.subr.mxu0 0.0
    %935 = vmatpush1.msra.mxu0 0.0
    %936 = vmatprep.subr.mxu0 0.0
    %937 = vmatpush1.msra.mxu0 0.0
    %938 = vmatprep.subr.mxu0 0.0
    %939 = vmatpush1.msra.mxu0 0.0
    %940 = vmatprep.subr.mxu0 0.0
    %941 = vmatpush1.msra.mxu0 0.0
    %942 = vmatprep.subr.mxu0 0.0
    %943 = vmatpush1.msra.mxu0 0.0
    %944 = vmatprep.subr.mxu0 0.0
    %945 = vmatpush1.msra.mxu0 0.0
    %946 = vmatprep.subr.mxu0 0.0
    %947 = vmatpush1.msra.mxu0 0.0
    %948 = vmatprep.subr.mxu0 0.0
    %949 = vmatpush1.msra.mxu0 0.0
    %950 = vmatprep.subr.mxu0 0.0
    %951 = vmatpush1.msra.mxu0 0.0
    %952 = vmatprep.subr.mxu0 0.0
    %953 = vmatpush1.msra.mxu0 0.0
    %954 = vmatprep.subr.mxu0 0.0
    %955 = vmatpush1.msra.mxu0 0.0
    %956 = vmatprep.subr.mxu0 0.0
    %957 = vmatpush1.msra.mxu0 0.0
    %958 = vmatprep.subr.mxu0 0.0
    %959 = vmatpush1.msra.mxu0 0.0
    %960 = vmatprep.subr.mxu0 0.0
    %961 = vmatpush1.msra.mxu0 0.0
    %962 = vmatprep.subr.mxu0 0.0
    %963 = vmatpush1.msra.mxu0 0.0
    %964 = vmatprep.subr.mxu0 0.0
    %965 = vmatpush1.msra.mxu0 0.0
    %966 = vmatprep.subr.mxu0 0.0
    %967 = vmatpush1.msra.mxu0 0.0
    %968 = vmatprep.subr.mxu0 0.0
    %969 = vmatpush1.msra.mxu0 0.0
    %970 = vmatprep.subr.mxu0 0.0
    %971 = vmatpush1.msra.mxu0 0.0
    %972 = vmatprep.mubr.f32.mxu0 0.0
    %973 = vmatmul.mubr.f32.gmra.mrb[0].mxu0 %v597
    %v974 = vpop.f32.mrb[0].mxu0
    %v975 = vadd.f32 0.0, %v974
    %v976 = vpop.f32.mrb[0].mxu0
    %v977 = vadd.f32 0.0, %v976
    %978 = vdwg.mxu0
    %979 = vmatprep.subr.mxu0 %v903
    %980 = vmatpush1.msra.mxu0 %v902
    %981 = vmatprep.subr.mxu0 0.0
    %982 = vmatpush1.msra.mxu0 0.0
    %983 = vmatprep.subr.mxu0 0.0
    %984 = vmatpush1.msra.mxu0 0.0
    %985 = vmatprep.subr.mxu0 0.0
    %986 = vmatpush1.msra.mxu0 0.0
    %987 = vmatprep.subr.mxu0 0.0
    %988 = vmatpush1.msra.mxu0 0.0
    %989 = vmatprep.subr.mxu0 0.0
    %990 = vmatpush1.msra.mxu0 0.0
    %991 = vmatprep.subr.mxu0 0.0
    %992 = vmatpush1.msra.mxu0 0.0
    %993 = vmatprep.subr.mxu0 0.0
    %994 = vmatpush1.msra.mxu0 0.0
    %995 = vmatprep.subr.mxu0 0.0
    %996 = vmatpush1.msra.mxu0 0.0
    %997 = vmatprep.subr.mxu0 0.0
    %998 = vmatpush1.msra.mxu0 0.0
    %999 = vmatprep.subr.mxu0 0.0
    %1000 = vmatpush1.msra.mxu0 0.0
    %1001 = vmatprep.subr.mxu0 0.0
    %1002 = vmatpush1.msra.mxu0 0.0
    %1003 = vmatprep.subr.mxu0 0.0
    %1004 = vmatpush1.msra.mxu0 0.0
    %1005 = vmatprep.subr.mxu0 0.0
    %1006 = vmatpush1.msra.mxu0 0.0
    %1007 = vmatprep.subr.mxu0 0.0
    %1008 = vmatpush1.msra.mxu0 0.0
    %1009 = vmatprep.subr.mxu0 0.0
    %1010 = vmatpush1.msra.mxu0 0.0
    %1011 = vmatprep.subr.mxu0 0.0
    %1012 = vmatpush1.msra.mxu0 0.0
    %1013 = vmatprep.subr.mxu0 0.0
    %1014 = vmatpush1.msra.mxu0 0.0
    %1015 = vmatprep.subr.mxu0 0.0
    %1016 = vmatpush1.msra.mxu0 0.0
    %1017 = vmatprep.subr.mxu0 0.0
    %1018 = vmatpush1.msra.mxu0 0.0
    %1019 = vmatprep.subr.mxu0 0.0
    %1020 = vmatpush1.msra.mxu0 0.0
    %1021 = vmatprep.subr.mxu0 0.0
    %1022 = vmatpush1.msra.mxu0 0.0
    %1023 = vmatprep.subr.mxu0 0.0
    %1024 = vmatpush1.msra.mxu0 0.0
    %1025 = vmatprep.subr.mxu0 0.0
    %1026 = vmatpush1.msra.mxu0 0.0
    %1027 = vmatprep.subr.mxu0 0.0
    %1028 = vmatpush1.msra.mxu0 0.0
    %1029 = vmatprep.subr.mxu0 0.0
    %1030 = vmatpush1.msra.mxu0 0.0
    %1031 = vmatprep.subr.mxu0 0.0
    %1032 = vmatpush1.msra.mxu0 0.0
    %1033 = vmatprep.subr.mxu0 0.0
    %1034 = vmatpush1.msra.mxu0 0.0
    %1035 = vmatprep.subr.mxu0 0.0
    %1036 = vmatpush1.msra.mxu0 0.0
    %1037 = vmatprep.subr.mxu0 0.0
    %1038 = vmatpush1.msra.mxu0 0.0
    %1039 = vmatprep.subr.mxu0 0.0
    %1040 = vmatpush1.msra.mxu0 0.0
    %1041 = vmatprep.subr.mxu0 0.0
    %1042 = vmatpush1.msra.mxu0 0.0
    %1043 = vmatprep.mubr.f32.mxu0 0.0
    %1044 = vmatmul.mubr.f32.gmra.mrb[0].mxu0 %v597
    %v1045 = vpop.f32.mrb[0].mxu0
    %v1046 = vadd.f32 0.0, %v1045
    %v1047 = vpop.f32.mrb[0].mxu0
    %v1048 = vadd.f32 0.0, %v1047
    %1049 = vdwg.mxu0
    %1050 = vmatprep.subr.mxu0 %v905
    %1051 = vmatpush1.msra.mxu0 %v904
    %1052 = vmatprep.subr.mxu0 0.0
    %1053 = vmatpush1.msra.mxu0 0.0
    %1054 = vmatprep.subr.mxu0 0.0
    %1055 = vmatpush1.msra.mxu0 0.0
    %1056 = vmatprep.subr.mxu0 0.0
    %1057 = vmatpush1.msra.mxu0 0.0
    %1058 = vmatprep.subr.mxu0 0.0
    %1059 = vmatpush1.msra.mxu0 0.0
    %1060 = vmatprep.subr.mxu0 0.0
    %1061 = vmatpush1.msra.mxu0 0.0
    %1062 = vmatprep.subr.mxu0 0.0
    %1063 = vmatpush1.msra.mxu0 0.0
    %1064 = vmatprep.subr.mxu0 0.0
    %1065 = vmatpush1.msra.mxu0 0.0
    %1066 = vmatprep.subr.mxu0 0.0
    %1067 = vmatpush1.msra.mxu0 0.0
    %1068 = vmatprep.subr.mxu0 0.0
    %1069 = vmatpush1.msra.mxu0 0.0
    %1070 = vmatprep.subr.mxu0 0.0
    %1071 = vmatpush1.msra.mxu0 0.0
    %1072 = vmatprep.subr.mxu0 0.0
    %1073 = vmatpush1.msra.mxu0 0.0
    %1074 = vmatprep.subr.mxu0 0.0
    %1075 = vmatpush1.msra.mxu0 0.0
    %1076 = vmatprep.subr.mxu0 0.0
    %1077 = vmatpush1.msra.mxu0 0.0
    %1078 = vmatprep.subr.mxu0 0.0
    %1079 = vmatpush1.msra.mxu0 0.0
    %1080 = vmatprep.subr.mxu0 0.0
    %1081 = vmatpush1.msra.mxu0 0.0
    %1082 = vmatprep.subr.mxu0 0.0
    %1083 = vmatpush1.msra.mxu0 0.0
    %1084 = vmatprep.subr.mxu0 0.0
    %1085 = vmatpush1.msra.mxu0 0.0
    %1086 = vmatprep.subr.mxu0 0.0
    %1087 = vmatpush1.msra.mxu0 0.0
    %1088 = vmatprep.subr.mxu0 0.0
    %1089 = vmatpush1.msra.mxu0 0.0
    %1090 = vmatprep.subr.mxu0 0.0
    %1091 = vmatpush1.msra.mxu0 0.0
    %1092 = vmatprep.subr.mxu0 0.0
    %1093 = vmatpush1.msra.mxu0 0.0
    %1094 = vmatprep.subr.mxu0 0.0
    %1095 = vmatpush1.msra.mxu0 0.0
    %1096 = vmatprep.subr.mxu0 0.0
    %1097 = vmatpush1.msra.mxu0 0.0
    %1098 = vmatprep.subr.mxu0 0.0
    %1099 = vmatpush1.msra.mxu0 0.0
    %1100 = vmatprep.subr.mxu0 0.0
    %1101 = vmatpush1.msra.mxu0 0.0
    %1102 = vmatprep.subr.mxu0 0.0
    %1103 = vmatpush1.msra.mxu0 0.0
    %1104 = vmatprep.subr.mxu0 0.0
    %1105 = vmatpush1.msra.mxu0 0.0
    %1106 = vmatprep.subr.mxu0 0.0
    %1107 = vmatpush1.msra.mxu0 0.0
    %1108 = vmatprep.subr.mxu0 0.0
    %1109 = vmatpush1.msra.mxu0 0.0
    %1110 = vmatprep.subr.mxu0 0.0
    %1111 = vmatpush1.msra.mxu0 0.0
    %1112 = vmatprep.subr.mxu0 0.0
    %1113 = vmatpush1.msra.mxu0 0.0
    %1114 = vmatprep.mubr.f32.mxu0 0.0
    %1115 = vmatmul.mubr.f32.gmra.mrb[0].mxu0 %v597
    %v1116 = vpop.f32.mrb[0].mxu0
    %v1117 = vadd.f32 0.0, %v1116
    %v1118 = vpop.f32.mrb[0].mxu0
    %v1119 = vadd.f32 0.0, %v1118
    %1120 = vdwg.mxu0
    %1121 = vmatprep.subr.mxu0 %v907
    %1122 = vmatpush1.msra.mxu0 %v906
    %1123 = vmatprep.subr.mxu0 0.0
    %1124 = vmatpush1.msra.mxu0 0.0
    %1125 = vmatprep.subr.mxu0 0.0
    %1126 = vmatpush1.msra.mxu0 0.0
    %1127 = vmatprep.subr.mxu0 0.0
    %1128 = vmatpush1.msra.mxu0 0.0
    %1129 = vmatprep.subr.mxu0 0.0
    %1130 = vmatpush1.msra.mxu0 0.0
    %1131 = vmatprep.subr.mxu0 0.0
    %1132 = vmatpush1.msra.mxu0 0.0
    %1133 = vmatprep.subr.mxu0 0.0
    %1134 = vmatpush1.msra.mxu0 0.0
    %1135 = vmatprep.subr.mxu0 0.0
    %1136 = vmatpush1.msra.mxu0 0.0
    %1137 = vmatprep.subr.mxu0 0.0
    %1138 = vmatpush1.msra.mxu0 0.0
    %1139 = vmatprep.subr.mxu0 0.0
    %1140 = vmatpush1.msra.mxu0 0.0
    %1141 = vmatprep.subr.mxu0 0.0
    %1142 = vmatpush1.msra.mxu0 0.0
    %1143 = vmatprep.subr.mxu0 0.0
    %1144 = vmatpush1.msra.mxu0 0.0
    %1145 = vmatprep.subr.mxu0 0.0
    %1146 = vmatpush1.msra.mxu0 0.0
    %1147 = vmatprep.subr.mxu0 0.0
    %1148 = vmatpush1.msra.mxu0 0.0
    %1149 = vmatprep.subr.mxu0 0.0
    %1150 = vmatpush1.msra.mxu0 0.0
    %1151 = vmatprep.subr.mxu0 0.0
    %1152 = vmatpush1.msra.mxu0 0.0
    %1153 = vmatprep.subr.mxu0 0.0
    %1154 = vmatpush1.msra.mxu0 0.0
    %1155 = vmatprep.subr.mxu0 0.0
    %1156 = vmatpush1.msra.mxu0 0.0
    %1157 = vmatprep.subr.mxu0 0.0
    %1158 = vmatpush1.msra.mxu0 0.0
    %1159 = vmatprep.subr.mxu0 0.0
    %1160 = vmatpush1.msra.mxu0 0.0
    %1161 = vmatprep.subr.mxu0 0.0
    %1162 = vmatpush1.msra.mxu0 0.0
    %1163 = vmatprep.subr.mxu0 0.0
    %1164 = vmatpush1.msra.mxu0 0.0
    %1165 = vmatprep.subr.mxu0 0.0
    %1166 = vmatpush1.msra.mxu0 0.0
    %1167 = vmatprep.subr.mxu0 0.0
    %1168 = vmatpush1.msra.mxu0 0.0
    %1169 = vmatprep.subr.mxu0 0.0
    %1170 = vmatpush1.msra.mxu0 0.0
    %1171 = vmatprep.subr.mxu0 0.0
    %1172 = vmatpush1.msra.mxu0 0.0
    %1173 = vmatprep.subr.mxu0 0.0
    %1174 = vmatpush1.msra.mxu0 0.0
    %1175 = vmatprep.subr.mxu0 0.0
    %1176 = vmatpush1.msra.mxu0 0.0
    %1177 = vmatprep.subr.mxu0 0.0
    %1178 = vmatpush1.msra.mxu0 0.0
    %1179 = vmatprep.subr.mxu0 0.0
    %1180 = vmatpush1.msra.mxu0 0.0
    %1181 = vmatprep.subr.mxu0 0.0
    %1182 = vmatpush1.msra.mxu0 0.0
    %1183 = vmatprep.subr.mxu0 0.0
    %1184 = vmatpush1.msra.mxu0 0.0
    %1185 = vmatprep.mubr.f32.mxu0 0.0
    %1186 = vmatmul.mubr.f32.gmra.mrb[0].mxu0 %v597
    %v1187 = vpop.f32.mrb[0].mxu0
    %v1188 = vadd.f32 0.0, %v1187
    %v1189 = vpop.f32.mrb[0].mxu0
    %v1190 = vadd.f32 0.0, %v1189
    %1191 = vdwg.mxu0
    %v1192 = vadd.f32 %v975, %v977
    %v1193 = vadd.f32 %v1192, %v1046
    %v1194 = vadd.f32 %v1193, %v1048
    %v1195 = vadd.f32 %v1194, %v1117
    %v1196 = vadd.f32 %v1195, %v1119
    %v1197 = vadd.f32 %v1196, %v1188
    %v1198 = vadd.f32 %v1197, %v1190
    %1199 = vadd.xlane.f32.xlu0 %v1198
    %v1200 = vpop.xlane.xlu0 %1199
    %v1201 = vadd.f32 %v1200, 1e-05
    %v1202 = vrsqrt.pop %v1201
    %v1203 = vmul.f32 %v593, %v1202
    %1205 = vset.pattern.permute.xlu0 0
    %1206 = vperm.xlu0 %1205, %v1203
    %v1207 = vpop.permute.xlu0 %1206
    %v1209 = vmul.f32 %v892, %v1207
    %v1210 = vmul.f32 %v893, %v1207
    %v1211 = vmul.f32 %v894, %v1207
    %v1212 = vmul.f32 %v895, %v1207
    %v1213 = vmul.f32 %v896, %v1207
    %v1214 = vmul.f32 %v897, %v1207
    %v1215 = vmul.f32 %v898, %v1207
    %v1216 = vmul.f32 %v899, %v1207
    %1218 = vset.pattern.permute.xlu0 0
    %1219 = vperm.xlu0 %1218, %v594
    %v1220 = vpop.permute.xlu0 %1219
    %v1222 = vadd.f32 %v1209, %v1220
    %v1223 = vadd.f32 %v1210, %v1220
    %v1224 = vadd.f32 %v1211, %v1220
    %v1225 = vadd.f32 %v1212, %v1220
    %v1226 = vadd.f32 %v1213, %v1220
    %v1227 = vadd.f32 %v1214, %v1220
    %v1228 = vadd.f32 %v1215, %v1220
    %v1229 = vadd.f32 %v1216, %v1220
    %v1230 = vld [vmem:[%s3] ss:$4 sm:$0xff]
    %s1231 = scalar_lea.vmem %s3, 1
    %v1232 = vld [vmem:[%s1231] ss:$4 sm:$0xff]
    %s1233 = scalar_lea.vmem %s3, 2
    %v1234 = vld [vmem:[%s1233] ss:$4 sm:$0xff]
    %1235 = vrot.lane.b32.xlu0 %v1222, 127
    %v1236 = vpop.permute.xlu0 %1235
    %1237 = vrot.lane.b32.xlu0 %v1223, 127
    %v1238 = vpop.permute.xlu0 %1237
    %1239 = vrot.lane.b32.xlu0 %v1224, 127
    %v1240 = vpop.permute.xlu0 %1239
    %1241 = vrot.lane.b32.xlu0 %v1225, 127
    %v1242 = vpop.permute.xlu0 %1241
    %1243 = vrot.lane.b32.xlu0 %v1226, 127
    %v1244 = vpop.permute.xlu0 %1243
    %1245 = vrot.lane.b32.xlu0 %v1227, 127
    %v1246 = vpop.permute.xlu0 %1245
    %1247 = vrot.lane.b32.xlu0 %v1228, 127
    %v1248 = vpop.permute.xlu0 %1247
    %1249 = vrot.lane.b32.xlu0 %v1229, 127
    %v1250 = vpop.permute.xlu0 %1249
    %v1251 = vlaneseq
    %v1252 = vand.u32 %v1251, 127
    %vm1253 = vcmp.lt.s32.totalorder %v1252, 127
    %v1254 = vsel %vm1253, %v1248, %v1250
    %v1255 = vsel %vm1253, %v1246, %v1248
    %v1256 = vsel %vm1253, %v1244, %v1246
    %v1257 = vsel %vm1253, %v1242, %v1244
    %v1258 = vsel %vm1253, %v1240, %v1242
    %v1259 = vsel %vm1253, %v1238, %v1240
    %v1260 = vsel %vm1253, %v1236, %v1238
    %v1261 = vsel %vm1253, %v1250, %v1236
    %v1263 = vlaneseq
    %v1264 = vshrl.u32 %v1263, 7
    %v1265 = vsub.s32 0, %v1264
    %v1266 = vrot.slane %v1230, %v1265
    %v1267 = vlaneseq
    %v1268 = vshrl.u32 %v1267, 7
    %v1269 = vsub.s32 1, %v1268
    %v1270 = vrot.slane %v1230, %v1269
    %v1271 = vlaneseq
    %v1272 = vshrl.u32 %v1271, 7
    %v1273 = vsub.s32 2, %v1272
    %v1274 = vrot.slane %v1230, %v1273
    %v1275 = vlaneseq
    %v1276 = vshrl.u32 %v1275, 7
    %v1277 = vsub.s32 3, %v1276
    %v1278 = vrot.slane %v1230, %v1277
    %v1279 = vlaneseq
    %v1280 = vshrl.u32 %v1279, 7
    %v1281 = vsub.s32 4, %v1280
    %v1282 = vrot.slane %v1230, %v1281
    %v1283 = vlaneseq
    %v1284 = vshrl.u32 %v1283, 7
    %v1285 = vsub.s32 5, %v1284
    %v1286 = vrot.slane %v1230, %v1285
    %v1287 = vlaneseq
    %v1288 = vshrl.u32 %v1287, 7
    %v1289 = vsub.s32 6, %v1288
    %v1290 = vrot.slane %v1230, %v1289
    %v1291 = vlaneseq
    %v1292 = vshrl.u32 %v1291, 7
    %v1293 = vsub.s32 7, %v1292
    %v1294 = vrot.slane %v1230, %v1293
    %v1303 = vmul.f32 %v1260, %v1266
    %v1304 = vmul.f32 %v1259, %v1270
    %v1305 = vmul.f32 %v1258, %v1274
    %v1306 = vmul.f32 %v1257, %v1278
    %v1307 = vmul.f32 %v1256, %v1282
    %v1308 = vmul.f32 %v1255, %v1286
    %v1309 = vmul.f32 %v1254, %v1290
    %v1310 = vmul.f32 %v1261, %v1294
    %1311 = vrot.lane.b32.xlu0 %v1222, 96
    %v1312 = vpop.permute.xlu0 %1311
    %1313 = vrot.lane.b32.xlu0 %v1223, 96
    %v1314 = vpop.permute.xlu0 %1313
    %1315 = vrot.lane.b32.xlu0 %v1224, 96
    %v1316 = vpop.permute.xlu0 %1315
    %1317 = vrot.lane.b32.xlu0 %v1225, 96
    %v1318 = vpop.permute.xlu0 %1317
    %1319 = vrot.lane.b32.xlu0 %v1226, 96
    %v1320 = vpop.permute.xlu0 %1319
    %1321 = vrot.lane.b32.xlu0 %v1227, 96
    %v1322 = vpop.permute.xlu0 %1321
    %1323 = vrot.lane.b32.xlu0 %v1228, 96
    %v1324 = vpop.permute.xlu0 %1323
    %1325 = vrot.lane.b32.xlu0 %v1229, 96
    %v1326 = vpop.permute.xlu0 %1325
    %vm1327 = vcmp.lt.s32.totalorder %v1252, 96
    %v1328 = vsel %vm1327, %v1324, %v1326
    %v1329 = vsel %vm1327, %v1322, %v1324
    %v1330 = vsel %vm1327, %v1320, %v1322
    %v1331 = vsel %vm1327, %v1318, %v1320
    %v1332 = vsel %vm1327, %v1316, %v1318
    %v1333 = vsel %vm1327, %v1314, %v1316
    %v1334 = vsel %vm1327, %v1312, %v1314
    %v1335 = vsel %vm1327, %v1326, %v1312
    %v1337 = vlaneseq
    %v1338 = vshrl.u32 %v1337, 7
    %v1339 = vsub.s32 0, %v1338
    %v1340 = vrot.slane %v1232, %v1339
    %v1341 = vlaneseq
    %v1342 = vshrl.u32 %v1341, 7
    %v1343 = vsub.s32 1, %v1342
    %v1344 = vrot.slane %v1232, %v1343
    %v1345 = vlaneseq
    %v1346 = vshrl.u32 %v1345, 7
    %v1347 = vsub.s32 2, %v1346
    %v1348 = vrot.slane %v1232, %v1347
    %v1349 = vlaneseq
    %v1350 = vshrl.u32 %v1349, 7
    %v1351 = vsub.s32 3, %v1350
    %v1352 = vrot.slane %v1232, %v1351
    %v1353 = vlaneseq
    %v1354 = vshrl.u32 %v1353, 7
    %v1355 = vsub.s32 4, %v1354
    %v1356 = vrot.slane %v1232, %v1355
    %v1357 = vlaneseq
    %v1358 = vshrl.u32 %v1357, 7
    %v1359 = vsub.s32 5, %v1358
    %v1360 = vrot.slane %v1232, %v1359
    %v1361 = vlaneseq
    %v1362 = vshrl.u32 %v1361, 7
    %v1363 = vsub.s32 6, %v1362
    %v1364 = vrot.slane %v1232, %v1363
    %v1365 = vlaneseq
    %v1366 = vshrl.u32 %v1365, 7
    %v1367 = vsub.s32 7, %v1366
    %v1368 = vrot.slane %v1232, %v1367
    %v1377 = vmul.f32 %v1334, %v1340
    %v1378 = vmul.f32 %v1333, %v1344
    %v1379 = vmul.f32 %v1332, %v1348
    %v1380 = vmul.f32 %v1331, %v1352
    %v1381 = vmul.f32 %v1330, %v1356
    %v1382 = vmul.f32 %v1329, %v1360
    %v1383 = vmul.f32 %v1328, %v1364
    %v1384 = vmul.f32 %v1335, %v1368
    %1385 = vrot.lane.b32.xlu0 %v1222, 95
    %v1386 = vpop.permute.xlu0 %1385
    %1387 = vrot.lane.b32.xlu0 %v1223, 95
    %v1388 = vpop.permute.xlu0 %1387
    %1389 = vrot.lane.b32.xlu0 %v1224, 95
    %v1390 = vpop.permute.xlu0 %1389
    %1391 = vrot.lane.b32.xlu0 %v1225, 95
    %v1392 = vpop.permute.xlu0 %1391
    %1393 = vrot.lane.b32.xlu0 %v1226, 95
    %v1394 = vpop.permute.xlu0 %1393
    %1395 = vrot.lane.b32.xlu0 %v1227, 95
    %v1396 = vpop.permute.xlu0 %1395
    %1397 = vrot.lane.b32.xlu0 %v1228, 95
    %v1398 = vpop.permute.xlu0 %1397
    %1399 = vrot.lane.b32.xlu0 %v1229, 95
    %v1400 = vpop.permute.xlu0 %1399
    %vm1401 = vcmp.lt.s32.totalorder %v1252, 95
    %v1402 = vsel %vm1401, %v1398, %v1400
    %v1403 = vsel %vm1401, %v1396, %v1398
    %v1404 = vsel %vm1401, %v1394, %v1396
    %v1405 = vsel %vm1401, %v1392, %v1394
    %v1406 = vsel %vm1401, %v1390, %v1392
    %v1407 = vsel %vm1401, %v1388, %v1390
    %v1408 = vsel %vm1401, %v1386, %v1388
    %v1409 = vsel %vm1401, %v1400, %v1386
    %v1411 = vlaneseq
    %v1412 = vshrl.u32 %v1411, 7
    %v1413 = vsub.s32 0, %v1412
    %v1414 = vrot.slane %v1234, %v1413
    %v1415 = vlaneseq
    %v1416 = vshrl.u32 %v1415, 7
    %v1417 = vsub.s32 1, %v1416
    %v1418 = vrot.slane %v1234, %v1417
    %v1419 = vlaneseq
    %v1420 = vshrl.u32 %v1419, 7
    %v1421 = vsub.s32 2, %v1420
    %v1422 = vrot.slane %v1234, %v1421
    %v1423 = vlaneseq
    %v1424 = vshrl.u32 %v1423, 7
    %v1425 = vsub.s32 3, %v1424
    %v1426 = vrot.slane %v1234, %v1425
    %v1427 = vlaneseq
    %v1428 = vshrl.u32 %v1427, 7
    %v1429 = vsub.s32 4, %v1428
    %v1430 = vrot.slane %v1234, %v1429
    %v1431 = vlaneseq
    %v1432 = vshrl.u32 %v1431, 7
    %v1433 = vsub.s32 5, %v1432
    %v1434 = vrot.slane %v1234, %v1433
    %v1435 = vlaneseq
    %v1436 = vshrl.u32 %v1435, 7
    %v1437 = vsub.s32 6, %v1436
    %v1438 = vrot.slane %v1234, %v1437
    %v1439 = vlaneseq
    %v1440 = vshrl.u32 %v1439, 7
    %v1441 = vsub.s32 7, %v1440
    %v1442 = vrot.slane %v1234, %v1441
    %v1451 = vmul.f32 %v1408, %v1414
    %v1452 = vmul.f32 %v1407, %v1418
    %v1453 = vmul.f32 %v1406, %v1422
    %v1454 = vmul.f32 %v1405, %v1426
    %v1455 = vmul.f32 %v1404, %v1430
    %v1456 = vmul.f32 %v1403, %v1434
    %v1457 = vmul.f32 %v1402, %v1438
    %v1458 = vmul.f32 %v1409, %v1442
    %v1459 = vld [vmem:[%s2] sm:$0xff]
    %v1460 = vld [vmem:[%s2 + $0x8] sm:$0xff]
    %s1461 = scalar_lea.vmem %s2, 16
    %v1462 = vld [vmem:[%s1461] sm:$0xff]
    %v1463 = vld [vmem:[%s1461 + $0x8] sm:$0xff]
    %v1465 = vsel %vm595, %v1462, 0
    %v1468 = vsel %vm595, %v1463, 0
    %1470 = vmatprep.subr.mxu0 %v1304
    %1471 = vmatpush1.msra.mxu0 %v1303
    %1472 = vmatprep.subr.mxu0 0.0
    %1473 = vmatpush1.msra.mxu0 0.0
    %1474 = vmatprep.subr.mxu0 0.0
    %1475 = vmatpush1.msra.mxu0 0.0
    %1476 = vmatprep.subr.mxu0 0.0
    %1477 = vmatpush1.msra.mxu0 0.0
    %1478 = vmatprep.subr.mxu0 0.0
    %1479 = vmatpush1.msra.mxu0 0.0
    %1480 = vmatprep.subr.mxu0 0.0
    %1481 = vmatpush1.msra.mxu0 0.0
    %1482 = vmatprep.subr.mxu0 0.0
    %1483 = vmatpush1.msra.mxu0 0.0
    %1484 = vmatprep.subr.mxu0 0.0
    %1485 = vmatpush1.msra.mxu0 0.0
    %1486 = vmatprep.subr.mxu0 0.0
    %1487 = vmatpush1.msra.mxu0 0.0
    %1488 = vmatprep.subr.mxu0 0.0
    %1489 = vmatpush1.msra.mxu0 0.0
    %1490 = vmatprep.subr.mxu0 0.0
    %1491 = vmatpush1.msra.mxu0 0.0
    %1492 = vmatprep.subr.mxu0 0.0
    %1493 = vmatpush1.msra.mxu0 0.0
    %1494 = vmatprep.subr.mxu0 0.0
    %1495 = vmatpush1.msra.mxu0 0.0
    %1496 = vmatprep.subr.mxu0 0.0
    %1497 = vmatpush1.msra.mxu0 0.0
    %1498 = vmatprep.subr.mxu0 0.0
    %1499 = vmatpush1.msra.mxu0 0.0
    %1500 = vmatprep.subr.mxu0 0.0
    %1501 = vmatpush1.msra.mxu0 0.0
    %1502 = vmatprep.subr.mxu0 0.0
    %1503 = vmatpush1.msra.mxu0 0.0
    %1504 = vmatprep.subr.mxu0 0.0
    %1505 = vmatpush1.msra.mxu0 0.0
    %1506 = vmatprep.subr.mxu0 0.0
    %1507 = vmatpush1.msra.mxu0 0.0
    %1508 = vmatprep.subr.mxu0 0.0
    %1509 = vmatpush1.msra.mxu0 0.0
    %1510 = vmatprep.subr.mxu0 0.0
    %1511 = vmatpush1.msra.mxu0 0.0
    %1512 = vmatprep.subr.mxu0 0.0
    %1513 = vmatpush1.msra.mxu0 0.0
    %1514 = vmatprep.subr.mxu0 0.0
    %1515 = vmatpush1.msra.mxu0 0.0
    %1516 = vmatprep.subr.mxu0 0.0
    %1517 = vmatpush1.msra.mxu0 0.0
    %1518 = vmatprep.subr.mxu0 0.0
    %1519 = vmatpush1.msra.mxu0 0.0
    %1520 = vmatprep.subr.mxu0 0.0
    %1521 = vmatpush1.msra.mxu0 0.0
    %1522 = vmatprep.subr.mxu0 0.0
    %1523 = vmatpush1.msra.mxu0 0.0
    %1524 = vmatprep.subr.mxu0 0.0
    %1525 = vmatpush1.msra.mxu0 0.0
    %1526 = vmatprep.subr.mxu0 0.0
    %1527 = vmatpush1.msra.mxu0 0.0
    %1528 = vmatprep.subr.mxu0 0.0
    %1529 = vmatpush1.msra.mxu0 0.0
    %1530 = vmatprep.subr.mxu0 0.0
    %1531 = vmatpush1.msra.mxu0 0.0
    %1532 = vmatprep.subr.mxu0 0.0
    %1533 = vmatpush1.msra.mxu0 0.0
    %1534 = vmatprep.mubr.f32.mxu0 0.0
    %1535 = vmatmul.mubr.f32.gmra.mrb[0].mxu0 %v1465
    %v1536 = vpop.f32.mrb[0].mxu0
    %v1537 = vadd.f32 0.0, %v1536
    %v1538 = vpop.f32.mrb[0].mxu0
    %v1539 = vadd.f32 0.0, %v1538
    %1540 = vmatprep.mubr.f32.mxu0 0.0
    %1541 = vmatmul.mubr.f32.gmra.mrb[0].mxu0 %v1468
    %v1542 = vpop.f32.mrb[0].mxu0
    %v1543 = vadd.f32 0.0, %v1542
    %v1544 = vpop.f32.mrb[0].mxu0
    %v1545 = vadd.f32 0.0, %v1544
    %1546 = vdwg.mxu0
    %1547 = vmatprep.subr.mxu0 %v1306
    %1548 = vmatpush1.msra.mxu0 %v1305
    %1549 = vmatprep.subr.mxu0 0.0
    %1550 = vmatpush1.msra.mxu0 0.0
    %1551 = vmatprep.subr.mxu0 0.0
    %1552 = vmatpush1.msra.mxu0 0.0
    %1553 = vmatprep.subr.mxu0 0.0
    %1554 = vmatpush1.msra.mxu0 0.0
    %1555 = vmatprep.subr.mxu0 0.0
    %1556 = vmatpush1.msra.mxu0 0.0
    %1557 = vmatprep.subr.mxu0 0.0
    %1558 = vmatpush1.msra.mxu0 0.0
    %1559 = vmatprep.subr.mxu0 0.0
    %1560 = vmatpush1.msra.mxu0 0.0
    %1561 = vmatprep.subr.mxu0 0.0
    %1562 = vmatpush1.msra.mxu0 0.0
    %1563 = vmatprep.subr.mxu0 0.0
    %1564 = vmatpush1.msra.mxu0 0.0
    %1565 = vmatprep.subr.mxu0 0.0
    %1566 = vmatpush1.msra.mxu0 0.0
    %1567 = vmatprep.subr.mxu0 0.0
    %1568 = vmatpush1.msra.mxu0 0.0
    %1569 = vmatprep.subr.mxu0 0.0
    %1570 = vmatpush1.msra.mxu0 0.0
    %1571 = vmatprep.subr.mxu0 0.0
    %1572 = vmatpush1.msra.mxu0 0.0
    %1573 = vmatprep.subr.mxu0 0.0
    %1574 = vmatpush1.msra.mxu0 0.0
    %1575 = vmatprep.subr.mxu0 0.0
    %1576 = vmatpush1.msra.mxu0 0.0
    %1577 = vmatprep.subr.mxu0 0.0
    %1578 = vmatpush1.msra.mxu0 0.0
    %1579 = vmatprep.subr.mxu0 0.0
    %1580 = vmatpush1.msra.mxu0 0.0
    %1581 = vmatprep.subr.mxu0 0.0
    %1582 = vmatpush1.msra.mxu0 0.0
    %1583 = vmatprep.subr.mxu0 0.0
    %1584 = vmatpush1.msra.mxu0 0.0
    %1585 = vmatprep.subr.mxu0 0.0
    %1586 = vmatpush1.msra.mxu0 0.0
    %1587 = vmatprep.subr.mxu0 0.0
    %1588 = vmatpush1.msra.mxu0 0.0
    %1589 = vmatprep.subr.mxu0 0.0
    %1590 = vmatpush1.msra.mxu0 0.0
    %1591 = vmatprep.subr.mxu0 0.0
    %1592 = vmatpush1.msra.mxu0 0.0
    %1593 = vmatprep.subr.mxu0 0.0
    %1594 = vmatpush1.msra.mxu0 0.0
    %1595 = vmatprep.subr.mxu0 0.0
    %1596 = vmatpush1.msra.mxu0 0.0
    %1597 = vmatprep.subr.mxu0 0.0
    %1598 = vmatpush1.msra.mxu0 0.0
    %1599 = vmatprep.subr.mxu0 0.0
    %1600 = vmatpush1.msra.mxu0 0.0
    %1601 = vmatprep.subr.mxu0 0.0
    %1602 = vmatpush1.msra.mxu0 0.0
    %1603 = vmatprep.subr.mxu0 0.0
    %1604 = vmatpush1.msra.mxu0 0.0
    %1605 = vmatprep.subr.mxu0 0.0
    %1606 = vmatpush1.msra.mxu0 0.0
    %1607 = vmatprep.subr.mxu0 0.0
    %1608 = vmatpush1.msra.mxu0 0.0
    %1609 = vmatprep.subr.mxu0 0.0
    %1610 = vmatpush1.msra.mxu0 0.0
    %1611 = vmatprep.mubr.f32.mxu0 0.0
    %1612 = vmatmul.mubr.f32.gmra.mrb[0].mxu0 %v1465
    %v1613 = vpop.f32.mrb[0].mxu0
    %v1614 = vadd.f32 0.0, %v1613
    %v1615 = vpop.f32.mrb[0].mxu0
    %v1616 = vadd.f32 0.0, %v1615
    %1617 = vmatprep.mubr.f32.mxu0 0.0
    %1618 = vmatmul.mubr.f32.gmra.mrb[0].mxu0 %v1468
    %v1619 = vpop.f32.mrb[0].mxu0
    %v1620 = vadd.f32 0.0, %v1619
    %v1621 = vpop.f32.mrb[0].mxu0
    %v1622 = vadd.f32 0.0, %v1621
    %1623 = vdwg.mxu0
    %1624 = vmatprep.subr.mxu0 %v1308
    %1625 = vmatpush1.msra.mxu0 %v1307
    %1626 = vmatprep.subr.mxu0 0.0
    %1627 = vmatpush1.msra.mxu0 0.0
    %1628 = vmatprep.subr.mxu0 0.0
    %1629 = vmatpush1.msra.mxu0 0.0
    %1630 = vmatprep.subr.mxu0 0.0
    %1631 = vmatpush1.msra.mxu0 0.0
    %1632 = vmatprep.subr.mxu0 0.0
    %1633 = vmatpush1.msra.mxu0 0.0
    %1634 = vmatprep.subr.mxu0 0.0
    %1635 = vmatpush1.msra.mxu0 0.0
    %1636 = vmatprep.subr.mxu0 0.0
    %1637 = vmatpush1.msra.mxu0 0.0
    %1638 = vmatprep.subr.mxu0 0.0
    %1639 = vmatpush1.msra.mxu0 0.0
    %1640 = vmatprep.subr.mxu0 0.0
    %1641 = vmatpush1.msra.mxu0 0.0
    %1642 = vmatprep.subr.mxu0 0.0
    %1643 = vmatpush1.msra.mxu0 0.0
    %1644 = vmatprep.subr.mxu0 0.0
    %1645 = vmatpush1.msra.mxu0 0.0
    %1646 = vmatprep.subr.mxu0 0.0
    %1647 = vmatpush1.msra.mxu0 0.0
    %1648 = vmatprep.subr.mxu0 0.0
    %1649 = vmatpush1.msra.mxu0 0.0
    %1650 = vmatprep.subr.mxu0 0.0
    %1651 = vmatpush1.msra.mxu0 0.0
    %1652 = vmatprep.subr.mxu0 0.0
    %1653 = vmatpush1.msra.mxu0 0.0
    %1654 = vmatprep.subr.mxu0 0.0
    %1655 = vmatpush1.msra.mxu0 0.0
    %1656 = vmatprep.subr.mxu0 0.0
    %1657 = vmatpush1.msra.mxu0 0.0
    %1658 = vmatprep.subr.mxu0 0.0
    %1659 = vmatpush1.msra.mxu0 0.0
    %1660 = vmatprep.subr.mxu0 0.0
    %1661 = vmatpush1.msra.mxu0 0.0
    %1662 = vmatprep.subr.mxu0 0.0
    %1663 = vmatpush1.msra.mxu0 0.0
    %1664 = vmatprep.subr.mxu0 0.0
    %1665 = vmatpush1.msra.mxu0 0.0
    %1666 = vmatprep.subr.mxu0 0.0
    %1667 = vmatpush1.msra.mxu0 0.0
    %1668 = vmatprep.subr.mxu0 0.0
    %1669 = vmatpush1.msra.mxu0 0.0
    %1670 = vmatprep.subr.mxu0 0.0
    %1671 = vmatpush1.msra.mxu0 0.0
    %1672 = vmatprep.subr.mxu0 0.0
    %1673 = vmatpush1.msra.mxu0 0.0
    %1674 = vmatprep.subr.mxu0 0.0
    %1675 = vmatpush1.msra.mxu0 0.0
    %1676 = vmatprep.subr.mxu0 0.0
    %1677 = vmatpush1.msra.mxu0 0.0
    %1678 = vmatprep.subr.mxu0 0.0
    %1679 = vmatpush1.msra.mxu0 0.0
    %1680 = vmatprep.subr.mxu0 0.0
    %1681 = vmatpush1.msra.mxu0 0.0
    %1682 = vmatprep.subr.mxu0 0.0
    %1683 = vmatpush1.msra.mxu0 0.0
    %1684 = vmatprep.subr.mxu0 0.0
    %1685 = vmatpush1.msra.mxu0 0.0
    %1686 = vmatprep.subr.mxu0 0.0
    %1687 = vmatpush1.msra.mxu0 0.0
    %1688 = vmatprep.mubr.f32.mxu0 0.0
    %1689 = vmatmul.mubr.f32.gmra.mrb[0].mxu0 %v1465
    %v1690 = vpop.f32.mrb[0].mxu0
    %v1691 = vadd.f32 0.0, %v1690
    %v1692 = vpop.f32.mrb[0].mxu0
    %v1693 = vadd.f32 0.0, %v1692
    %1694 = vmatprep.mubr.f32.mxu0 0.0
    %1695 = vmatmul.mubr.f32.gmra.mrb[0].mxu0 %v1468
    %v1696 = vpop.f32.mrb[0].mxu0
    %v1697 = vadd.f32 0.0, %v1696
    %v1698 = vpop.f32.mrb[0].mxu0
    %v1699 = vadd.f32 0.0, %v1698
    %1700 = vdwg.mxu0
    %1701 = vmatprep.subr.mxu0 %v1310
    %1702 = vmatpush1.msra.mxu0 %v1309
    %1703 = vmatprep.subr.mxu0 0.0
    %1704 = vmatpush1.msra.mxu0 0.0
    %1705 = vmatprep.subr.mxu0 0.0
    %1706 = vmatpush1.msra.mxu0 0.0
    %1707 = vmatprep.subr.mxu0 0.0
    %1708 = vmatpush1.msra.mxu0 0.0
    %1709 = vmatprep.subr.mxu0 0.0
    %1710 = vmatpush1.msra.mxu0 0.0
    %1711 = vmatprep.subr.mxu0 0.0
    %1712 = vmatpush1.msra.mxu0 0.0
    %1713 = vmatprep.subr.mxu0 0.0
    %1714 = vmatpush1.msra.mxu0 0.0
    %1715 = vmatprep.subr.mxu0 0.0
    %1716 = vmatpush1.msra.mxu0 0.0
    %1717 = vmatprep.subr.mxu0 0.0
    %1718 = vmatpush1.msra.mxu0 0.0
    %1719 = vmatprep.subr.mxu0 0.0
    %1720 = vmatpush1.msra.mxu0 0.0
    %1721 = vmatprep.subr.mxu0 0.0
    %1722 = vmatpush1.msra.mxu0 0.0
    %1723 = vmatprep.subr.mxu0 0.0
    %1724 = vmatpush1.msra.mxu0 0.0
    %1725 = vmatprep.subr.mxu0 0.0
    %1726 = vmatpush1.msra.mxu0 0.0
    %1727 = vmatprep.subr.mxu0 0.0
    %1728 = vmatpush1.msra.mxu0 0.0
    %1729 = vmatprep.subr.mxu0 0.0
    %1730 = vmatpush1.msra.mxu0 0.0
    %1731 = vmatprep.subr.mxu0 0.0
    %1732 = vmatpush1.msra.mxu0 0.0
    %1733 = vmatprep.subr.mxu0 0.0
    %1734 = vmatpush1.msra.mxu0 0.0
    %1735 = vmatprep.subr.mxu0 0.0
    %1736 = vmatpush1.msra.mxu0 0.0
    %1737 = vmatprep.subr.mxu0 0.0
    %1738 = vmatpush1.msra.mxu0 0.0
    %1739 = vmatprep.subr.mxu0 0.0
    %1740 = vmatpush1.msra.mxu0 0.0
    %1741 = vmatprep.subr.mxu0 0.0
    %1742 = vmatpush1.msra.mxu0 0.0
    %1743 = vmatprep.subr.mxu0 0.0
    %1744 = vmatpush1.msra.mxu0 0.0
    %1745 = vmatprep.subr.mxu0 0.0
    %1746 = vmatpush1.msra.mxu0 0.0
    %1747 = vmatprep.subr.mxu0 0.0
    %1748 = vmatpush1.msra.mxu0 0.0
    %1749 = vmatprep.subr.mxu0 0.0
    %1750 = vmatpush1.msra.mxu0 0.0
    %1751 = vmatprep.subr.mxu0 0.0
    %1752 = vmatpush1.msra.mxu0 0.0
    %1753 = vmatprep.subr.mxu0 0.0
    %1754 = vmatpush1.msra.mxu0 0.0
    %1755 = vmatprep.subr.mxu0 0.0
    %1756 = vmatpush1.msra.mxu0 0.0
    %1757 = vmatprep.subr.mxu0 0.0
    %1758 = vmatpush1.msra.mxu0 0.0
    %1759 = vmatprep.subr.mxu0 0.0
    %1760 = vmatpush1.msra.mxu0 0.0
    %1761 = vmatprep.subr.mxu0 0.0
    %1762 = vmatpush1.msra.mxu0 0.0
    %1763 = vmatprep.subr.mxu0 0.0
    %1764 = vmatpush1.msra.mxu0 0.0
    %1765 = vmatprep.mubr.f32.mxu0 0.0
    %1766 = vmatmul.mubr.f32.gmra.mrb[0].mxu0 %v1465
    %v1767 = vpop.f32.mrb[0].mxu0
    %v1768 = vadd.f32 0.0, %v1767
    %v1769 = vpop.f32.mrb[0].mxu0
    %v1770 = vadd.f32 0.0, %v1769
    %1771 = vmatprep.mubr.f32.mxu0 0.0
    %1772 = vmatmul.mubr.f32.gmra.mrb[0].mxu0 %v1468
    %v1773 = vpop.f32.mrb[0].mxu0
    %v1774 = vadd.f32 0.0, %v1773
    %v1775 = vpop.f32.mrb[0].mxu0
    %v1776 = vadd.f32 0.0, %v1775
    %1777 = vdwg.mxu0
    %v1779 = vsel %vm595, %v1459, 0
    %v1782 = vsel %vm595, %v1460, 0
    %1784 = vmatprep.subr.mxu0 %v1223
    %1785 = vmatpush1.msra.mxu0 %v1222
    %1786 = vmatprep.subr.mxu0 0.0
    %1787 = vmatpush1.msra.mxu0 0.0
    %1788 = vmatprep.subr.mxu0 0.0
    %1789 = vmatpush1.msra.mxu0 0.0
    %1790 = vmatprep.subr.mxu0 0.0
    %1791 = vmatpush1.msra.mxu0 0.0
    %1792 = vmatprep.subr.mxu0 0.0
    %1793 = vmatpush1.msra.mxu0 0.0
    %1794 = vmatprep.subr.mxu0 0.0
    %1795 = vmatpush1.msra.mxu0 0.0
    %1796 = vmatprep.subr.mxu0 0.0
    %1797 = vmatpush1.msra.mxu0 0.0
    %1798 = vmatprep.subr.mxu0 0.0
    %1799 = vmatpush1.msra.mxu0 0.0
    %1800 = vmatprep.subr.mxu0 0.0
    %1801 = vmatpush1.msra.mxu0 0.0
    %1802 = vmatprep.subr.mxu0 0.0
    %1803 = vmatpush1.msra.mxu0 0.0
    %1804 = vmatprep.subr.mxu0 0.0
    %1805 = vmatpush1.msra.mxu0 0.0
    %1806 = vmatprep.subr.mxu0 0.0
    %1807 = vmatpush1.msra.mxu0 0.0
    %1808 = vmatprep.subr.mxu0 0.0
    %1809 = vmatpush1.msra.mxu0 0.0
    %1810 = vmatprep.subr.mxu0 0.0
    %1811 = vmatpush1.msra.mxu0 0.0
    %1812 = vmatprep.subr.mxu0 0.0
    %1813 = vmatpush1.msra.mxu0 0.0
    %1814 = vmatprep.subr.mxu0 0.0
    %1815 = vmatpush1.msra.mxu0 0.0
    %1816 = vmatprep.subr.mxu0 0.0
    %1817 = vmatpush1.msra.mxu0 0.0
    %1818 = vmatprep.subr.mxu0 0.0
    %1819 = vmatpush1.msra.mxu0 0.0
    %1820 = vmatprep.subr.mxu0 0.0
    %1821 = vmatpush1.msra.mxu0 0.0
    %1822 = vmatprep.subr.mxu0 0.0
    %1823 = vmatpush1.msra.mxu0 0.0
    %1824 = vmatprep.subr.mxu0 0.0
    %1825 = vmatpush1.msra.mxu0 0.0
    %1826 = vmatprep.subr.mxu0 0.0
    %1827 = vmatpush1.msra.mxu0 0.0
    %1828 = vmatprep.subr.mxu0 0.0
    %1829 = vmatpush1.msra.mxu0 0.0
    %1830 = vmatprep.subr.mxu0 0.0
    %1831 = vmatpush1.msra.mxu0 0.0
    %1832 = vmatprep.subr.mxu0 0.0
    %1833 = vmatpush1.msra.mxu0 0.0
    %1834 = vmatprep.subr.mxu0 0.0
    %1835 = vmatpush1.msra.mxu0 0.0
    %1836 = vmatprep.subr.mxu0 0.0
    %1837 = vmatpush1.msra.mxu0 0.0
    %1838 = vmatprep.subr.mxu0 0.0
    %1839 = vmatpush1.msra.mxu0 0.0
    %1840 = vmatprep.subr.mxu0 0.0
    %1841 = vmatpush1.msra.mxu0 0.0
    %1842 = vmatprep.subr.mxu0 0.0
    %1843 = vmatpush1.msra.mxu0 0.0
    %1844 = vmatprep.subr.mxu0 0.0
    %1845 = vmatpush1.msra.mxu0 0.0
    %1846 = vmatprep.subr.mxu0 0.0
    %1847 = vmatpush1.msra.mxu0 0.0
    %1848 = vmatprep.mubr.f32.mxu0 0.0
    %1849 = vmatmul.mubr.f32.gmra.mrb[0].mxu0 %v1779
    %v1850 = vpop.f32.mrb[0].mxu0
    %v1851 = vadd.f32 %v1537, %v1850
    %v1852 = vpop.f32.mrb[0].mxu0
    %v1853 = vadd.f32 %v1539, %v1852
    %1854 = vmatprep.mubr.f32.mxu0 0.0
    %1855 = vmatmul.mubr.f32.gmra.mrb[0].mxu0 %v1782
    %v1856 = vpop.f32.mrb[0].mxu0
    %v1857 = vadd.f32 %v1543, %v1856
    %v1858 = vpop.f32.mrb[0].mxu0
    %v1859 = vadd.f32 %v1545, %v1858
    %1860 = vdwg.mxu0
    %1861 = vmatprep.subr.mxu0 %v1225
    %1862 = vmatpush1.msra.mxu0 %v1224
    %1863 = vmatprep.subr.mxu0 0.0
    %1864 = vmatpush1.msra.mxu0 0.0
    %1865 = vmatprep.subr.mxu0 0.0
    %1866 = vmatpush1.msra.mxu0 0.0
    %1867 = vmatprep.subr.mxu0 0.0
    %1868 = vmatpush1.msra.mxu0 0.0
    %1869 = vmatprep.subr.mxu0 0.0
    %1870 = vmatpush1.msra.mxu0 0.0
    %1871 = vmatprep.subr.mxu0 0.0
    %1872 = vmatpush1.msra.mxu0 0.0
    %1873 = vmatprep.subr.mxu0 0.0
    %1874 = vmatpush1.msra.mxu0 0.0
    %1875 = vmatprep.subr.mxu0 0.0
    %1876 = vmatpush1.msra.mxu0 0.0
    %1877 = vmatprep.subr.mxu0 0.0
    %1878 = vmatpush1.msra.mxu0 0.0
    %1879 = vmatprep.subr.mxu0 0.0
    %1880 = vmatpush1.msra.mxu0 0.0
    %1881 = vmatprep.subr.mxu0 0.0
    %1882 = vmatpush1.msra.mxu0 0.0
    %1883 = vmatprep.subr.mxu0 0.0
    %1884 = vmatpush1.msra.mxu0 0.0
    %1885 = vmatprep.subr.mxu0 0.0
    %1886 = vmatpush1.msra.mxu0 0.0
    %1887 = vmatprep.subr.mxu0 0.0
    %1888 = vmatpush1.msra.mxu0 0.0
    %1889 = vmatprep.subr.mxu0 0.0
    %1890 = vmatpush1.msra.mxu0 0.0
    %1891 = vmatprep.subr.mxu0 0.0
    %1892 = vmatpush1.msra.mxu0 0.0
    %1893 = vmatprep.subr.mxu0 0.0
    %1894 = vmatpush1.msra.mxu0 0.0
    %1895 = vmatprep.subr.mxu0 0.0
    %1896 = vmatpush1.msra.mxu0 0.0
    %1897 = vmatprep.subr.mxu0 0.0
    %1898 = vmatpush1.msra.mxu0 0.0
    %1899 = vmatprep.subr.mxu0 0.0
    %1900 = vmatpush1.msra.mxu0 0.0
    %1901 = vmatprep.subr.mxu0 0.0
    %1902 = vmatpush1.msra.mxu0 0.0
    %1903 = vmatprep.subr.mxu0 0.0
    %1904 = vmatpush1.msra.mxu0 0.0
    %1905 = vmatprep.subr.mxu0 0.0
    %1906 = vmatpush1.msra.mxu0 0.0
    %1907 = vmatprep.subr.mxu0 0.0
    %1908 = vmatpush1.msra.mxu0 0.0
    %1909 = vmatprep.subr.mxu0 0.0
    %1910 = vmatpush1.msra.mxu0 0.0
    %1911 = vmatprep.subr.mxu0 0.0
    %1912 = vmatpush1.msra.mxu0 0.0
    %1913 = vmatprep.subr.mxu0 0.0
    %1914 = vmatpush1.msra.mxu0 0.0
    %1915 = vmatprep.subr.mxu0 0.0
    %1916 = vmatpush1.msra.mxu0 0.0
    %1917 = vmatprep.subr.mxu0 0.0
    %1918 = vmatpush1.msra.mxu0 0.0
    %1919 = vmatprep.subr.mxu0 0.0
    %1920 = vmatpush1.msra.mxu0 0.0
    %1921 = vmatprep.subr.mxu0 0.0
    %1922 = vmatpush1.msra.mxu0 0.0
    %1923 = vmatprep.subr.mxu0 0.0
    %1924 = vmatpush1.msra.mxu0 0.0
    %1925 = vmatprep.mubr.f32.mxu0 0.0
    %1926 = vmatmul.mubr.f32.gmra.mrb[0].mxu0 %v1779
    %v1927 = vpop.f32.mrb[0].mxu0
    %v1928 = vadd.f32 %v1614, %v1927
    %v1929 = vpop.f32.mrb[0].mxu0
    %v1930 = vadd.f32 %v1616, %v1929
    %1931 = vmatprep.mubr.f32.mxu0 0.0
    %1932 = vmatmul.mubr.f32.gmra.mrb[0].mxu0 %v1782
    %v1933 = vpop.f32.mrb[0].mxu0
    %v1934 = vadd.f32 %v1620, %v1933
    %v1935 = vpop.f32.mrb[0].mxu0
    %v1936 = vadd.f32 %v1622, %v1935
    %1937 = vdwg.mxu0
    %1938 = vmatprep.subr.mxu0 %v1227
    %1939 = vmatpush1.msra.mxu0 %v1226
    %1940 = vmatprep.subr.mxu0 0.0
    %1941 = vmatpush1.msra.mxu0 0.0
    %1942 = vmatprep.subr.mxu0 0.0
    %1943 = vmatpush1.msra.mxu0 0.0
    %1944 = vmatprep.subr.mxu0 0.0
    %1945 = vmatpush1.msra.mxu0 0.0
    %1946 = vmatprep.subr.mxu0 0.0
    %1947 = vmatpush1.msra.mxu0 0.0
    %1948 = vmatprep.subr.mxu0 0.0
    %1949 = vmatpush1.msra.mxu0 0.0
    %1950 = vmatprep.subr.mxu0 0.0
    %1951 = vmatpush1.msra.mxu0 0.0
    %1952 = vmatprep.subr.mxu0 0.0
    %1953 = vmatpush1.msra.mxu0 0.0
    %1954 = vmatprep.subr.mxu0 0.0
    %1955 = vmatpush1.msra.mxu0 0.0
    %1956 = vmatprep.subr.mxu0 0.0
    %1957 = vmatpush1.msra.mxu0 0.0
    %1958 = vmatprep.subr.mxu0 0.0
    %1959 = vmatpush1.msra.mxu0 0.0
    %1960 = vmatprep.subr.mxu0 0.0
    %1961 = vmatpush1.msra.mxu0 0.0
    %1962 = vmatprep.subr.mxu0 0.0
    %1963 = vmatpush1.msra.mxu0 0.0
    %1964 = vmatprep.subr.mxu0 0.0
    %1965 = vmatpush1.msra.mxu0 0.0
    %1966 = vmatprep.subr.mxu0 0.0
    %1967 = vmatpush1.msra.mxu0 0.0
    %1968 = vmatprep.subr.mxu0 0.0
    %1969 = vmatpush1.msra.mxu0 0.0
    %1970 = vmatprep.subr.mxu0 0.0
    %1971 = vmatpush1.msra.mxu0 0.0
    %1972 = vmatprep.subr.mxu0 0.0
    %1973 = vmatpush1.msra.mxu0 0.0
    %1974 = vmatprep.subr.mxu0 0.0
    %1975 = vmatpush1.msra.mxu0 0.0
    %1976 = vmatprep.subr.mxu0 0.0
    %1977 = vmatpush1.msra.mxu0 0.0
    %1978 = vmatprep.subr.mxu0 0.0
    %1979 = vmatpush1.msra.mxu0 0.0
    %1980 = vmatprep.subr.mxu0 0.0
    %1981 = vmatpush1.msra.mxu0 0.0
    %1982 = vmatprep.subr.mxu0 0.0
    %1983 = vmatpush1.msra.mxu0 0.0
    %1984 = vmatprep.subr.mxu0 0.0
    %1985 = vmatpush1.msra.mxu0 0.0
    %1986 = vmatprep.subr.mxu0 0.0
    %1987 = vmatpush1.msra.mxu0 0.0
    %1988 = vmatprep.subr.mxu0 0.0
    %1989 = vmatpush1.msra.mxu0 0.0
    %1990 = vmatprep.subr.mxu0 0.0
    %1991 = vmatpush1.msra.mxu0 0.0
    %1992 = vmatprep.subr.mxu0 0.0
    %1993 = vmatpush1.msra.mxu0 0.0
    %1994 = vmatprep.subr.mxu0 0.0
    %1995 = vmatpush1.msra.mxu0 0.0
    %1996 = vmatprep.subr.mxu0 0.0
    %1997 = vmatpush1.msra.mxu0 0.0
    %1998 = vmatprep.subr.mxu0 0.0
    %1999 = vmatpush1.msra.mxu0 0.0
    %2000 = vmatprep.subr.mxu0 0.0
    %2001 = vmatpush1.msra.mxu0 0.0
    %2002 = vmatprep.mubr.f32.mxu0 0.0
    %2003 = vmatmul.mubr.f32.gmra.mrb[0].mxu0 %v1779
    %v2004 = vpop.f32.mrb[0].mxu0
    %v2005 = vadd.f32 %v1691, %v2004
    %v2006 = vpop.f32.mrb[0].mxu0
    %v2007 = vadd.f32 %v1693, %v2006
    %2008 = vmatprep.mubr.f32.mxu0 0.0
    %2009 = vmatmul.mubr.f32.gmra.mrb[0].mxu0 %v1782
    %v2010 = vpop.f32.mrb[0].mxu0
    %v2011 = vadd.f32 %v1697, %v2010
    %v2012 = vpop.f32.mrb[0].mxu0
    %v2013 = vadd.f32 %v1699, %v2012
    %2014 = vdwg.mxu0
    %2015 = vmatprep.subr.mxu0 %v1229
    %2016 = vmatpush1.msra.mxu0 %v1228
    %2017 = vmatprep.subr.mxu0 0.0
    %2018 = vmatpush1.msra.mxu0 0.0
    %2019 = vmatprep.subr.mxu0 0.0
    %2020 = vmatpush1.msra.mxu0 0.0
    %2021 = vmatprep.subr.mxu0 0.0
    %2022 = vmatpush1.msra.mxu0 0.0
    %2023 = vmatprep.subr.mxu0 0.0
    %2024 = vmatpush1.msra.mxu0 0.0
    %2025 = vmatprep.subr.mxu0 0.0
    %2026 = vmatpush1.msra.mxu0 0.0
    %2027 = vmatprep.subr.mxu0 0.0
    %2028 = vmatpush1.msra.mxu0 0.0
    %2029 = vmatprep.subr.mxu0 0.0
    %2030 = vmatpush1.msra.mxu0 0.0
    %2031 = vmatprep.subr.mxu0 0.0
    %2032 = vmatpush1.msra.mxu0 0.0
    %2033 = vmatprep.subr.mxu0 0.0
    %2034 = vmatpush1.msra.mxu0 0.0
    %2035 = vmatprep.subr.mxu0 0.0
    %2036 = vmatpush1.msra.mxu0 0.0
    %2037 = vmatprep.subr.mxu0 0.0
    %2038 = vmatpush1.msra.mxu0 0.0
    %2039 = vmatprep.subr.mxu0 0.0
    %2040 = vmatpush1.msra.mxu0 0.0
    %2041 = vmatprep.subr.mxu0 0.0
    %2042 = vmatpush1.msra.mxu0 0.0
    %2043 = vmatprep.subr.mxu0 0.0
    %2044 = vmatpush1.msra.mxu0 0.0
    %2045 = vmatprep.subr.mxu0 0.0
    %2046 = vmatpush1.msra.mxu0 0.0
    %2047 = vmatprep.subr.mxu0 0.0
    %2048 = vmatpush1.msra.mxu0 0.0
    %2049 = vmatprep.subr.mxu0 0.0
    %2050 = vmatpush1.msra.mxu0 0.0
    %2051 = vmatprep.subr.mxu0 0.0
    %2052 = vmatpush1.msra.mxu0 0.0
    %2053 = vmatprep.subr.mxu0 0.0
    %2054 = vmatpush1.msra.mxu0 0.0
    %2055 = vmatprep.subr.mxu0 0.0
    %2056 = vmatpush1.msra.mxu0 0.0
    %2057 = vmatprep.subr.mxu0 0.0
    %2058 = vmatpush1.msra.mxu0 0.0
    %2059 = vmatprep.subr.mxu0 0.0
    %2060 = vmatpush1.msra.mxu0 0.0
    %2061 = vmatprep.subr.mxu0 0.0
    %2062 = vmatpush1.msra.mxu0 0.0
    %2063 = vmatprep.subr.mxu0 0.0
    %2064 = vmatpush1.msra.mxu0 0.0
    %2065 = vmatprep.subr.mxu0 0.0
    %2066 = vmatpush1.msra.mxu0 0.0
    %2067 = vmatprep.subr.mxu0 0.0
    %2068 = vmatpush1.msra.mxu0 0.0
    %2069 = vmatprep.subr.mxu0 0.0
    %2070 = vmatpush1.msra.mxu0 0.0
    %2071 = vmatprep.subr.mxu0 0.0
    %2072 = vmatpush1.msra.mxu0 0.0
    %2073 = vmatprep.subr.mxu0 0.0
    %2074 = vmatpush1.msra.mxu0 0.0
    %2075 = vmatprep.subr.mxu0 0.0
    %2076 = vmatpush1.msra.mxu0 0.0
    %2077 = vmatprep.subr.mxu0 0.0
    %2078 = vmatpush1.msra.mxu0 0.0
    %2079 = vmatprep.mubr.f32.mxu0 0.0
    %2080 = vmatmul.mubr.f32.gmra.mrb[0].mxu0 %v1779
    %v2081 = vpop.f32.mrb[0].mxu0
    %v2082 = vadd.f32 %v1768, %v2081
    %v2083 = vpop.f32.mrb[0].mxu0
    %v2084 = vadd.f32 %v1770, %v2083
    %2085 = vmatprep.mubr.f32.mxu0 0.0
    %2086 = vmatmul.mubr.f32.gmra.mrb[0].mxu0 %v1782
    %v2087 = vpop.f32.mrb[0].mxu0
    %v2088 = vadd.f32 %v1774, %v2087
    %v2089 = vpop.f32.mrb[0].mxu0
    %v2090 = vadd.f32 %v1776, %v2089
    %2091 = vdwg.mxu0
    %s2092 = scalar_lea.vmem %s2, 32
    %v2093 = vld [vmem:[%s2092] sm:$0xff]
    %v2094 = vld [vmem:[%s2092 + $0x8] sm:$0xff]
    %v2096 = vsel %vm595, %v2093, 0
    %v2099 = vsel %vm595, %v2094, 0
    %2101 = vmatprep.subr.mxu0 %v1378
    %2102 = vmatpush1.msra.mxu0 %v1377
    %2103 = vmatprep.subr.mxu0 0.0
    %2104 = vmatpush1.msra.mxu0 0.0
    %2105 = vmatprep.subr.mxu0 0.0
    %2106 = vmatpush1.msra.mxu0 0.0
    %2107 = vmatprep.subr.mxu0 0.0
    %2108 = vmatpush1.msra.mxu0 0.0
    %2109 = vmatprep.subr.mxu0 0.0
    %2110 = vmatpush1.msra.mxu0 0.0
    %2111 = vmatprep.subr.mxu0 0.0
    %2112 = vmatpush1.msra.mxu0 0.0
    %2113 = vmatprep.subr.mxu0 0.0
    %2114 = vmatpush1.msra.mxu0 0.0
    %2115 = vmatprep.subr.mxu0 0.0
    %2116 = vmatpush1.msra.mxu0 0.0
    %2117 = vmatprep.subr.mxu0 0.0
    %2118 = vmatpush1.msra.mxu0 0.0
    %2119 = vmatprep.subr.mxu0 0.0
    %2120 = vmatpush1.msra.mxu0 0.0
    %2121 = vmatprep.subr.mxu0 0.0
    %2122 = vmatpush1.msra.mxu0 0.0
    %2123 = vmatprep.subr.mxu0 0.0
    %2124 = vmatpush1.msra.mxu0 0.0
    %2125 = vmatprep.subr.mxu0 0.0
    %2126 = vmatpush1.msra.mxu0 0.0
    %2127 = vmatprep.subr.mxu0 0.0
    %2128 = vmatpush1.msra.mxu0 0.0
    %2129 = vmatprep.subr.mxu0 0.0
    %2130 = vmatpush1.msra.mxu0 0.0
    %2131 = vmatprep.subr.mxu0 0.0
    %2132 = vmatpush1.msra.mxu0 0.0
    %2133 = vmatprep.subr.mxu0 0.0
    %2134 = vmatpush1.msra.mxu0 0.0
    %2135 = vmatprep.subr.mxu0 0.0
    %2136 = vmatpush1.msra.mxu0 0.0
    %2137 = vmatprep.subr.mxu0 0.0
    %2138 = vmatpush1.msra.mxu0 0.0
    %2139 = vmatprep.subr.mxu0 0.0
    %2140 = vmatpush1.msra.mxu0 0.0
    %2141 = vmatprep.subr.mxu0 0.0
    %2142 = vmatpush1.msra.mxu0 0.0
    %2143 = vmatprep.subr.mxu0 0.0
    %2144 = vmatpush1.msra.mxu0 0.0
    %2145 = vmatprep.subr.mxu0 0.0
    %2146 = vmatpush1.msra.mxu0 0.0
    %2147 = vmatprep.subr.mxu0 0.0
    %2148 = vmatpush1.msra.mxu0 0.0
    %2149 = vmatprep.subr.mxu0 0.0
    %2150 = vmatpush1.msra.mxu0 0.0
    %2151 = vmatprep.subr.mxu0 0.0
    %2152 = vmatpush1.msra.mxu0 0.0
    %2153 = vmatprep.subr.mxu0 0.0
    %2154 = vmatpush1.msra.mxu0 0.0
    %2155 = vmatprep.subr.mxu0 0.0
    %2156 = vmatpush1.msra.mxu0 0.0
    %2157 = vmatprep.subr.mxu0 0.0
    %2158 = vmatpush1.msra.mxu0 0.0
    %2159 = vmatprep.subr.mxu0 0.0
    %2160 = vmatpush1.msra.mxu0 0.0
    %2161 = vmatprep.subr.mxu0 0.0
    %2162 = vmatpush1.msra.mxu0 0.0
    %2163 = vmatprep.subr.mxu0 0.0
    %2164 = vmatpush1.msra.mxu0 0.0
    %2165 = vmatprep.mubr.f32.mxu0 0.0
    %2166 = vmatmul.mubr.f32.gmra.mrb[0].mxu0 %v2096
    %v2167 = vpop.f32.mrb[0].mxu0
    %v2168 = vadd.f32 0.0, %v2167
    %v2169 = vpop.f32.mrb[0].mxu0
    %v2170 = vadd.f32 0.0, %v2169
    %2171 = vmatprep.mubr.f32.mxu0 0.0
    %2172 = vmatmul.mubr.f32.gmra.mrb[0].mxu0 %v2099
    %v2173 = vpop.f32.mrb[0].mxu0
    %v2174 = vadd.f32 0.0, %v2173
    %v2175 = vpop.f32.mrb[0].mxu0
    %v2176 = vadd.f32 0.0, %v2175
    %2177 = vdwg.mxu0
    %2178 = vmatprep.subr.mxu0 %v1380
    %2179 = vmatpush1.msra.mxu0 %v1379
    %2180 = vmatprep.subr.mxu0 0.0
    %2181 = vmatpush1.msra.mxu0 0.0
    %2182 = vmatprep.subr.mxu0 0.0
    %2183 = vmatpush1.msra.mxu0 0.0
    %2184 = vmatprep.subr.mxu0 0.0
    %2185 = vmatpush1.msra.mxu0 0.0
    %2186 = vmatprep.subr.mxu0 0.0
    %2187 = vmatpush1.msra.mxu0 0.0
    %2188 = vmatprep.subr.mxu0 0.0
    %2189 = vmatpush1.msra.mxu0 0.0
    %2190 = vmatprep.subr.mxu0 0.0
    %2191 = vmatpush1.msra.mxu0 0.0
    %2192 = vmatprep.subr.mxu0 0.0
    %2193 = vmatpush1.msra.mxu0 0.0
    %2194 = vmatprep.subr.mxu0 0.0
    %2195 = vmatpush1.msra.mxu0 0.0
    %2196 = vmatprep.subr.mxu0 0.0
    %2197 = vmatpush1.msra.mxu0 0.0
    %2198 = vmatprep.subr.mxu0 0.0
    %2199 = vmatpush1.msra.mxu0 0.0
    %2200 = vmatprep.subr.mxu0 0.0
    %2201 = vmatpush1.msra.mxu0 0.0
    %2202 = vmatprep.subr.mxu0 0.0
    %2203 = vmatpush1.msra.mxu0 0.0
    %2204 = vmatprep.subr.mxu0 0.0
    %2205 = vmatpush1.msra.mxu0 0.0
    %2206 = vmatprep.subr.mxu0 0.0
    %2207 = vmatpush1.msra.mxu0 0.0
    %2208 = vmatprep.subr.mxu0 0.0
    %2209 = vmatpush1.msra.mxu0 0.0
    %2210 = vmatprep.subr.mxu0 0.0
    %2211 = vmatpush1.msra.mxu0 0.0
    %2212 = vmatprep.subr.mxu0 0.0
    %2213 = vmatpush1.msra.mxu0 0.0
    %2214 = vmatprep.subr.mxu0 0.0
    %2215 = vmatpush1.msra.mxu0 0.0
    %2216 = vmatprep.subr.mxu0 0.0
    %2217 = vmatpush1.msra.mxu0 0.0
    %2218 = vmatprep.subr.mxu0 0.0
    %2219 = vmatpush1.msra.mxu0 0.0
    %2220 = vmatprep.subr.mxu0 0.0
    %2221 = vmatpush1.msra.mxu0 0.0
    %2222 = vmatprep.subr.mxu0 0.0
    %2223 = vmatpush1.msra.mxu0 0.0
    %2224 = vmatprep.subr.mxu0 0.0
    %2225 = vmatpush1.msra.mxu0 0.0
    %2226 = vmatprep.subr.mxu0 0.0
    %2227 = vmatpush1.msra.mxu0 0.0
    %2228 = vmatprep.subr.mxu0 0.0
    %2229 = vmatpush1.msra.mxu0 0.0
    %2230 = vmatprep.subr.mxu0 0.0
    %2231 = vmatpush1.msra.mxu0 0.0
    %2232 = vmatprep.subr.mxu0 0.0
    %2233 = vmatpush1.msra.mxu0 0.0
    %2234 = vmatprep.subr.mxu0 0.0
    %2235 = vmatpush1.msra.mxu0 0.0
    %2236 = vmatprep.subr.mxu0 0.0
    %2237 = vmatpush1.msra.mxu0 0.0
    %2238 = vmatprep.subr.mxu0 0.0
    %2239 = vmatpush1.msra.mxu0 0.0
    %2240 = vmatprep.subr.mxu0 0.0
    %2241 = vmatpush1.msra.mxu0 0.0
    %2242 = vmatprep.mubr.f32.mxu0 0.0
    %2243 = vmatmul.mubr.f32.gmra.mrb[0].mxu0 %v2096
    %v2244 = vpop.f32.mrb[0].mxu0
    %v2245 = vadd.f32 0.0, %v2244
    %v2246 = vpop.f32.mrb[0].mxu0
    %v2247 = vadd.f32 0.0, %v2246
    %2248 = vmatprep.mubr.f32.mxu0 0.0
    %2249 = vmatmul.mubr.f32.gmra.mrb[0].mxu0 %v2099
    %v2250 = vpop.f32.mrb[0].mxu0
    %v2251 = vadd.f32 0.0, %v2250
    %v2252 = vpop.f32.mrb[0].mxu0
    %v2253 = vadd.f32 0.0, %v2252
    %2254 = vdwg.mxu0
    %2255 = vmatprep.subr.mxu0 %v1382
    %2256 = vmatpush1.msra.mxu0 %v1381
    %2257 = vmatprep.subr.mxu0 0.0
    %2258 = vmatpush1.msra.mxu0 0.0
    %2259 = vmatprep.subr.mxu0 0.0
    %2260 = vmatpush1.msra.mxu0 0.0
    %2261 = vmatprep.subr.mxu0 0.0
    %2262 = vmatpush1.msra.mxu0 0.0
    %2263 = vmatprep.subr.mxu0 0.0
    %2264 = vmatpush1.msra.mxu0 0.0
    %2265 = vmatprep.subr.mxu0 0.0
    %2266 = vmatpush1.msra.mxu0 0.0
    %2267 = vmatprep.subr.mxu0 0.0
    %2268 = vmatpush1.msra.mxu0 0.0
    %2269 = vmatprep.subr.mxu0 0.0
    %2270 = vmatpush1.msra.mxu0 0.0
    %2271 = vmatprep.subr.mxu0 0.0
    %2272 = vmatpush1.msra.mxu0 0.0
    %2273 = vmatprep.subr.mxu0 0.0
    %2274 = vmatpush1.msra.mxu0 0.0
    %2275 = vmatprep.subr.mxu0 0.0
    %2276 = vmatpush1.msra.mxu0 0.0
    %2277 = vmatprep.subr.mxu0 0.0
    %2278 = vmatpush1.msra.mxu0 0.0
    %2279 = vmatprep.subr.mxu0 0.0
    %2280 = vmatpush1.msra.mxu0 0.0
    %2281 = vmatprep.subr.mxu0 0.0
    %2282 = vmatpush1.msra.mxu0 0.0
    %2283 = vmatprep.subr.mxu0 0.0
    %2284 = vmatpush1.msra.mxu0 0.0
    %2285 = vmatprep.subr.mxu0 0.0
    %2286 = vmatpush1.msra.mxu0 0.0
    %2287 = vmatprep.subr.mxu0 0.0
    %2288 = vmatpush1.msra.mxu0 0.0
    %2289 = vmatprep.subr.mxu0 0.0
    %2290 = vmatpush1.msra.mxu0 0.0
    %2291 = vmatprep.subr.mxu0 0.0
    %2292 = vmatpush1.msra.mxu0 0.0
    %2293 = vmatprep.subr.mxu0 0.0
    %2294 = vmatpush1.msra.mxu0 0.0
    %2295 = vmatprep.subr.mxu0 0.0
    %2296 = vmatpush1.msra.mxu0 0.0
    %2297 = vmatprep.subr.mxu0 0.0
    %2298 = vmatpush1.msra.mxu0 0.0
    %2299 = vmatprep.subr.mxu0 0.0
    %2300 = vmatpush1.msra.mxu0 0.0
    %2301 = vmatprep.subr.mxu0 0.0
    %2302 = vmatpush1.msra.mxu0 0.0
    %2303 = vmatprep.subr.mxu0 0.0
    %2304 = vmatpush1.msra.mxu0 0.0
    %2305 = vmatprep.subr.mxu0 0.0
    %2306 = vmatpush1.msra.mxu0 0.0
    %2307 = vmatprep.subr.mxu0 0.0
    %2308 = vmatpush1.msra.mxu0 0.0
    %2309 = vmatprep.subr.mxu0 0.0
    %2310 = vmatpush1.msra.mxu0 0.0
    %2311 = vmatprep.subr.mxu0 0.0
    %2312 = vmatpush1.msra.mxu0 0.0
    %2313 = vmatprep.subr.mxu0 0.0
    %2314 = vmatpush1.msra.mxu0 0.0
    %2315 = vmatprep.subr.mxu0 0.0
    %2316 = vmatpush1.msra.mxu0 0.0
    %2317 = vmatprep.subr.mxu0 0.0
    %2318 = vmatpush1.msra.mxu0 0.0
    %2319 = vmatprep.mubr.f32.mxu0 0.0
    %2320 = vmatmul.mubr.f32.gmra.mrb[0].mxu0 %v2096
    %v2321 = vpop.f32.mrb[0].mxu0
    %v2322 = vadd.f32 0.0, %v2321
    %v2323 = vpop.f32.mrb[0].mxu0
    %v2324 = vadd.f32 0.0, %v2323
    %2325 = vmatprep.mubr.f32.mxu0 0.0
    %2326 = vmatmul.mubr.f32.gmra.mrb[0].mxu0 %v2099
    %v2327 = vpop.f32.mrb[0].mxu0
    %v2328 = vadd.f32 0.0, %v2327
    %v2329 = vpop.f32.mrb[0].mxu0
    %v2330 = vadd.f32 0.0, %v2329
    %2331 = vdwg.mxu0
    %2332 = vmatprep.subr.mxu0 %v1384
    %2333 = vmatpush1.msra.mxu0 %v1383
    %2334 = vmatprep.subr.mxu0 0.0
    %2335 = vmatpush1.msra.mxu0 0.0
    %2336 = vmatprep.subr.mxu0 0.0
    %2337 = vmatpush1.msra.mxu0 0.0
    %2338 = vmatprep.subr.mxu0 0.0
    %2339 = vmatpush1.msra.mxu0 0.0
    %2340 = vmatprep.subr.mxu0 0.0
    %2341 = vmatpush1.msra.mxu0 0.0
    %2342 = vmatprep.subr.mxu0 0.0
    %2343 = vmatpush1.msra.mxu0 0.0
    %2344 = vmatprep.subr.mxu0 0.0
    %2345 = vmatpush1.msra.mxu0 0.0
    %2346 = vmatprep.subr.mxu0 0.0
    %2347 = vmatpush1.msra.mxu0 0.0
    %2348 = vmatprep.subr.mxu0 0.0
    %2349 = vmatpush1.msra.mxu0 0.0
    %2350 = vmatprep.subr.mxu0 0.0
    %2351 = vmatpush1.msra.mxu0 0.0
    %2352 = vmatprep.subr.mxu0 0.0
    %2353 = vmatpush1.msra.mxu0 0.0
    %2354 = vmatprep.subr.mxu0 0.0
    %2355 = vmatpush1.msra.mxu0 0.0
    %2356 = vmatprep.subr.mxu0 0.0
    %2357 = vmatpush1.msra.mxu0 0.0
    %2358 = vmatprep.subr.mxu0 0.0
    %2359 = vmatpush1.msra.mxu0 0.0
    %2360 = vmatprep.subr.mxu0 0.0
    %2361 = vmatpush1.msra.mxu0 0.0
    %2362 = vmatprep.subr.mxu0 0.0
    %2363 = vmatpush1.msra.mxu0 0.0
    %2364 = vmatprep.subr.mxu0 0.0
    %2365 = vmatpush1.msra.mxu0 0.0
    %2366 = vmatprep.subr.mxu0 0.0
    %2367 = vmatpush1.msra.mxu0 0.0
    %2368 = vmatprep.subr.mxu0 0.0
    %2369 = vmatpush1.msra.mxu0 0.0
    %2370 = vmatprep.subr.mxu0 0.0
    %2371 = vmatpush1.msra.mxu0 0.0
    %2372 = vmatprep.subr.mxu0 0.0
    %2373 = vmatpush1.msra.mxu0 0.0
    %2374 = vmatprep.subr.mxu0 0.0
    %2375 = vmatpush1.msra.mxu0 0.0
    %2376 = vmatprep.subr.mxu0 0.0
    %2377 = vmatpush1.msra.mxu0 0.0
    %2378 = vmatprep.subr.mxu0 0.0
    %2379 = vmatpush1.msra.mxu0 0.0
    %2380 = vmatprep.subr.mxu0 0.0
    %2381 = vmatpush1.msra.mxu0 0.0
    %2382 = vmatprep.subr.mxu0 0.0
    %2383 = vmatpush1.msra.mxu0 0.0
    %2384 = vmatprep.subr.mxu0 0.0
    %2385 = vmatpush1.msra.mxu0 0.0
    %2386 = vmatprep.subr.mxu0 0.0
    %2387 = vmatpush1.msra.mxu0 0.0
    %2388 = vmatprep.subr.mxu0 0.0
    %2389 = vmatpush1.msra.mxu0 0.0
    %2390 = vmatprep.subr.mxu0 0.0
    %2391 = vmatpush1.msra.mxu0 0.0
    %2392 = vmatprep.subr.mxu0 0.0
    %2393 = vmatpush1.msra.mxu0 0.0
    %2394 = vmatprep.subr.mxu0 0.0
    %2395 = vmatpush1.msra.mxu0 0.0
    %2396 = vmatprep.mubr.f32.mxu0 0.0
    %2397 = vmatmul.mubr.f32.gmra.mrb[0].mxu0 %v2096
    %v2398 = vpop.f32.mrb[0].mxu0
    %v2399 = vadd.f32 0.0, %v2398
    %v2400 = vpop.f32.mrb[0].mxu0
    %v2401 = vadd.f32 0.0, %v2400
    %2402 = vmatprep.mubr.f32.mxu0 0.0
    %2403 = vmatmul.mubr.f32.gmra.mrb[0].mxu0 %v2099
    %v2404 = vpop.f32.mrb[0].mxu0
    %v2405 = vadd.f32 0.0, %v2404
    %v2406 = vpop.f32.mrb[0].mxu0
    %v2407 = vadd.f32 0.0, %v2406
    %2408 = vdwg.mxu0
    %v2409 = vadd.f32 %v1851, %v2168
    %v2410 = vadd.f32 %v1853, %v2170
    %v2411 = vadd.f32 %v1928, %v2245
    %v2412 = vadd.f32 %v1930, %v2247
    %v2413 = vadd.f32 %v2005, %v2322
    %v2414 = vadd.f32 %v2007, %v2324
    %v2415 = vadd.f32 %v2082, %v2399
    %v2416 = vadd.f32 %v2084, %v2401
    %v2417 = vadd.f32 %v1857, %v2174
    %v2418 = vadd.f32 %v1859, %v2176
    %v2419 = vadd.f32 %v1934, %v2251
    %v2420 = vadd.f32 %v1936, %v2253
    %v2421 = vadd.f32 %v2011, %v2328
    %v2422 = vadd.f32 %v2013, %v2330
    %v2423 = vadd.f32 %v2088, %v2405
    %v2424 = vadd.f32 %v2090, %v2407
    %s2425 = scalar_lea.vmem %s2, 48
    %v2426 = vld [vmem:[%s2425] sm:$0xff]
    %v2427 = vld [vmem:[%s2425 + $0x8] sm:$0xff]
    %v2429 = vsel %vm595, %v2426, 0
    %v2432 = vsel %vm595, %v2427, 0
    %2434 = vmatprep.subr.mxu0 %v1452
    %2435 = vmatpush1.msra.mxu0 %v1451
    %2436 = vmatprep.subr.mxu0 0.0
    %2437 = vmatpush1.msra.mxu0 0.0
    %2438 = vmatprep.subr.mxu0 0.0
    %2439 = vmatpush1.msra.mxu0 0.0
    %2440 = vmatprep.subr.mxu0 0.0
    %2441 = vmatpush1.msra.mxu0 0.0
    %2442 = vmatprep.subr.mxu0 0.0
    %2443 = vmatpush1.msra.mxu0 0.0
    %2444 = vmatprep.subr.mxu0 0.0
    %2445 = vmatpush1.msra.mxu0 0.0
    %2446 = vmatprep.subr.mxu0 0.0
    %2447 = vmatpush1.msra.mxu0 0.0
    %2448 = vmatprep.subr.mxu0 0.0
    %2449 = vmatpush1.msra.mxu0 0.0
    %2450 = vmatprep.subr.mxu0 0.0
    %2451 = vmatpush1.msra.mxu0 0.0
    %2452 = vmatprep.subr.mxu0 0.0
    %2453 = vmatpush1.msra.mxu0 0.0
    %2454 = vmatprep.subr.mxu0 0.0
    %2455 = vmatpush1.msra.mxu0 0.0
    %2456 = vmatprep.subr.mxu0 0.0
    %2457 = vmatpush1.msra.mxu0 0.0
    %2458 = vmatprep.subr.mxu0 0.0
    %2459 = vmatpush1.msra.mxu0 0.0
    %2460 = vmatprep.subr.mxu0 0.0
    %2461 = vmatpush1.msra.mxu0 0.0
    %2462 = vmatprep.subr.mxu0 0.0
    %2463 = vmatpush1.msra.mxu0 0.0
    %2464 = vmatprep.subr.mxu0 0.0
    %2465 = vmatpush1.msra.mxu0 0.0
    %2466 = vmatprep.subr.mxu0 0.0
    %2467 = vmatpush1.msra.mxu0 0.0
    %2468 = vmatprep.subr.mxu0 0.0
    %2469 = vmatpush1.msra.mxu0 0.0
    %2470 = vmatprep.subr.mxu0 0.0
    %2471 = vmatpush1.msra.mxu0 0.0
    %2472 = vmatprep.subr.mxu0 0.0
    %2473 = vmatpush1.msra.mxu0 0.0
    %2474 = vmatprep.subr.mxu0 0.0
    %2475 = vmatpush1.msra.mxu0 0.0
    %2476 = vmatprep.subr.mxu0 0.0
    %2477 = vmatpush1.msra.mxu0 0.0
    %2478 = vmatprep.subr.mxu0 0.0
    %2479 = vmatpush1.msra.mxu0 0.0
    %2480 = vmatprep.subr.mxu0 0.0
    %2481 = vmatpush1.msra.mxu0 0.0
    %2482 = vmatprep.subr.mxu0 0.0
    %2483 = vmatpush1.msra.mxu0 0.0
    %2484 = vmatprep.subr.mxu0 0.0
    %2485 = vmatpush1.msra.mxu0 0.0
    %2486 = vmatprep.subr.mxu0 0.0
    %2487 = vmatpush1.msra.mxu0 0.0
    %2488 = vmatprep.subr.mxu0 0.0
    %2489 = vmatpush1.msra.mxu0 0.0
    %2490 = vmatprep.subr.mxu0 0.0
    %2491 = vmatpush1.msra.mxu0 0.0
    %2492 = vmatprep.subr.mxu0 0.0
    %2493 = vmatpush1.msra.mxu0 0.0
    %2494 = vmatprep.subr.mxu0 0.0
    %2495 = vmatpush1.msra.mxu0 0.0
    %2496 = vmatprep.subr.mxu0 0.0
    %2497 = vmatpush1.msra.mxu0 0.0
    %2498 = vmatprep.mubr.f32.mxu0 0.0
    %2499 = vmatmul.mubr.f32.gmra.mrb[0].mxu0 %v2429
    %v2500 = vpop.f32.mrb[0].mxu0
    %v2501 = vadd.f32 0.0, %v2500
    %v2502 = vpop.f32.mrb[0].mxu0
    %v2503 = vadd.f32 0.0, %v2502
    %2504 = vmatprep.mubr.f32.mxu0 0.0
    %2505 = vmatmul.mubr.f32.gmra.mrb[0].mxu0 %v2432
    %v2506 = vpop.f32.mrb[0].mxu0
    %v2507 = vadd.f32 0.0, %v2506
    %v2508 = vpop.f32.mrb[0].mxu0
    %v2509 = vadd.f32 0.0, %v2508
    %2510 = vdwg.mxu0
    %2511 = vmatprep.subr.mxu0 %v1454
    %2512 = vmatpush1.msra.mxu0 %v1453
    %2513 = vmatprep.subr.mxu0 0.0
    %2514 = vmatpush1.msra.mxu0 0.0
    %2515 = vmatprep.subr.mxu0 0.0
    %2516 = vmatpush1.msra.mxu0 0.0
    %2517 = vmatprep.subr.mxu0 0.0
    %2518 = vmatpush1.msra.mxu0 0.0
    %2519 = vmatprep.subr.mxu0 0.0
    %2520 = vmatpush1.msra.mxu0 0.0
    %2521 = vmatprep.subr.mxu0 0.0
    %2522 = vmatpush1.msra.mxu0 0.0
    %2523 = vmatprep.subr.mxu0 0.0
    %2524 = vmatpush1.msra.mxu0 0.0
    %2525 = vmatprep.subr.mxu0 0.0
    %2526 = vmatpush1.msra.mxu0 0.0
    %2527 = vmatprep.subr.mxu0 0.0
    %2528 = vmatpush1.msra.mxu0 0.0
    %2529 = vmatprep.subr.mxu0 0.0
    %2530 = vmatpush1.msra.mxu0 0.0
    %2531 = vmatprep.subr.mxu0 0.0
    %2532 = vmatpush1.msra.mxu0 0.0
    %2533 = vmatprep.subr.mxu0 0.0
    %2534 = vmatpush1.msra.mxu0 0.0
    %2535 = vmatprep.subr.mxu0 0.0
    %2536 = vmatpush1.msra.mxu0 0.0
    %2537 = vmatprep.subr.mxu0 0.0
    %2538 = vmatpush1.msra.mxu0 0.0
    %2539 = vmatprep.subr.mxu0 0.0
    %2540 = vmatpush1.msra.mxu0 0.0
    %2541 = vmatprep.subr.mxu0 0.0
    %2542 = vmatpush1.msra.mxu0 0.0
    %2543 = vmatprep.subr.mxu0 0.0
    %2544 = vmatpush1.msra.mxu0 0.0
    %2545 = vmatprep.subr.mxu0 0.0
    %2546 = vmatpush1.msra.mxu0 0.0
    %2547 = vmatprep.subr.mxu0 0.0
    %2548 = vmatpush1.msra.mxu0 0.0
    %2549 = vmatprep.subr.mxu0 0.0
    %2550 = vmatpush1.msra.mxu0 0.0
    %2551 = vmatprep.subr.mxu0 0.0
    %2552 = vmatpush1.msra.mxu0 0.0
    %2553 = vmatprep.subr.mxu0 0.0
    %2554 = vmatpush1.msra.mxu0 0.0
    %2555 = vmatprep.subr.mxu0 0.0
    %2556 = vmatpush1.msra.mxu0 0.0
    %2557 = vmatprep.subr.mxu0 0.0
    %2558 = vmatpush1.msra.mxu0 0.0
    %2559 = vmatprep.subr.mxu0 0.0
    %2560 = vmatpush1.msra.mxu0 0.0
    %2561 = vmatprep.subr.mxu0 0.0
    %2562 = vmatpush1.msra.mxu0 0.0
    %2563 = vmatprep.subr.mxu0 0.0
    %2564 = vmatpush1.msra.mxu0 0.0
    %2565 = vmatprep.subr.mxu0 0.0
    %2566 = vmatpush1.msra.mxu0 0.0
    %2567 = vmatprep.subr.mxu0 0.0
    %2568 = vmatpush1.msra.mxu0 0.0
    %2569 = vmatprep.subr.mxu0 0.0
    %2570 = vmatpush1.msra.mxu0 0.0
    %2571 = vmatprep.subr.mxu0 0.0
    %2572 = vmatpush1.msra.mxu0 0.0
    %2573 = vmatprep.subr.mxu0 0.0
    %2574 = vmatpush1.msra.mxu0 0.0
    %2575 = vmatprep.mubr.f32.mxu0 0.0
    %2576 = vmatmul.mubr.f32.gmra.mrb[0].mxu0 %v2429
    %v2577 = vpop.f32.mrb[0].mxu0
    %v2578 = vadd.f32 0.0, %v2577
    %v2579 = vpop.f32.mrb[0].mxu0
    %v2580 = vadd.f32 0.0, %v2579
    %2581 = vmatprep.mubr.f32.mxu0 0.0
    %2582 = vmatmul.mubr.f32.gmra.mrb[0].mxu0 %v2432
    %v2583 = vpop.f32.mrb[0].mxu0
    %v2584 = vadd.f32 0.0, %v2583
    %v2585 = vpop.f32.mrb[0].mxu0
    %v2586 = vadd.f32 0.0, %v2585
    %2587 = vdwg.mxu0
    %2588 = vmatprep.subr.mxu0 %v1456
    %2589 = vmatpush1.msra.mxu0 %v1455
    %2590 = vmatprep.subr.mxu0 0.0
    %2591 = vmatpush1.msra.mxu0 0.0
    %2592 = vmatprep.subr.mxu0 0.0
    %2593 = vmatpush1.msra.mxu0 0.0
    %2594 = vmatprep.subr.mxu0 0.0
    %2595 = vmatpush1.msra.mxu0 0.0
    %2596 = vmatprep.subr.mxu0 0.0
    %2597 = vmatpush1.msra.mxu0 0.0
    %2598 = vmatprep.subr.mxu0 0.0
    %2599 = vmatpush1.msra.mxu0 0.0
    %2600 = vmatprep.subr.mxu0 0.0
    %2601 = vmatpush1.msra.mxu0 0.0
    %2602 = vmatprep.subr.mxu0 0.0
    %2603 = vmatpush1.msra.mxu0 0.0
    %2604 = vmatprep.subr.mxu0 0.0
    %2605 = vmatpush1.msra.mxu0 0.0
    %2606 = vmatprep.subr.mxu0 0.0
    %2607 = vmatpush1.msra.mxu0 0.0
    %2608 = vmatprep.subr.mxu0 0.0
    %2609 = vmatpush1.msra.mxu0 0.0
    %2610 = vmatprep.subr.mxu0 0.0
    %2611 = vmatpush1.msra.mxu0 0.0
    %2612 = vmatprep.subr.mxu0 0.0
    %2613 = vmatpush1.msra.mxu0 0.0
    %2614 = vmatprep.subr.mxu0 0.0
    %2615 = vmatpush1.msra.mxu0 0.0
    %2616 = vmatprep.subr.mxu0 0.0
    %2617 = vmatpush1.msra.mxu0 0.0
    %2618 = vmatprep.subr.mxu0 0.0
    %2619 = vmatpush1.msra.mxu0 0.0
    %2620 = vmatprep.subr.mxu0 0.0
    %2621 = vmatpush1.msra.mxu0 0.0
    %2622 = vmatprep.subr.mxu0 0.0
    %2623 = vmatpush1.msra.mxu0 0.0
    %2624 = vmatprep.subr.mxu0 0.0
    %2625 = vmatpush1.msra.mxu0 0.0
    %2626 = vmatprep.subr.mxu0 0.0
    %2627 = vmatpush1.msra.mxu0 0.0
    %2628 = vmatprep.subr.mxu0 0.0
    %2629 = vmatpush1.msra.mxu0 0.0
    %2630 = vmatprep.subr.mxu0 0.0
    %2631 = vmatpush1.msra.mxu0 0.0
    %2632 = vmatprep.subr.mxu0 0.0
    %2633 = vmatpush1.msra.mxu0 0.0
    %2634 = vmatprep.subr.mxu0 0.0
    %2635 = vmatpush1.msra.mxu0 0.0
    %2636 = vmatprep.subr.mxu0 0.0
    %2637 = vmatpush1.msra.mxu0 0.0
    %2638 = vmatprep.subr.mxu0 0.0
    %2639 = vmatpush1.msra.mxu0 0.0
    %2640 = vmatprep.subr.mxu0 0.0
    %2641 = vmatpush1.msra.mxu0 0.0
    %2642 = vmatprep.subr.mxu0 0.0
    %2643 = vmatpush1.msra.mxu0 0.0
    %2644 = vmatprep.subr.mxu0 0.0
    %2645 = vmatpush1.msra.mxu0 0.0
    %2646 = vmatprep.subr.mxu0 0.0
    %2647 = vmatpush1.msra.mxu0 0.0
    %2648 = vmatprep.subr.mxu0 0.0
    %2649 = vmatpush1.msra.mxu0 0.0
    %2650 = vmatprep.subr.mxu0 0.0
    %2651 = vmatpush1.msra.mxu0 0.0
    %2652 = vmatprep.mubr.f32.mxu0 0.0
    %2653 = vmatmul.mubr.f32.gmra.mrb[0].mxu0 %v2429
    %v2654 = vpop.f32.mrb[0].mxu0
    %v2655 = vadd.f32 0.0, %v2654
    %v2656 = vpop.f32.mrb[0].mxu0
    %v2657 = vadd.f32 0.0, %v2656
    %2658 = vmatprep.mubr.f32.mxu0 0.0
    %2659 = vmatmul.mubr.f32.gmra.mrb[0].mxu0 %v2432
    %v2660 = vpop.f32.mrb[0].mxu0
    %v2661 = vadd.f32 0.0, %v2660
    %v2662 = vpop.f32.mrb[0].mxu0
    %v2663 = vadd.f32 0.0, %v2662
    %2664 = vdwg.mxu0
    %2665 = vmatprep.subr.mxu0 %v1458
    %2666 = vmatpush1.msra.mxu0 %v1457
    %2667 = vmatprep.subr.mxu0 0.0
    %2668 = vmatpush1.msra.mxu0 0.0
    %2669 = vmatprep.subr.mxu0 0.0
    %2670 = vmatpush1.msra.mxu0 0.0
    %2671 = vmatprep.subr.mxu0 0.0
    %2672 = vmatpush1.msra.mxu0 0.0
    %2673 = vmatprep.subr.mxu0 0.0
    %2674 = vmatpush1.msra.mxu0 0.0
    %2675 = vmatprep.subr.mxu0 0.0
    %2676 = vmatpush1.msra.mxu0 0.0
    %2677 = vmatprep.subr.mxu0 0.0
    %2678 = vmatpush1.msra.mxu0 0.0
    %2679 = vmatprep.subr.mxu0 0.0
    %2680 = vmatpush1.msra.mxu0 0.0
    %2681 = vmatprep.subr.mxu0 0.0
    %2682 = vmatpush1.msra.mxu0 0.0
    %2683 = vmatprep.subr.mxu0 0.0
    %2684 = vmatpush1.msra.mxu0 0.0
    %2685 = vmatprep.subr.mxu0 0.0
    %2686 = vmatpush1.msra.mxu0 0.0
    %2687 = vmatprep.subr.mxu0 0.0
    %2688 = vmatpush1.msra.mxu0 0.0
    %2689 = vmatprep.subr.mxu0 0.0
    %2690 = vmatpush1.msra.mxu0 0.0
    %2691 = vmatprep.subr.mxu0 0.0
    %2692 = vmatpush1.msra.mxu0 0.0
    %2693 = vmatprep.subr.mxu0 0.0
    %2694 = vmatpush1.msra.mxu0 0.0
    %2695 = vmatprep.subr.mxu0 0.0
    %2696 = vmatpush1.msra.mxu0 0.0
    %2697 = vmatprep.subr.mxu0 0.0
    %2698 = vmatpush1.msra.mxu0 0.0
    %2699 = vmatprep.subr.mxu0 0.0
    %2700 = vmatpush1.msra.mxu0 0.0
    %2701 = vmatprep.subr.mxu0 0.0
    %2702 = vmatpush1.msra.mxu0 0.0
    %2703 = vmatprep.subr.mxu0 0.0
    %2704 = vmatpush1.msra.mxu0 0.0
    %2705 = vmatprep.subr.mxu0 0.0
    %2706 = vmatpush1.msra.mxu0 0.0
    %2707 = vmatprep.subr.mxu0 0.0
    %2708 = vmatpush1.msra.mxu0 0.0
    %2709 = vmatprep.subr.mxu0 0.0
    %2710 = vmatpush1.msra.mxu0 0.0
    %2711 = vmatprep.subr.mxu0 0.0
    %2712 = vmatpush1.msra.mxu0 0.0
    %2713 = vmatprep.subr.mxu0 0.0
    %2714 = vmatpush1.msra.mxu0 0.0
    %2715 = vmatprep.subr.mxu0 0.0
    %2716 = vmatpush1.msra.mxu0 0.0
    %2717 = vmatprep.subr.mxu0 0.0
    %2718 = vmatpush1.msra.mxu0 0.0
    %2719 = vmatprep.subr.mxu0 0.0
    %2720 = vmatpush1.msra.mxu0 0.0
    %2721 = vmatprep.subr.mxu0 0.0
    %2722 = vmatpush1.msra.mxu0 0.0
    %2723 = vmatprep.subr.mxu0 0.0
    %2724 = vmatpush1.msra.mxu0 0.0
    %2725 = vmatprep.subr.mxu0 0.0
    %2726 = vmatpush1.msra.mxu0 0.0
    %2727 = vmatprep.subr.mxu0 0.0
    %2728 = vmatpush1.msra.mxu0 0.0
    %2729 = vmatprep.mubr.f32.mxu0 0.0
    %2730 = vmatmul.mubr.f32.gmra.mrb[0].mxu0 %v2429
    %v2731 = vpop.f32.mrb[0].mxu0
    %v2732 = vadd.f32 0.0, %v2731
    %v2733 = vpop.f32.mrb[0].mxu0
    %v2734 = vadd.f32 0.0, %v2733
    %2735 = vmatprep.mubr.f32.mxu0 0.0
    %2736 = vmatmul.mubr.f32.gmra.mrb[0].mxu0 %v2432
    %v2737 = vpop.f32.mrb[0].mxu0
    %v2738 = vadd.f32 0.0, %v2737
    %v2739 = vpop.f32.mrb[0].mxu0
    %v2740 = vadd.f32 0.0, %v2739
    %2741 = vdwg.mxu0
    %v2742 = vadd.f32 %v2409, %v2501
    %v2743 = vadd.f32 %v2410, %v2503
    %v2744 = vadd.f32 %v2411, %v2578
    %v2745 = vadd.f32 %v2412, %v2580
    %v2746 = vadd.f32 %v2413, %v2655
    %v2747 = vadd.f32 %v2414, %v2657
    %v2748 = vadd.f32 %v2415, %v2732
    %v2749 = vadd.f32 %v2416, %v2734
    %v2750 = vadd.f32 %v2417, %v2507
    %v2751 = vadd.f32 %v2418, %v2509
    %v2752 = vadd.f32 %v2419, %v2584
    %v2753 = vadd.f32 %v2420, %v2586
    %v2754 = vadd.f32 %v2421, %v2661
    %v2755 = vadd.f32 %v2422, %v2663
    %v2756 = vadd.f32 %v2423, %v2738
    %v2757 = vadd.f32 %v2424, %v2740
    %v2758 = vld [vmem:[%s5] sm:$0xff]
    %v2759 = vld [vmem:[%s5 + $0x8] sm:$0xff]
    %v2760 = vld [vmem:[%s8] sm:$0xff]
    %v2761 = vld [vmem:[%s8 + $0x8] sm:$0xff]
    %v2762 = vld [vmem:[%s9] sm:$0xff]
    %v2763 = vld [vmem:[%s9 + $0x8] sm:$0xff]
    %vm2764 = vcmask 130048
    %v2766 = vsel %vm2764, %v2758, 0
    %v2769 = vsel %vm2764, %v2759, 0
    %2771 = vmatprep.subr.mxu0 %v2743
    %2772 = vmatpush1.msra.mxu0 %v2742
    %2773 = vmatprep.subr.mxu0 %v2751
    %2774 = vmatpush1.msra.mxu0 %v2750
    %2775 = vmatprep.subr.mxu0 0.0
    %2776 = vmatpush1.msra.mxu0 0.0
    %2777 = vmatprep.subr.mxu0 0.0
    %2778 = vmatpush1.msra.mxu0 0.0
    %2779 = vmatprep.subr.mxu0 0.0
    %2780 = vmatpush1.msra.mxu0 0.0
    %2781 = vmatprep.subr.mxu0 0.0
    %2782 = vmatpush1.msra.mxu0 0.0
    %2783 = vmatprep.subr.mxu0 0.0
    %2784 = vmatpush1.msra.mxu0 0.0
    %2785 = vmatprep.subr.mxu0 0.0
    %2786 = vmatpush1.msra.mxu0 0.0
    %2787 = vmatprep.subr.mxu0 0.0
    %2788 = vmatpush1.msra.mxu0 0.0
    %2789 = vmatprep.subr.mxu0 0.0
    %2790 = vmatpush1.msra.mxu0 0.0
    %2791 = vmatprep.subr.mxu0 0.0
    %2792 = vmatpush1.msra.mxu0 0.0
    %2793 = vmatprep.subr.mxu0 0.0
    %2794 = vmatpush1.msra.mxu0 0.0
    %2795 = vmatprep.subr.mxu0 0.0
    %2796 = vmatpush1.msra.mxu0 0.0
    %2797 = vmatprep.subr.mxu0 0.0
    %2798 = vmatpush1.msra.mxu0 0.0
    %2799 = vmatprep.subr.mxu0 0.0
    %2800 = vmatpush1.msra.mxu0 0.0
    %2801 = vmatprep.subr.mxu0 0.0
    %2802 = vmatpush1.msra.mxu0 0.0
    %2803 = vmatprep.subr.mxu0 0.0
    %2804 = vmatpush1.msra.mxu0 0.0
    %2805 = vmatprep.subr.mxu0 0.0
    %2806 = vmatpush1.msra.mxu0 0.0
    %2807 = vmatprep.subr.mxu0 0.0
    %2808 = vmatpush1.msra.mxu0 0.0
    %2809 = vmatprep.subr.mxu0 0.0
    %2810 = vmatpush1.msra.mxu0 0.0
    %2811 = vmatprep.subr.mxu0 0.0
    %2812 = vmatpush1.msra.mxu0 0.0
    %2813 = vmatprep.subr.mxu0 0.0
    %2814 = vmatpush1.msra.mxu0 0.0
    %2815 = vmatprep.subr.mxu0 0.0
    %2816 = vmatpush1.msra.mxu0 0.0
    %2817 = vmatprep.subr.mxu0 0.0
    %2818 = vmatpush1.msra.mxu0 0.0
    %2819 = vmatprep.subr.mxu0 0.0
    %2820 = vmatpush1.msra.mxu0 0.0
    %2821 = vmatprep.subr.mxu0 0.0
    %2822 = vmatpush1.msra.mxu0 0.0
    %2823 = vmatprep.subr.mxu0 0.0
    %2824 = vmatpush1.msra.mxu0 0.0
    %2825 = vmatprep.subr.mxu0 0.0
    %2826 = vmatpush1.msra.mxu0 0.0
    %2827 = vmatprep.subr.mxu0 0.0
    %2828 = vmatpush1.msra.mxu0 0.0
    %2829 = vmatprep.subr.mxu0 0.0
    %2830 = vmatpush1.msra.mxu0 0.0
    %2831 = vmatprep.subr.mxu0 0.0
    %2832 = vmatpush1.msra.mxu0 0.0
    %2833 = vmatprep.subr.mxu0 0.0
    %2834 = vmatpush1.msra.mxu0 0.0
    %2835 = vmatprep.mubr.f32.mxu0 0.0
    %2836 = vmatmul.mubr.f32.gmra.mrb[0].mxu0 %v2766
    %v2837 = vpop.f32.mrb[0].mxu0
    %v2838 = vadd.f32 0.0, %v2837
    %v2839 = vpop.f32.mrb[0].mxu0
    %v2840 = vadd.f32 0.0, %v2839
    %2841 = vmatprep.mubr.f32.mxu0 0.0
    %2842 = vmatmul.mubr.f32.gmra.mrb[0].mxu0 %v2769
    %v2843 = vpop.f32.mrb[0].mxu0
    %v2844 = vadd.f32 0.0, %v2843
    %v2845 = vpop.f32.mrb[0].mxu0
    %v2846 = vadd.f32 0.0, %v2845
    %2847 = vdwg.mxu0
    %2848 = vmatprep.subr.mxu0 %v2745
    %2849 = vmatpush1.msra.mxu0 %v2744
    %2850 = vmatprep.subr.mxu0 %v2753
    %2851 = vmatpush1.msra.mxu0 %v2752
    %2852 = vmatprep.subr.mxu0 0.0
    %2853 = vmatpush1.msra.mxu0 0.0
    %2854 = vmatprep.subr.mxu0 0.0
    %2855 = vmatpush1.msra.mxu0 0.0
    %2856 = vmatprep.subr.mxu0 0.0
    %2857 = vmatpush1.msra.mxu0 0.0
    %2858 = vmatprep.subr.mxu0 0.0
    %2859 = vmatpush1.msra.mxu0 0.0
    %2860 = vmatprep.subr.mxu0 0.0
    %2861 = vmatpush1.msra.mxu0 0.0
    %2862 = vmatprep.subr.mxu0 0.0
    %2863 = vmatpush1.msra.mxu0 0.0
    %2864 = vmatprep.subr.mxu0 0.0
    %2865 = vmatpush1.msra.mxu0 0.0
    %2866 = vmatprep.subr.mxu0 0.0
    %2867 = vmatpush1.msra.mxu0 0.0
    %2868 = vmatprep.subr.mxu0 0.0
    %2869 = vmatpush1.msra.mxu0 0.0
    %2870 = vmatprep.subr.mxu0 0.0
    %2871 = vmatpush1.msra.mxu0 0.0
    %2872 = vmatprep.subr.mxu0 0.0
    %2873 = vmatpush1.msra.mxu0 0.0
    %2874 = vmatprep.subr.mxu0 0.0
    %2875 = vmatpush1.msra.mxu0 0.0
    %2876 = vmatprep.subr.mxu0 0.0
    %2877 = vmatpush1.msra.mxu0 0.0
    %2878 = vmatprep.subr.mxu0 0.0
    %2879 = vmatpush1.msra.mxu0 0.0
    %2880 = vmatprep.subr.mxu0 0.0
    %2881 = vmatpush1.msra.mxu0 0.0
    %2882 = vmatprep.subr.mxu0 0.0
    %2883 = vmatpush1.msra.mxu0 0.0
    %2884 = vmatprep.subr.mxu0 0.0
    %2885 = vmatpush1.msra.mxu0 0.0
    %2886 = vmatprep.subr.mxu0 0.0
    %2887 = vmatpush1.msra.mxu0 0.0
    %2888 = vmatprep.subr.mxu0 0.0
    %2889 = vmatpush1.msra.mxu0 0.0
    %2890 = vmatprep.subr.mxu0 0.0
    %2891 = vmatpush1.msra.mxu0 0.0
    %2892 = vmatprep.subr.mxu0 0.0
    %2893 = vmatpush1.msra.mxu0 0.0
    %2894 = vmatprep.subr.mxu0 0.0
    %2895 = vmatpush1.msra.mxu0 0.0
    %2896 = vmatprep.subr.mxu0 0.0
    %2897 = vmatpush1.msra.mxu0 0.0
    %2898 = vmatprep.subr.mxu0 0.0
    %2899 = vmatpush1.msra.mxu0 0.0
    %2900 = vmatprep.subr.mxu0 0.0
    %2901 = vmatpush1.msra.mxu0 0.0
    %2902 = vmatprep.subr.mxu0 0.0
    %2903 = vmatpush1.msra.mxu0 0.0
    %2904 = vmatprep.subr.mxu0 0.0
    %2905 = vmatpush1.msra.mxu0 0.0
    %2906 = vmatprep.subr.mxu0 0.0
    %2907 = vmatpush1.msra.mxu0 0.0
    %2908 = vmatprep.subr.mxu0 0.0
    %2909 = vmatpush1.msra.mxu0 0.0
    %2910 = vmatprep.subr.mxu0 0.0
    %2911 = vmatpush1.msra.mxu0 0.0
    %2912 = vmatprep.mubr.f32.mxu0 0.0
    %2913 = vmatmul.mubr.f32.gmra.mrb[0].mxu0 %v2766
    %v2914 = vpop.f32.mrb[0].mxu0
    %v2915 = vadd.f32 0.0, %v2914
    %v2916 = vpop.f32.mrb[0].mxu0
    %v2917 = vadd.f32 0.0, %v2916
    %2918 = vmatprep.mubr.f32.mxu0 0.0
    %2919 = vmatmul.mubr.f32.gmra.mrb[0].mxu0 %v2769
    %v2920 = vpop.f32.mrb[0].mxu0
    %v2921 = vadd.f32 0.0, %v2920
    %v2922 = vpop.f32.mrb[0].mxu0
    %v2923 = vadd.f32 0.0, %v2922
    %2924 = vdwg.mxu0
    %2925 = vmatprep.subr.mxu0 %v2747
    %2926 = vmatpush1.msra.mxu0 %v2746
    %2927 = vmatprep.subr.mxu0 %v2755
    %2928 = vmatpush1.msra.mxu0 %v2754
    %2929 = vmatprep.subr.mxu0 0.0
    %2930 = vmatpush1.msra.mxu0 0.0
    %2931 = vmatprep.subr.mxu0 0.0
    %2932 = vmatpush1.msra.mxu0 0.0
    %2933 = vmatprep.subr.mxu0 0.0
    %2934 = vmatpush1.msra.mxu0 0.0
    %2935 = vmatprep.subr.mxu0 0.0
    %2936 = vmatpush1.msra.mxu0 0.0
    %2937 = vmatprep.subr.mxu0 0.0
    %2938 = vmatpush1.msra.mxu0 0.0
    %2939 = vmatprep.subr.mxu0 0.0
    %2940 = vmatpush1.msra.mxu0 0.0
    %2941 = vmatprep.subr.mxu0 0.0
    %2942 = vmatpush1.msra.mxu0 0.0
    %2943 = vmatprep.subr.mxu0 0.0
    %2944 = vmatpush1.msra.mxu0 0.0
    %2945 = vmatprep.subr.mxu0 0.0
    %2946 = vmatpush1.msra.mxu0 0.0
    %2947 = vmatprep.subr.mxu0 0.0
    %2948 = vmatpush1.msra.mxu0 0.0
    %2949 = vmatprep.subr.mxu0 0.0
    %2950 = vmatpush1.msra.mxu0 0.0
    %2951 = vmatprep.subr.mxu0 0.0
    %2952 = vmatpush1.msra.mxu0 0.0
    %2953 = vmatprep.subr.mxu0 0.0
    %2954 = vmatpush1.msra.mxu0 0.0
    %2955 = vmatprep.subr.mxu0 0.0
    %2956 = vmatpush1.msra.mxu0 0.0
    %2957 = vmatprep.subr.mxu0 0.0
    %2958 = vmatpush1.msra.mxu0 0.0
    %2959 = vmatprep.subr.mxu0 0.0
    %2960 = vmatpush1.msra.mxu0 0.0
    %2961 = vmatprep.subr.mxu0 0.0
    %2962 = vmatpush1.msra.mxu0 0.0
    %2963 = vmatprep.subr.mxu0 0.0
    %2964 = vmatpush1.msra.mxu0 0.0
    %2965 = vmatprep.subr.mxu0 0.0
    %2966 = vmatpush1.msra.mxu0 0.0
    %2967 = vmatprep.subr.mxu0 0.0
    %2968 = vmatpush1.msra.mxu0 0.0
    %2969 = vmatprep.subr.mxu0 0.0
    %2970 = vmatpush1.msra.mxu0 0.0
    %2971 = vmatprep.subr.mxu0 0.0
    %2972 = vmatpush1.msra.mxu0 0.0
    %2973 = vmatprep.subr.mxu0 0.0
    %2974 = vmatpush1.msra.mxu0 0.0
    %2975 = vmatprep.subr.mxu0 0.0
    %2976 = vmatpush1.msra.mxu0 0.0
    %2977 = vmatprep.subr.mxu0 0.0
    %2978 = vmatpush1.msra.mxu0 0.0
    %2979 = vmatprep.subr.mxu0 0.0
    %2980 = vmatpush1.msra.mxu0 0.0
    %2981 = vmatprep.subr.mxu0 0.0
    %2982 = vmatpush1.msra.mxu0 0.0
    %2983 = vmatprep.subr.mxu0 0.0
    %2984 = vmatpush1.msra.mxu0 0.0
    %2985 = vmatprep.subr.mxu0 0.0
    %2986 = vmatpush1.msra.mxu0 0.0
    %2987 = vmatprep.subr.mxu0 0.0
    %2988 = vmatpush1.msra.mxu0 0.0
    %2989 = vmatprep.mubr.f32.mxu0 0.0
    %2990 = vmatmul.mubr.f32.gmra.mrb[0].mxu0 %v2766
    %v2991 = vpop.f32.mrb[0].mxu0
    %v2992 = vadd.f32 0.0, %v2991
    %v2993 = vpop.f32.mrb[0].mxu0
    %v2994 = vadd.f32 0.0, %v2993
    %2995 = vmatprep.mubr.f32.mxu0 0.0
    %2996 = vmatmul.mubr.f32.gmra.mrb[0].mxu0 %v2769
    %v2997 = vpop.f32.mrb[0].mxu0
    %v2998 = vadd.f32 0.0, %v2997
    %v2999 = vpop.f32.mrb[0].mxu0
    %v3000 = vadd.f32 0.0, %v2999
    %3001 = vdwg.mxu0
    %3002 = vmatprep.subr.mxu0 %v2749
    %3003 = vmatpush1.msra.mxu0 %v2748
    %3004 = vmatprep.subr.mxu0 %v2757
    %3005 = vmatpush1.msra.mxu0 %v2756
    %3006 = vmatprep.subr.mxu0 0.0
    %3007 = vmatpush1.msra.mxu0 0.0
    %3008 = vmatprep.subr.mxu0 0.0
    %3009 = vmatpush1.msra.mxu0 0.0
    %3010 = vmatprep.subr.mxu0 0.0
    %3011 = vmatpush1.msra.mxu0 0.0
    %3012 = vmatprep.subr.mxu0 0.0
    %3013 = vmatpush1.msra.mxu0 0.0
    %3014 = vmatprep.subr.mxu0 0.0
    %3015 = vmatpush1.msra.mxu0 0.0
    %3016 = vmatprep.subr.mxu0 0.0
    %3017 = vmatpush1.msra.mxu0 0.0
    %3018 = vmatprep.subr.mxu0 0.0
    %3019 = vmatpush1.msra.mxu0 0.0
    %3020 = vmatprep.subr.mxu0 0.0
    %3021 = vmatpush1.msra.mxu0 0.0
    %3022 = vmatprep.subr.mxu0 0.0
    %3023 = vmatpush1.msra.mxu0 0.0
    %3024 = vmatprep.subr.mxu0 0.0
    %3025 = vmatpush1.msra.mxu0 0.0
    %3026 = vmatprep.subr.mxu0 0.0
    %3027 = vmatpush1.msra.mxu0 0.0
    %3028 = vmatprep.subr.mxu0 0.0
    %3029 = vmatpush1.msra.mxu0 0.0
    %3030 = vmatprep.subr.mxu0 0.0
    %3031 = vmatpush1.msra.mxu0 0.0
    %3032 = vmatprep.subr.mxu0 0.0
    %3033 = vmatpush1.msra.mxu0 0.0
    %3034 = vmatprep.subr.mxu0 0.0
    %3035 = vmatpush1.msra.mxu0 0.0
    %3036 = vmatprep.subr.mxu0 0.0
    %3037 = vmatpush1.msra.mxu0 0.0
    %3038 = vmatprep.subr.mxu0 0.0
    %3039 = vmatpush1.msra.mxu0 0.0
    %3040 = vmatprep.subr.mxu0 0.0
    %3041 = vmatpush1.msra.mxu0 0.0
    %3042 = vmatprep.subr.mxu0 0.0
    %3043 = vmatpush1.msra.mxu0 0.0
    %3044 = vmatprep.subr.mxu0 0.0
    %3045 = vmatpush1.msra.mxu0 0.0
    %3046 = vmatprep.subr.mxu0 0.0
    %3047 = vmatpush1.msra.mxu0 0.0
    %3048 = vmatprep.subr.mxu0 0.0
    %3049 = vmatpush1.msra.mxu0 0.0
    %3050 = vmatprep.subr.mxu0 0.0
    %3051 = vmatpush1.msra.mxu0 0.0
    %3052 = vmatprep.subr.mxu0 0.0
    %3053 = vmatpush1.msra.mxu0 0.0
    %3054 = vmatprep.subr.mxu0 0.0
    %3055 = vmatpush1.msra.mxu0 0.0
    %3056 = vmatprep.subr.mxu0 0.0
    %3057 = vmatpush1.msra.mxu0 0.0
    %3058 = vmatprep.subr.mxu0 0.0
    %3059 = vmatpush1.msra.mxu0 0.0
    %3060 = vmatprep.subr.mxu0 0.0
    %3061 = vmatpush1.msra.mxu0 0.0
    %3062 = vmatprep.subr.mxu0 0.0
    %3063 = vmatpush1.msra.mxu0 0.0
    %3064 = vmatprep.subr.mxu0 0.0
    %3065 = vmatpush1.msra.mxu0 0.0
    %3066 = vmatprep.mubr.f32.mxu0 0.0
    %3067 = vmatmul.mubr.f32.gmra.mrb[0].mxu0 %v2766
    %v3068 = vpop.f32.mrb[0].mxu0
    %v3069 = vadd.f32 0.0, %v3068
    %v3070 = vpop.f32.mrb[0].mxu0
    %v3071 = vadd.f32 0.0, %v3070
    %3072 = vmatprep.mubr.f32.mxu0 0.0
    %3073 = vmatmul.mubr.f32.gmra.mrb[0].mxu0 %v2769
    %v3074 = vpop.f32.mrb[0].mxu0
    %v3075 = vadd.f32 0.0, %v3074
    %v3076 = vpop.f32.mrb[0].mxu0
    %v3077 = vadd.f32 0.0, %v3076
    %3078 = vdwg.mxu0
    %v3079 = vadd.f32 %v2838, %v2840
    %v3080 = vadd.f32 %v3079, %v2915
    %v3081 = vadd.f32 %v3080, %v2917
    %v3082 = vadd.f32 %v3081, %v2992
    %v3083 = vadd.f32 %v3082, %v2994
    %v3084 = vadd.f32 %v3083, %v3069
    %v3085 = vadd.f32 %v3084, %v3071
    %3086 = vadd.xlane.f32.xlu0 %v3085
    %v3087 = vpop.xlane.xlu0 %3086
    %v3088 = vadd.f32 %v2844, %v2846
    %v3089 = vadd.f32 %v3088, %v2921
    %v3090 = vadd.f32 %v3089, %v2923
    %v3091 = vadd.f32 %v3090, %v2998
    %v3092 = vadd.f32 %v3091, %v3000
    %v3093 = vadd.f32 %v3092, %v3075
    %v3094 = vadd.f32 %v3093, %v3077
    %3095 = vadd.xlane.f32.xlu0 %v3094
    %v3096 = vpop.xlane.xlu0 %3095
    %v3097 = vsub.f32 %v2742, %v3087
    %v3098 = vsub.f32 %v2743, %v3087
    %v3099 = vsub.f32 %v2744, %v3087
    %v3100 = vsub.f32 %v2745, %v3087
    %v3101 = vsub.f32 %v2746, %v3087
    %v3102 = vsub.f32 %v2747, %v3087
    %v3103 = vsub.f32 %v2748, %v3087
    %v3104 = vsub.f32 %v2749, %v3087
    %v3105 = vsub.f32 %v2750, %v3096
    %v3106 = vsub.f32 %v2751, %v3096
    %v3107 = vsub.f32 %v2752, %v3096
    %v3108 = vsub.f32 %v2753, %v3096
    %v3109 = vsub.f32 %v2754, %v3096
    %v3110 = vsub.f32 %v2755, %v3096
    %v3111 = vsub.f32 %v2756, %v3096
    %v3112 = vsub.f32 %v2757, %v3096
    %v3113 = vmul.f32 %v3097, %v3097
    %v3114 = vmul.f32 %v3098, %v3098
    %v3115 = vmul.f32 %v3099, %v3099
    %v3116 = vmul.f32 %v3100, %v3100
    %v3117 = vmul.f32 %v3101, %v3101
    %v3118 = vmul.f32 %v3102, %v3102
    %v3119 = vmul.f32 %v3103, %v3103
    %v3120 = vmul.f32 %v3104, %v3104
    %v3121 = vmul.f32 %v3105, %v3105
    %v3122 = vmul.f32 %v3106, %v3106
    %v3123 = vmul.f32 %v3107, %v3107
    %v3124 = vmul.f32 %v3108, %v3108
    %v3125 = vmul.f32 %v3109, %v3109
    %v3126 = vmul.f32 %v3110, %v3110
    %v3127 = vmul.f32 %v3111, %v3111
    %v3128 = vmul.f32 %v3112, %v3112
    %3129 = vmatprep.subr.mxu0 %v3114
    %3130 = vmatpush1.msra.mxu0 %v3113
    %3131 = vmatprep.subr.mxu0 %v3122
    %3132 = vmatpush1.msra.mxu0 %v3121
    %3133 = vmatprep.subr.mxu0 0.0
    %3134 = vmatpush1.msra.mxu0 0.0
    %3135 = vmatprep.subr.mxu0 0.0
    %3136 = vmatpush1.msra.mxu0 0.0
    %3137 = vmatprep.subr.mxu0 0.0
    %3138 = vmatpush1.msra.mxu0 0.0
    %3139 = vmatprep.subr.mxu0 0.0
    %3140 = vmatpush1.msra.mxu0 0.0
    %3141 = vmatprep.subr.mxu0 0.0
    %3142 = vmatpush1.msra.mxu0 0.0
    %3143 = vmatprep.subr.mxu0 0.0
    %3144 = vmatpush1.msra.mxu0 0.0
    %3145 = vmatprep.subr.mxu0 0.0
    %3146 = vmatpush1.msra.mxu0 0.0
    %3147 = vmatprep.subr.mxu0 0.0
    %3148 = vmatpush1.msra.mxu0 0.0
    %3149 = vmatprep.subr.mxu0 0.0
    %3150 = vmatpush1.msra.mxu0 0.0
    %3151 = vmatprep.subr.mxu0 0.0
    %3152 = vmatpush1.msra.mxu0 0.0
    %3153 = vmatprep.subr.mxu0 0.0
    %3154 = vmatpush1.msra.mxu0 0.0
    %3155 = vmatprep.subr.mxu0 0.0
    %3156 = vmatpush1.msra.mxu0 0.0
    %3157 = vmatprep.subr.mxu0 0.0
    %3158 = vmatpush1.msra.mxu0 0.0
    %3159 = vmatprep.subr.mxu0 0.0
    %3160 = vmatpush1.msra.mxu0 0.0
    %3161 = vmatprep.subr.mxu0 0.0
    %3162 = vmatpush1.msra.mxu0 0.0
    %3163 = vmatprep.subr.mxu0 0.0
    %3164 = vmatpush1.msra.mxu0 0.0
    %3165 = vmatprep.subr.mxu0 0.0
    %3166 = vmatpush1.msra.mxu0 0.0
    %3167 = vmatprep.subr.mxu0 0.0
    %3168 = vmatpush1.msra.mxu0 0.0
    %3169 = vmatprep.subr.mxu0 0.0
    %3170 = vmatpush1.msra.mxu0 0.0
    %3171 = vmatprep.subr.mxu0 0.0
    %3172 = vmatpush1.msra.mxu0 0.0
    %3173 = vmatprep.subr.mxu0 0.0
    %3174 = vmatpush1.msra.mxu0 0.0
    %3175 = vmatprep.subr.mxu0 0.0
    %3176 = vmatpush1.msra.mxu0 0.0
    %3177 = vmatprep.subr.mxu0 0.0
    %3178 = vmatpush1.msra.mxu0 0.0
    %3179 = vmatprep.subr.mxu0 0.0
    %3180 = vmatpush1.msra.mxu0 0.0
    %3181 = vmatprep.subr.mxu0 0.0
    %3182 = vmatpush1.msra.mxu0 0.0
    %3183 = vmatprep.subr.mxu0 0.0
    %3184 = vmatpush1.msra.mxu0 0.0
    %3185 = vmatprep.subr.mxu0 0.0
    %3186 = vmatpush1.msra.mxu0 0.0
    %3187 = vmatprep.subr.mxu0 0.0
    %3188 = vmatpush1.msra.mxu0 0.0
    %3189 = vmatprep.subr.mxu0 0.0
    %3190 = vmatpush1.msra.mxu0 0.0
    %3191 = vmatprep.subr.mxu0 0.0
    %3192 = vmatpush1.msra.mxu0 0.0
    %3193 = vmatprep.mubr.f32.mxu0 0.0
    %3194 = vmatmul.mubr.f32.gmra.mrb[0].mxu0 %v2766
    %v3195 = vpop.f32.mrb[0].mxu0
    %v3196 = vadd.f32 0.0, %v3195
    %v3197 = vpop.f32.mrb[0].mxu0
    %v3198 = vadd.f32 0.0, %v3197
    %3199 = vmatprep.mubr.f32.mxu0 0.0
    %3200 = vmatmul.mubr.f32.gmra.mrb[0].mxu0 %v2769
    %v3201 = vpop.f32.mrb[0].mxu0
    %v3202 = vadd.f32 0.0, %v3201
    %v3203 = vpop.f32.mrb[0].mxu0
    %v3204 = vadd.f32 0.0, %v3203
    %3205 = vdwg.mxu0
    %3206 = vmatprep.subr.mxu0 %v3116
    %3207 = vmatpush1.msra.mxu0 %v3115
    %3208 = vmatprep.subr.mxu0 %v3124
    %3209 = vmatpush1.msra.mxu0 %v3123
    %3210 = vmatprep.subr.mxu0 0.0
    %3211 = vmatpush1.msra.mxu0 0.0
    %3212 = vmatprep.subr.mxu0 0.0
    %3213 = vmatpush1.msra.mxu0 0.0
    %3214 = vmatprep.subr.mxu0 0.0
    %3215 = vmatpush1.msra.mxu0 0.0
    %3216 = vmatprep.subr.mxu0 0.0
    %3217 = vmatpush1.msra.mxu0 0.0
    %3218 = vmatprep.subr.mxu0 0.0
    %3219 = vmatpush1.msra.mxu0 0.0
    %3220 = vmatprep.subr.mxu0 0.0
    %3221 = vmatpush1.msra.mxu0 0.0
    %3222 = vmatprep.subr.mxu0 0.0
    %3223 = vmatpush1.msra.mxu0 0.0
    %3224 = vmatprep.subr.mxu0 0.0
    %3225 = vmatpush1.msra.mxu0 0.0
    %3226 = vmatprep.subr.mxu0 0.0
    %3227 = vmatpush1.msra.mxu0 0.0
    %3228 = vmatprep.subr.mxu0 0.0
    %3229 = vmatpush1.msra.mxu0 0.0
    %3230 = vmatprep.subr.mxu0 0.0
    %3231 = vmatpush1.msra.mxu0 0.0
    %3232 = vmatprep.subr.mxu0 0.0
    %3233 = vmatpush1.msra.mxu0 0.0
    %3234 = vmatprep.subr.mxu0 0.0
    %3235 = vmatpush1.msra.mxu0 0.0
    %3236 = vmatprep.subr.mxu0 0.0
    %3237 = vmatpush1.msra.mxu0 0.0
    %3238 = vmatprep.subr.mxu0 0.0
    %3239 = vmatpush1.msra.mxu0 0.0
    %3240 = vmatprep.subr.mxu0 0.0
    %3241 = vmatpush1.msra.mxu0 0.0
    %3242 = vmatprep.subr.mxu0 0.0
    %3243 = vmatpush1.msra.mxu0 0.0
    %3244 = vmatprep.subr.mxu0 0.0
    %3245 = vmatpush1.msra.mxu0 0.0
    %3246 = vmatprep.subr.mxu0 0.0
    %3247 = vmatpush1.msra.mxu0 0.0
    %3248 = vmatprep.subr.mxu0 0.0
    %3249 = vmatpush1.msra.mxu0 0.0
    %3250 = vmatprep.subr.mxu0 0.0
    %3251 = vmatpush1.msra.mxu0 0.0
    %3252 = vmatprep.subr.mxu0 0.0
    %3253 = vmatpush1.msra.mxu0 0.0
    %3254 = vmatprep.subr.mxu0 0.0
    %3255 = vmatpush1.msra.mxu0 0.0
    %3256 = vmatprep.subr.mxu0 0.0
    %3257 = vmatpush1.msra.mxu0 0.0
    %3258 = vmatprep.subr.mxu0 0.0
    %3259 = vmatpush1.msra.mxu0 0.0
    %3260 = vmatprep.subr.mxu0 0.0
    %3261 = vmatpush1.msra.mxu0 0.0
    %3262 = vmatprep.subr.mxu0 0.0
    %3263 = vmatpush1.msra.mxu0 0.0
    %3264 = vmatprep.subr.mxu0 0.0
    %3265 = vmatpush1.msra.mxu0 0.0
    %3266 = vmatprep.subr.mxu0 0.0
    %3267 = vmatpush1.msra.mxu0 0.0
    %3268 = vmatprep.subr.mxu0 0.0
    %3269 = vmatpush1.msra.mxu0 0.0
    %3270 = vmatprep.mubr.f32.mxu0 0.0
    %3271 = vmatmul.mubr.f32.gmra.mrb[0].mxu0 %v2766
    %v3272 = vpop.f32.mrb[0].mxu0
    %v3273 = vadd.f32 0.0, %v3272
    %v3274 = vpop.f32.mrb[0].mxu0
    %v3275 = vadd.f32 0.0, %v3274
    %3276 = vmatprep.mubr.f32.mxu0 0.0
    %3277 = vmatmul.mubr.f32.gmra.mrb[0].mxu0 %v2769
    %v3278 = vpop.f32.mrb[0].mxu0
    %v3279 = vadd.f32 0.0, %v3278
    %v3280 = vpop.f32.mrb[0].mxu0
    %v3281 = vadd.f32 0.0, %v3280
    %3282 = vdwg.mxu0
    %3283 = vmatprep.subr.mxu0 %v3118
    %3284 = vmatpush1.msra.mxu0 %v3117
    %3285 = vmatprep.subr.mxu0 %v3126
    %3286 = vmatpush1.msra.mxu0 %v3125
    %3287 = vmatprep.subr.mxu0 0.0
    %3288 = vmatpush1.msra.mxu0 0.0
    %3289 = vmatprep.subr.mxu0 0.0
    %3290 = vmatpush1.msra.mxu0 0.0
    %3291 = vmatprep.subr.mxu0 0.0
    %3292 = vmatpush1.msra.mxu0 0.0
    %3293 = vmatprep.subr.mxu0 0.0
    %3294 = vmatpush1.msra.mxu0 0.0
    %3295 = vmatprep.subr.mxu0 0.0
    %3296 = vmatpush1.msra.mxu0 0.0
    %3297 = vmatprep.subr.mxu0 0.0
    %3298 = vmatpush1.msra.mxu0 0.0
    %3299 = vmatprep.subr.mxu0 0.0
    %3300 = vmatpush1.msra.mxu0 0.0
    %3301 = vmatprep.subr.mxu0 0.0
    %3302 = vmatpush1.msra.mxu0 0.0
    %3303 = vmatprep.subr.mxu0 0.0
    %3304 = vmatpush1.msra.mxu0 0.0
    %3305 = vmatprep.subr.mxu0 0.0
    %3306 = vmatpush1.msra.mxu0 0.0
    %3307 = vmatprep.subr.mxu0 0.0
    %3308 = vmatpush1.msra.mxu0 0.0
    %3309 = vmatprep.subr.mxu0 0.0
    %3310 = vmatpush1.msra.mxu0 0.0
    %3311 = vmatprep.subr.mxu0 0.0
    %3312 = vmatpush1.msra.mxu0 0.0
    %3313 = vmatprep.subr.mxu0 0.0
    %3314 = vmatpush1.msra.mxu0 0.0
    %3315 = vmatprep.subr.mxu0 0.0
    %3316 = vmatpush1.msra.mxu0 0.0
    %3317 = vmatprep.subr.mxu0 0.0
    %3318 = vmatpush1.msra.mxu0 0.0
    %3319 = vmatprep.subr.mxu0 0.0
    %3320 = vmatpush1.msra.mxu0 0.0
    %3321 = vmatprep.subr.mxu0 0.0
    %3322 = vmatpush1.msra.mxu0 0.0
    %3323 = vmatprep.subr.mxu0 0.0
    %3324 = vmatpush1.msra.mxu0 0.0
    %3325 = vmatprep.subr.mxu0 0.0
    %3326 = vmatpush1.msra.mxu0 0.0
    %3327 = vmatprep.subr.mxu0 0.0
    %3328 = vmatpush1.msra.mxu0 0.0
    %3329 = vmatprep.subr.mxu0 0.0
    %3330 = vmatpush1.msra.mxu0 0.0
    %3331 = vmatprep.subr.mxu0 0.0
    %3332 = vmatpush1.msra.mxu0 0.0
    %3333 = vmatprep.subr.mxu0 0.0
    %3334 = vmatpush1.msra.mxu0 0.0
    %3335 = vmatprep.subr.mxu0 0.0
    %3336 = vmatpush1.msra.mxu0 0.0
    %3337 = vmatprep.subr.mxu0 0.0
    %3338 = vmatpush1.msra.mxu0 0.0
    %3339 = vmatprep.subr.mxu0 0.0
    %3340 = vmatpush1.msra.mxu0 0.0
    %3341 = vmatprep.subr.mxu0 0.0
    %3342 = vmatpush1.msra.mxu0 0.0
    %3343 = vmatprep.subr.mxu0 0.0
    %3344 = vmatpush1.msra.mxu0 0.0
    %3345 = vmatprep.subr.mxu0 0.0
    %3346 = vmatpush1.msra.mxu0 0.0
    %3347 = vmatprep.mubr.f32.mxu0 0.0
    %3348 = vmatmul.mubr.f32.gmra.mrb[0].mxu0 %v2766
    %v3349 = vpop.f32.mrb[0].mxu0
    %v3350 = vadd.f32 0.0, %v3349
    %v3351 = vpop.f32.mrb[0].mxu0
    %v3352 = vadd.f32 0.0, %v3351
    %3353 = vmatprep.mubr.f32.mxu0 0.0
    %3354 = vmatmul.mubr.f32.gmra.mrb[0].mxu0 %v2769
    %v3355 = vpop.f32.mrb[0].mxu0
    %v3356 = vadd.f32 0.0, %v3355
    %v3357 = vpop.f32.mrb[0].mxu0
    %v3358 = vadd.f32 0.0, %v3357
    %3359 = vdwg.mxu0
    %3360 = vmatprep.subr.mxu0 %v3120
    %3361 = vmatpush1.msra.mxu0 %v3119
    %3362 = vmatprep.subr.mxu0 %v3128
    %3363 = vmatpush1.msra.mxu0 %v3127
    %3364 = vmatprep.subr.mxu0 0.0
    %3365 = vmatpush1.msra.mxu0 0.0
    %3366 = vmatprep.subr.mxu0 0.0
    %3367 = vmatpush1.msra.mxu0 0.0
    %3368 = vmatprep.subr.mxu0 0.0
    %3369 = vmatpush1.msra.mxu0 0.0
    %3370 = vmatprep.subr.mxu0 0.0
    %3371 = vmatpush1.msra.mxu0 0.0
    %3372 = vmatprep.subr.mxu0 0.0
    %3373 = vmatpush1.msra.mxu0 0.0
    %3374 = vmatprep.subr.mxu0 0.0
    %3375 = vmatpush1.msra.mxu0 0.0
    %3376 = vmatprep.subr.mxu0 0.0
    %3377 = vmatpush1.msra.mxu0 0.0
    %3378 = vmatprep.subr.mxu0 0.0
    %3379 = vmatpush1.msra.mxu0 0.0
    %3380 = vmatprep.subr.mxu0 0.0
    %3381 = vmatpush1.msra.mxu0 0.0
    %3382 = vmatprep.subr.mxu0 0.0
    %3383 = vmatpush1.msra.mxu0 0.0
    %3384 = vmatprep.subr.mxu0 0.0
    %3385 = vmatpush1.msra.mxu0 0.0
    %3386 = vmatprep.subr.mxu0 0.0
    %3387 = vmatpush1.msra.mxu0 0.0
    %3388 = vmatprep.subr.mxu0 0.0
    %3389 = vmatpush1.msra.mxu0 0.0
    %3390 = vmatprep.subr.mxu0 0.0
    %3391 = vmatpush1.msra.mxu0 0.0
    %3392 = vmatprep.subr.mxu0 0.0
    %3393 = vmatpush1.msra.mxu0 0.0
    %3394 = vmatprep.subr.mxu0 0.0
    %3395 = vmatpush1.msra.mxu0 0.0
    %3396 = vmatprep.subr.mxu0 0.0
    %3397 = vmatpush1.msra.mxu0 0.0
    %3398 = vmatprep.subr.mxu0 0.0
    %3399 = vmatpush1.msra.mxu0 0.0
    %3400 = vmatprep.subr.mxu0 0.0
    %3401 = vmatpush1.msra.mxu0 0.0
    %3402 = vmatprep.subr.mxu0 0.0
    %3403 = vmatpush1.msra.mxu0 0.0
    %3404 = vmatprep.subr.mxu0 0.0
    %3405 = vmatpush1.msra.mxu0 0.0
    %3406 = vmatprep.subr.mxu0 0.0
    %3407 = vmatpush1.msra.mxu0 0.0
    %3408 = vmatprep.subr.mxu0 0.0
    %3409 = vmatpush1.msra.mxu0 0.0
    %3410 = vmatprep.subr.mxu0 0.0
    %3411 = vmatpush1.msra.mxu0 0.0
    %3412 = vmatprep.subr.mxu0 0.0
    %3413 = vmatpush1.msra.mxu0 0.0
    %3414 = vmatprep.subr.mxu0 0.0
    %3415 = vmatpush1.msra.mxu0 0.0
    %3416 = vmatprep.subr.mxu0 0.0
    %3417 = vmatpush1.msra.mxu0 0.0
    %3418 = vmatprep.subr.mxu0 0.0
    %3419 = vmatpush1.msra.mxu0 0.0
    %3420 = vmatprep.subr.mxu0 0.0
    %3421 = vmatpush1.msra.mxu0 0.0
    %3422 = vmatprep.subr.mxu0 0.0
    %3423 = vmatpush1.msra.mxu0 0.0
    %3424 = vmatprep.mubr.f32.mxu0 0.0
    %3425 = vmatmul.mubr.f32.gmra.mrb[0].mxu0 %v2766
    %v3426 = vpop.f32.mrb[0].mxu0
    %v3427 = vadd.f32 0.0, %v3426
    %v3428 = vpop.f32.mrb[0].mxu0
    %v3429 = vadd.f32 0.0, %v3428
    %3430 = vmatprep.mubr.f32.mxu0 0.0
    %3431 = vmatmul.mubr.f32.gmra.mrb[0].mxu0 %v2769
    %v3432 = vpop.f32.mrb[0].mxu0
    %v3433 = vadd.f32 0.0, %v3432
    %v3434 = vpop.f32.mrb[0].mxu0
    %v3435 = vadd.f32 0.0, %v3434
    %3436 = vdwg.mxu0
    %v3437 = vadd.f32 %v3196, %v3198
    %v3438 = vadd.f32 %v3437, %v3273
    %v3439 = vadd.f32 %v3438, %v3275
    %v3440 = vadd.f32 %v3439, %v3350
    %v3441 = vadd.f32 %v3440, %v3352
    %v3442 = vadd.f32 %v3441, %v3427
    %v3443 = vadd.f32 %v3442, %v3429
    %3444 = vadd.xlane.f32.xlu0 %v3443
    %v3445 = vpop.xlane.xlu0 %3444
    %v3446 = vadd.f32 %v3202, %v3204
    %v3447 = vadd.f32 %v3446, %v3279
    %v3448 = vadd.f32 %v3447, %v3281
    %v3449 = vadd.f32 %v3448, %v3356
    %v3450 = vadd.f32 %v3449, %v3358
    %v3451 = vadd.f32 %v3450, %v3433
    %v3452 = vadd.f32 %v3451, %v3435
    %3453 = vadd.xlane.f32.xlu0 %v3452
    %v3454 = vpop.xlane.xlu0 %3453
    %v3455 = vadd.f32 %v3445, 1e-05
    %v3456 = vadd.f32 %v3454, 1e-05
    %v3457 = vrsqrt.pop %v3455
    %v3458 = vrsqrt.pop %v3456
    %v3459 = vmul.f32 %v2760, %v3457
    %v3460 = vmul.f32 %v2761, %v3458
    %3462 = vset.pattern.permute.xlu0 0
    %3463 = vperm.xlu0 %3462, %v3459
    %v3464 = vpop.permute.xlu0 %3463
    %3467 = vset.pattern.permute.xlu0 0
    %3468 = vperm.xlu0 %3467, %v3460
    %v3469 = vpop.permute.xlu0 %3468
    %v3471 = vmul.f32 %v3097, %v3464
    %v3472 = vmul.f32 %v3098, %v3464
    %v3473 = vmul.f32 %v3099, %v3464
    %v3474 = vmul.f32 %v3100, %v3464
    %v3475 = vmul.f32 %v3101, %v3464
    %v3476 = vmul.f32 %v3102, %v3464
    %v3477 = vmul.f32 %v3103, %v3464
    %v3478 = vmul.f32 %v3104, %v3464
    %v3479 = vmul.f32 %v3105, %v3469
    %v3480 = vmul.f32 %v3106, %v3469
    %v3481 = vmul.f32 %v3107, %v3469
    %v3482 = vmul.f32 %v3108, %v3469
    %v3483 = vmul.f32 %v3109, %v3469
    %v3484 = vmul.f32 %v3110, %v3469
    %v3485 = vmul.f32 %v3111, %v3469
    %v3486 = vmul.f32 %v3112, %v3469
    %3488 = vset.pattern.permute.xlu0 0
    %3489 = vperm.xlu0 %3488, %v2762
    %v3490 = vpop.permute.xlu0 %3489
    %3493 = vset.pattern.permute.xlu0 0
    %3494 = vperm.xlu0 %3493, %v2763
    %v3495 = vpop.permute.xlu0 %3494
    %v3497 = vadd.f32 %v3471, %v3490
    %v3498 = vadd.f32 %v3472, %v3490
    %v3499 = vadd.f32 %v3473, %v3490
    %v3500 = vadd.f32 %v3474, %v3490
    %v3501 = vadd.f32 %v3475, %v3490
    %v3502 = vadd.f32 %v3476, %v3490
    %v3503 = vadd.f32 %v3477, %v3490
    %v3504 = vadd.f32 %v3478, %v3490
    %v3505 = vadd.f32 %v3479, %v3495
    %v3506 = vadd.f32 %v3480, %v3495
    %v3507 = vadd.f32 %v3481, %v3495
    %v3508 = vadd.f32 %v3482, %v3495
    %v3509 = vadd.f32 %v3483, %v3495
    %v3510 = vadd.f32 %v3484, %v3495
    %v3511 = vadd.f32 %v3485, %v3495
    %v3512 = vadd.f32 %v3486, %v3495
    %3513 = vst [vmem:[#allocation5] sm:$0xff] %v3497
    %3514 = vst [vmem:[#allocation5 + $0x8] sm:$0xff] %v3498
    %3515 = vst [vmem:[#allocation5 + $0x10] sm:$0xff] %v3499
    %3516 = vst [vmem:[#allocation5 + $0x18] sm:$0xff] %v3500
    %3517 = vst [vmem:[#allocation5 + $0x20] sm:$0xff] %v3501
    %3518 = vst [vmem:[#allocation5 + $0x28] sm:$0xff] %v3502
    %3519 = vst [vmem:[#allocation5 + $0x30] sm:$0xff] %v3503
    %3520 = vst [vmem:[#allocation5 + $0x38] sm:$0xff] %v3504
    %3521 = vst [vmem:[#allocation5 + $0x40] sm:$0xff] %v3505
    %3522 = vst [vmem:[#allocation5 + $0x48] sm:$0xff] %v3506
    %3523 = vst [vmem:[#allocation5 + $0x50] sm:$0xff] %v3507
    %3524 = vst [vmem:[#allocation5 + $0x58] sm:$0xff] %v3508
    %3525 = vst [vmem:[#allocation5 + $0x60] sm:$0xff] %v3509
    %3526 = vst [vmem:[#allocation5 + $0x68] sm:$0xff] %v3510
    %3527 = vst [vmem:[#allocation5 + $0x70] sm:$0xff] %v3511
    %3528 = vst [vmem:[#allocation5 + $0x78] sm:$0xff] %v3512
    // Predicated region
    $region46: #{tpu_custom_call.1} parent=1 // pred_check
      _
    $region47: #{tpu_custom_call.1} parent=1 // pred_check_branch
      %3530 = sbr.rel (0) target = $region49
    $region48: #{tpu_custom_call.1} parent=1 // pred_region
      %s3532 = ssub.s32 2048, 2048
      %3533 = vsyncadd [#allocation4], %s3532
      %s3534 = sshll.u32 [#allocation5], 4
      %s3535 = int_to_ptr.vmem [resolvable:$true] %s3534
      %3540 = dma.vmem_to_hbm [thread:$0]  %s3535, 2048, %s10, [#allocation4], 1024, 1024, 64
    $region49: #{tpu_custom_call.1} parent=1 // pred_fallthru
      _
    // Predicated region
    $region50: #{tpu_custom_call.1} parent=1 // pred_check
      _
    $region51: #{tpu_custom_call.1} parent=1 // pred_check_branch
      %3542 = sbr.rel (0) target = $region53
    $region52: #{tpu_custom_call.1} parent=1 // pred_region
      %3543 = dma.done [#allocation4], 2048
    $region53: #{tpu_custom_call.1} parent=1 // pred_fallthru
      _
    %3544 = vsyncpa [#allocation3], 1
    %3545 = vsyncpa [#allocation4], 1

</llo_original>
